<compile_context>
chip_gen: v5e
topology: v5e:2x2
jax: 0.10.0
libtpu: 0.0.40
codegen_flags: <defaults>
</compile_context>

<pallas_src>
import functools

import numpy as np
import jax
import jax.numpy as jnp
from jax import lax
from jax.experimental import pallas as pl
from jax.experimental.pallas import tpu as pltpu


def _round_up(x, m):
    return (x + m - 1) // m * m


def semiseq2seq_kernel(
    # inputs
    x_ref, mask_ref,
    w_ih0, w_ih, w_hh, gi_bias, bhn,
    dw_hh, d_brz, d_bin, d_bhn,
    dow, dob, cw, cb,
    # outputs
    inter_ref, deout_ref, pred_ref,
    # scratch
    gi_buf, out_buf, dec_h,
    *, T, T_dec, BP, H, L, ENC_UNROLL, DEC_UNROLL):
    H2, H4, H6 = 2 * H, 4 * H, 6 * H
    HD = 2 * H                                   # decoder hidden size

    def _rows(t):
        start = t * BP
        if not isinstance(start, (int, np.integer)):
            start = pl.multiple_of(start, BP)    # row blocks are tile-aligned
        return pl.ds(start, BP)

    # Constant lane mask selecting forward-direction lanes of the interleaved
    # gate layout [r_fw r_bw z_fw z_bw n_fw n_bw]; built ONCE (hoisted out of
    # every recurrent step).
    lane = lax.broadcasted_iota(jnp.int32, (BP, H6), 1)
    fw_lanes = (lane % H2) < H

    zeros_h = jnp.zeros((BP, H2), jnp.float32)

    # ----------------------------- encoder ------------------------------
    def rec_layer(w_hh_l, bhn_l, write_out):
        bhn_b = jnp.broadcast_to(bhn_l, (BP, H2))        # hoisted broadcast

        def body(i, h):
            t_fw = i
            t_bw = (T - 1) - i
            # Precomputed input-to-hidden activations (OFF the serial chain):
            # one load per time row + one lane select combining fw@t_fw with
            # bw@t_bw.  No per-step matmuls, no lane shuffles.
            gi_f = gi_buf[_rows(t_fw), :]
            gi_b = gi_buf[_rows(t_bw), :]
            gi = jnp.where(fw_lanes, gi_f, gi_b)
            # ONE fused hidden-to-hidden matmul for both directions
            # (block-diagonal weight, hidden carried lane-packed [h_fw|h_bw]).
            gh = jnp.dot(h, w_hh_l, preferred_element_type=jnp.float32)
            rz = jax.nn.sigmoid(gi[:, :H4] + gh[:, :H4])
            r = rz[:, :H2]
            z = rz[:, H2:]
            n = jnp.tanh(gi[:, H4:] + r * (gh[:, H4:] + bhn_b))
            cand = n + z * (h - n)               # == (1-z)*n + z*h
            # pack_padded_sequence equivalence: freeze past seq_len.
            # Mask is precomputed in the wrapper (no per-step broadcasts).
            m = mask_ref[_rows(i), :]
            h_new = jnp.where(m > 0.0, cand, h)
            if write_out:
                # layer output, lane layout [fw(t) | bw(t)] per time row
                out_buf[_rows(t_fw), pl.ds(0, H)] = h_new[:, :H]
                out_buf[_rows(t_bw), pl.ds(H, H)] = h_new[:, H:]
            return h_new

        return lax.fori_loop(0, T, body, zeros_h, unroll=ENC_UNROLL)

    h = zeros_h
    for li in range(L):
        # Batched input-to-hidden matmul for the WHOLE layer, hoisted off the
        # recurrence: one well-shaped (T*BP, K) x (K, 6H) MXU op per layer.
        if li == 0:
            src = x_ref[...]
            w_in = w_ih0[...]
        else:
            src = out_buf[...]
            w_in = w_ih[li - 1]
        gi_buf[...] = (jnp.dot(src, w_in, preferred_element_type=jnp.float32)
                       + gi_bias[li])
        h = rec_layer(w_hh[li], bhn[li], write_out=(li < L - 1))

    enc_h = h                                    # (BP, 2H), lanes [h_fw|h_bw]

    # ---------------------------- classifier ----------------------------
    inter_ref[...] = enc_h
    pred_ref[...] = (jnp.dot(enc_h, cw[...], preferred_element_type=jnp.float32)
                     + cb[...])

    # --------------- decoder: zero-input GRU, hidden = 2H ---------------
    # Zero decoder input => gi == b_ih exactly; biases folded in the wrapper,
    # so each serial step is a single (BP,2H)x(2H,6H) matmul + gate math.
    w_d = dw_hh[...]
    brz = jnp.broadcast_to(d_brz[...], (BP, 2 * HD))
    b_in = jnp.broadcast_to(d_bin[...], (BP, HD))
    b_hn = jnp.broadcast_to(d_bhn[...], (BP, HD))

    def dec_body(t, hh):
        gh = jnp.dot(hh, w_d, preferred_element_type=jnp.float32)
        rz = jax.nn.sigmoid(gh[:, :2 * HD] + brz)
        r = rz[:, :HD]
        z = rz[:, HD:]
        n = jnp.tanh(b_in + r * (gh[:, 2 * HD:] + b_hn))
        h_new = n + z * (hh - n)
        dec_h[_rows(t), :] = h_new               # off-chain consumer
        return h_new

    lax.fori_loop(0, T_dec, dec_body, enc_h, unroll=DEC_UNROLL)

    # Decoder output Linear as ONE batched matmul over the whole hidden slab
    # (replaces T_dec tiny matmuls + T_dec partial stores).
    deout_ref[...] = (jnp.dot(dec_h[...], dow[...],
                              preferred_element_type=jnp.float32) + dob[...])


# --------------------------------------------------------------------------
# Wrapper-side weight packing (layout plumbing only; semantics unchanged).
# --------------------------------------------------------------------------
def _interleave_gate_cols(a, b, H):
    """(..., K, 3H) fw/bw with cols [r|z|n] -> (..., K, 6H) with cols
    [r_fw r_bw z_fw z_bw n_fw n_bw]."""
    parts = []
    for g in range(3):
        parts.append(a[..., g * H:(g + 1) * H])
        parts.append(b[..., g * H:(g + 1) * H])
    return jnp.concatenate(parts, axis=-1)


def _pack_encoder_layer(w_ih_d, w_hh_d, b_ih_d, b_hh_d, H):
    """Pack one bidirectional GRU layer into the fused kernel layout.

    w_ih_d: (2, K, 3H), w_hh_d: (2, H, 3H), b_*_d: (2, 1, 3H)
    Returns (w_ih_pk (K,6H), w_hh_blk (2H,6H), gi_bias (1,6H), bhn (1,2H)).
    """
    w_ih_pk = _interleave_gate_cols(w_ih_d[0], w_ih_d[1], H)
    zeros = jnp.zeros_like(w_hh_d[0])
    w_hh_blk = jnp.concatenate(
        [_interleave_gate_cols(w_hh_d[0], zeros, H),
         _interleave_gate_cols(zeros, w_hh_d[1], H)], axis=0)
    bi = _interleave_gate_cols(b_ih_d[0], b_ih_d[1], H)
    bh = _interleave_gate_cols(b_hh_d[0], b_hh_d[1], H)
    # r/z hidden biases fold into the gi bias; the n hidden bias must stay
    # inside the r*(...) term, so it is kept separate.
    gi_bias = jnp.concatenate([bi[:, :4 * H] + bh[:, :4 * H], bi[:, 4 * H:]],
                              axis=-1)
    bhn = bh[:, 4 * H:]
    return w_ih_pk, w_hh_blk, gi_bias, bhn


def init_params(key, F, H, OUT, C, en_layers):
    """Deterministic synthetic parameters matching the PyTorch module shapes
    (GRU weights stored pre-transposed for right-multiplication)."""
    H2, H3, H6 = 2 * H, 3 * H, 6 * H
    ks = jax.random.split(key, 16)

    def u(k, shape, scale):
        return jax.random.uniform(k, shape, jnp.float32, -scale, scale)

    s_enc = 1.0 / np.sqrt(H)
    s_dec = 1.0 / np.sqrt(H2)
    return dict(
        ew_ih0=u(ks[0], (2, F, H3), s_enc),
        ew_hh0=u(ks[1], (2, H, H3), s_enc),
        eb_ih0=u(ks[2], (2, 1, H3), s_enc),
        eb_hh0=u(ks[3], (2, 1, H3), s_enc),
        ew_ih=u(ks[4], (en_layers - 1, 2, H2, H3), s_enc),
        ew_hh=u(ks[5], (en_layers - 1, 2, H, H3), s_enc),
        eb_ih=u(ks[6], (en_layers - 1, 2, 1, H3), s_enc),
        eb_hh=u(ks[7], (en_layers - 1, 2, 1, H3), s_enc),
        dw_ih=u(ks[8], (OUT, H6), s_dec),     # kept for module fidelity; the
                                              # kernel never uses it (zero input)
        dw_hh=u(ks[9], (H2, H6), s_dec),
        db_ih=u(ks[10], (1, H6), s_dec),
        db_hh=u(ks[11], (1, H6), s_dec),
        dout_w=u(ks[12], (H2, OUT), s_dec),
        dout_b=u(ks[13], (1, OUT), s_dec),
        cls_w=u(ks[14], (H2, C), s_dec),
        cls_b=u(ks[15], (1, C), s_dec),
    )


def semiseq2seq_forward(params, x, seq_len, *, en_hidden_size, output_size,
                        cla_dim, en_num_layers):
    B, T, F = x.shape
    seq_len = np.asarray(seq_len, np.int32)
    # NOTE: T_dec is a host-side Python int (matches the torch `max(seq_len)`
    # loop); distinct max lengths trigger distinct compilations.
    T_dec = int(seq_len.max())
    H, OUT, C, L = en_hidden_size, output_size, cla_dim, en_num_layers
    assert L >= 2

    # Pad the batch to a sublane multiple: identical per-step cost, makes every
    # (T*BP, ...) row block tile-aligned, and fills otherwise-wasted sublanes.
    BP = _round_up(B, 8)

    x_p = jnp.zeros((BP, T, F), jnp.float32).at[:B].set(x.astype(jnp.float32))
    x_tm = jnp.transpose(x_p, (1, 0, 2)).reshape(T * BP, F)   # time-major, 2D

    # Precomputed per-step validity mask (hoists the length-mask broadcasts
    # out of the recurrence).  Row block i: fw validity at t=i in lanes [:H],
    # bw validity at t=T-1-i in lanes [H:].  Padded batch rows get length 0.
    len_p = np.zeros((BP,), np.int32)
    len_p[:B] = seq_len
    t_idx = np.arange(T)[:, None]                               # (T, 1)
    fw_valid = (t_idx < len_p[None, :]).astype(np.float32)      # (T, BP)
    bw_valid = ((T - 1 - t_idx) < len_p[None, :]).astype(np.float32)
    mask = np.concatenate(
        [np.repeat(fw_valid[:, :, None], H, axis=2),
         np.repeat(bw_valid[:, :, None], H, axis=2)], axis=2)   # (T, BP, 2H)
    mask = jnp.asarray(mask.reshape(T * BP, 2 * H))

    # ---- pack encoder weights into the fused layout ----
    p0 = _pack_encoder_layer(params['ew_ih0'], params['ew_hh0'],
                             params['eb_ih0'], params['eb_hh0'], H)
    w_ih0_pk = p0[0]                                            # (F, 6H)
    w_hh_blk, gi_bias, bhn, w_ih_pk = [p0[1]], [p0[2]], [p0[3]], []
    for li in range(L - 1):
        p = _pack_encoder_layer(params['ew_ih'][li], params['ew_hh'][li],
                                params['eb_ih'][li], params['eb_hh'][li], H)
        w_ih_pk.append(p[0]); w_hh_blk.append(p[1])
        gi_bias.append(p[2]); bhn.append(p[3])
    w_ih_pk = jnp.stack(w_ih_pk)            # (L-1, 2H, 6H)
    w_hh_blk = jnp.stack(w_hh_blk)          # (L,   2H, 6H)
    gi_bias = jnp.stack(gi_bias)            # (L,   1,  6H)
    bhn = jnp.stack(bhn)                    # (L,   1,  2H)

    # ---- decoder: zero input => gi == b_ih; fold biases once ----
    HD = 2 * H
    d_brz = params['db_ih'][:, :2 * HD] + params['db_hh'][:, :2 * HD]  # (1,4H)
    d_bin = params['db_ih'][:, 2 * HD:]                                # (1,2H)
    d_bhn = params['db_hh'][:, 2 * HD:]                                # (1,2H)

    # Full unroll only for short sequences; bounded unroll otherwise.
    enc_unroll = True if T <= 32 else 8
    dec_unroll = True if T_dec <= 32 else 8

    kernel = functools.partial(
        semiseq2seq_kernel, T=T, T_dec=T_dec, BP=BP, H=H, L=L,
        ENC_UNROLL=enc_unroll, DEC_UNROLL=dec_unroll)
    vmem = pl.BlockSpec(memory_space=pltpu.MemorySpace.VMEM)

    inputs = (x_tm, mask, w_ih0_pk, w_ih_pk, w_hh_blk, gi_bias, bhn,
              params['dw_hh'], d_brz, d_bin, d_bhn,
              params['dout_w'], params['dout_b'],
              params['cls_w'], params['cls_b'])

    inter_p, deout_flat, pred_p = pl.pallas_call(
        kernel,
        out_shape=(
            jax.ShapeDtypeStruct((BP, 2 * H), jnp.float32),          # inter
            jax.ShapeDtypeStruct((T_dec * BP, OUT), jnp.float32),    # deout
            jax.ShapeDtypeStruct((BP, C), jnp.float32),              # pred
        ),
        in_specs=[vmem] * len(inputs),
        out_specs=(vmem, vmem, vmem),
        scratch_shapes=[
            pltpu.VMEM((T * BP, 6 * H), jnp.float32),       # precomputed gi
            pltpu.VMEM((T * BP, 2 * H), jnp.float32),       # layer outputs
            pltpu.VMEM((T_dec * BP, 2 * H), jnp.float32),   # decoder hiddens
        ],
        compiler_params=pltpu.CompilerParams(
            vmem_limit_bytes=32 * 1024 * 1024),
    )(*inputs)

    deout = jnp.transpose(deout_flat.reshape(T_dec, BP, OUT), (1, 0, 2))[:B]
    return inter_p[:B], deout, pred_p[:B]


if __name__ == "__main__":
    B, T, F = 4, 8, 16        # batch, padded seq len, en_input_size
    H = 32                    # en_hidden_size
    OUT = F                   # output_size (decoder reconstructs the input)
    C = 8                     # cla_dim (number of classes)
    L = 3                     # en_num_layers

    key = jax.random.PRNGKey(0)
    kx, kp = jax.random.split(key)
    x = jax.random.normal(kx, (B, T, F), jnp.float32)
    seq_len = np.array([T, T - 1, T - 2, T], np.int32)

    params = init_params(kp, F, H, OUT, C, L)
    inter, deout, pred = semiseq2seq_forward(
        params, x, seq_len,
        en_hidden_size=H, output_size=OUT, cla_dim=C, en_num_layers=L)
    jax.block_until_ready((inter, deout, pred))

    assert inter.shape == (B, 2 * H)
    assert deout.shape == (B, int(seq_len.max()), OUT)
    assert pred.shape == (B, C)
    assert bool(jnp.all(jnp.isfinite(inter))) and bool(jnp.all(jnp.isfinite(deout))) \
        and bool(jnp.all(jnp.isfinite(pred)))
    print("KERNEL_OK")
</pallas_src>

<mosaic_0001>
module attributes {stable_mosaic.version = 11 : i64} {
  func.func @semiseq2seq_kernel(%arg0: memref<64x16xf32, #tpu.memory_space<vmem>>, %arg1: memref<64x64xf32, #tpu.memory_space<vmem>>, %arg2: memref<16x192xf32, #tpu.memory_space<vmem>>, %arg3: memref<2x64x192xf32, #tpu.memory_space<vmem>>, %arg4: memref<3x64x192xf32, #tpu.memory_space<vmem>>, %arg5: memref<3x1x192xf32, #tpu.memory_space<vmem>>, %arg6: memref<3x1x64xf32, #tpu.memory_space<vmem>>, %arg7: memref<64x192xf32, #tpu.memory_space<vmem>>, %arg8: memref<1x128xf32, #tpu.memory_space<vmem>>, %arg9: memref<1x64xf32, #tpu.memory_space<vmem>>, %arg10: memref<1x64xf32, #tpu.memory_space<vmem>>, %arg11: memref<64x16xf32, #tpu.memory_space<vmem>>, %arg12: memref<1x16xf32, #tpu.memory_space<vmem>>, %arg13: memref<64x8xf32, #tpu.memory_space<vmem>>, %arg14: memref<1x8xf32, #tpu.memory_space<vmem>>, %arg15: memref<8x64xf32, #tpu.memory_space<vmem>>, %arg16: memref<64x16xf32, #tpu.memory_space<vmem>>, %arg17: memref<8x8xf32, #tpu.memory_space<vmem>>, %arg18: memref<64x192xf32, #tpu.memory_space<vmem>>, %arg19: memref<64x64xf32, #tpu.memory_space<vmem>>, %arg20: memref<64x64xf32, #tpu.memory_space<vmem>>) attributes {dimension_semantics = [], scalar_prefetch = 0 : i64, scratch_operands = 3 : i64, tpu.core_type = #tpu.core_type<tc>} {
    %0 = tpu.iota {dimensions = array<i32: 1>} : vector<8x192xi32>
    %c64_i32 = arith.constant 64 : i32
    %c0_i32 = arith.constant 0 : i32
    %1 = arith.cmpi eq, %c64_i32, %c0_i32 : i32
    %c1_i32 = arith.constant 1 : i32
    %2 = arith.select %1, %c1_i32, %c64_i32 : i32
    %3 = vector.broadcast %2 : i32 to vector<8x192xi32>
    %4 = arith.remsi %0, %3 : vector<8x192xi32>
    %c0_i32_0 = arith.constant 0 : i32
    %5 = vector.broadcast %c0_i32_0 : i32 to vector<8x192xi32>
    %6 = arith.cmpi ne, %4, %5 : vector<8x192xi32>
    %c0_i32_1 = arith.constant 0 : i32
    %7 = vector.broadcast %c0_i32_1 : i32 to vector<8x192xi32>
    %8 = arith.cmpi slt, %4, %7 : vector<8x192xi32>
    %c0_i32_2 = arith.constant 0 : i32
    %9 = arith.cmpi slt, %2, %c0_i32_2 : i32
    %10 = vector.broadcast %9 : i1 to vector<8x192xi1>
    %11 = vector.broadcast %10 : vector<8x192xi1> to vector<8x192xi1>
    %12 = arith.xori %8, %11 : vector<8x192xi1>
    %13 = arith.andi %12, %6 : vector<8x192xi1>
    %14 = vector.broadcast %2 : i32 to vector<8x192xi32>
    %15 = arith.addi %4, %14 : vector<8x192xi32>
    %16 = arith.select %13, %15, %4 : vector<8x192xi1>, vector<8x192xi32>
    %c32_i32 = arith.constant 32 : i32
    %17 = vector.broadcast %c32_i32 : i32 to vector<8x192xi32>
    %18 = arith.cmpi slt, %16, %17 : vector<8x192xi32>
    %cst = arith.constant 0.000000e+00 : f32
    %19 = vector.broadcast %cst : f32 to vector<8x64xf32>
    %c0 = arith.constant 0 : index
    %c0_3 = arith.constant 0 : index
    %20 = vector.load %arg0[%c0, %c0_3] : memref<64x16xf32, #tpu.memory_space<vmem>>, vector<64x16xf32>
    %c0_4 = arith.constant 0 : index
    %c0_5 = arith.constant 0 : index
    %21 = vector.load %arg2[%c0_4, %c0_5] : memref<16x192xf32, #tpu.memory_space<vmem>>, vector<16x192xf32>
    %cst_6 = arith.constant dense<0.000000e+00> : vector<64x192xf32>
    %22 = tpu.matmul %20, %21, %cst_6 {dimension_numbers = #tpu.dot_dimension_numbers<[1], [0], [0], [1], [0, 0, 1, 1], [], []>} : vector<64x16xf32>, vector<16x192xf32>, vector<64x192xf32> -> vector<64x192xf32>
    %c0_7 = arith.constant 0 : index
    %c0_8 = arith.constant 0 : index
    %c0_9 = arith.constant 0 : index
    %23 = vector.load %arg5[%c0_7, %c0_8, %c0_9] : memref<3x1x192xf32, #tpu.memory_space<vmem>>, vector<1x1x192xf32>
    %24 = vector.shape_cast %23 : vector<1x1x192xf32> to vector<1x192xf32>
    %25 = vector.broadcast %24 : vector<1x192xf32> to vector<64x192xf32>
    %26 = arith.addf %22, %25 : vector<64x192xf32>
    %c0_10 = arith.constant 0 : index
    %c0_11 = arith.constant 0 : index
    %27 = vector.load %arg18[%c0_10, %c0_11] : memref<64x192xf32, #tpu.memory_space<vmem>>, vector<64x192xf32>
    tpu.vector_store %arg18[%c0_10, %c0_11], %26 {strides = array<i32>} : memref<64x192xf32, #tpu.memory_space<vmem>>, vector<64x192xf32>,
    %c0_12 = arith.constant 0 : index
    %c0_13 = arith.constant 0 : index
    %c0_14 = arith.constant 0 : index
    %28 = vector.load %arg4[%c0_12, %c0_13, %c0_14] : memref<3x64x192xf32, #tpu.memory_space<vmem>>, vector<1x64x192xf32>
    %29 = vector.shape_cast %28 : vector<1x64x192xf32> to vector<64x192xf32>
    %c0_15 = arith.constant 0 : index
    %c0_16 = arith.constant 0 : index
    %c0_17 = arith.constant 0 : index
    %30 = vector.load %arg6[%c0_15, %c0_16, %c0_17] : memref<3x1x64xf32, #tpu.memory_space<vmem>>, vector<1x1x64xf32>
    %31 = vector.shape_cast %30 : vector<1x1x64xf32> to vector<1x64xf32>
    %32 = vector.shape_cast %31 : vector<1x64xf32> to vector<1x64xf32>
    %33 = vector.broadcast %32 : vector<1x64xf32> to vector<8x64xf32>
    %c0_i32_18 = arith.constant 0 : i32
    %c7_i32 = arith.constant 7 : i32
    %34 = arith.subi %c7_i32, %c0_i32_18 : i32
    %c8_i32 = arith.constant 8 : i32
    %35 = arith.muli %c0_i32_18, %c8_i32 : i32
    %36 = tpu.assume_multiple %35, 8 : i32
    %37 = arith.index_cast %36 : i32 to index
    %c0_19 = arith.constant 0 : index
    %38 = vector.load %arg18[%37, %c0_19] : memref<64x192xf32, #tpu.memory_space<vmem>>, vector<8x192xf32>
    %c8_i32_20 = arith.constant 8 : i32
    %39 = arith.muli %34, %c8_i32_20 : i32
    %40 = tpu.assume_multiple %39, 8 : i32
    %41 = arith.index_cast %40 : i32 to index
    %c0_21 = arith.constant 0 : index
    %42 = vector.load %arg18[%41, %c0_21] : memref<64x192xf32, #tpu.memory_space<vmem>>, vector<8x192xf32>
    %43 = arith.select %18, %38, %42 : vector<8x192xi1>, vector<8x192xf32>
    %cst_22 = arith.constant dense<0.000000e+00> : vector<8x192xf32>
    %44 = tpu.matmul %19, %29, %cst_22 {dimension_numbers = #tpu.dot_dimension_numbers<[1], [0], [0], [1], [0, 0, 1, 1], [], []>} : vector<8x64xf32>, vector<64x192xf32>, vector<8x192xf32> -> vector<8x192xf32>
    %45 = vector.extract_strided_slice %43 {offsets = [0, 0], sizes = [8, 128], strides = [1, 1]} : vector<8x192xf32> to vector<8x128xf32>
    %46 = vector.extract_strided_slice %44 {offsets = [0, 0], sizes = [8, 128], strides = [1, 1]} : vector<8x192xf32> to vector<8x128xf32>
    %47 = arith.addf %45, %46 : vector<8x128xf32>
    %48 = arith.negf %47 : vector<8x128xf32>
    %49 = math.exp %48 : vector<8x128xf32>
    %cst_23 = arith.constant 1.000000e+00 : f32
    %50 = vector.broadcast %cst_23 : f32 to vector<8x128xf32>
    %51 = arith.addf %50, %49 : vector<8x128xf32>
    %52 = arith.divf %50, %51 : vector<8x128xf32>
    %53 = vector.extract_strided_slice %52 {offsets = [0, 0], sizes = [8, 64], strides = [1, 1]} : vector<8x128xf32> to vector<8x64xf32>
    %54 = vector.extract_strided_slice %52 {offsets = [0, 64], sizes = [8, 64], strides = [1, 1]} : vector<8x128xf32> to vector<8x64xf32>
    %55 = vector.extract_strided_slice %43 {offsets = [0, 128], sizes = [8, 64], strides = [1, 1]} : vector<8x192xf32> to vector<8x64xf32>
    %56 = vector.extract_strided_slice %44 {offsets = [0, 128], sizes = [8, 64], strides = [1, 1]} : vector<8x192xf32> to vector<8x64xf32>
    %57 = arith.addf %56, %33 : vector<8x64xf32>
    %58 = arith.mulf %53, %57 : vector<8x64xf32>
    %59 = arith.addf %55, %58 : vector<8x64xf32>
    %60 = math.tanh %59 : vector<8x64xf32>
    %61 = arith.subf %19, %60 : vector<8x64xf32>
    %62 = arith.mulf %54, %61 : vector<8x64xf32>
    %63 = arith.addf %60, %62 : vector<8x64xf32>
    %c8_i32_24 = arith.constant 8 : i32
    %64 = arith.muli %c0_i32_18, %c8_i32_24 : i32
    %65 = tpu.assume_multiple %64, 8 : i32
    %66 = arith.index_cast %65 : i32 to index
    %c0_25 = arith.constant 0 : index
    %67 = vector.load %arg1[%66, %c0_25] : memref<64x64xf32, #tpu.memory_space<vmem>>, vector<8x64xf32>
    %cst_26 = arith.constant 0.000000e+00 : f32
    %68 = vector.broadcast %cst_26 : f32 to vector<8x64xf32>
    %69 = arith.cmpf ogt, %67, %68 : vector<8x64xf32>
    %70 = arith.select %69, %63, %19 : vector<8x64xi1>, vector<8x64xf32>
    %71 = vector.extract_strided_slice %70 {offsets = [0, 0], sizes = [8, 32], strides = [1, 1]} : vector<8x64xf32> to vector<8x32xf32>
    %c8_i32_27 = arith.constant 8 : i32
    %72 = arith.muli %c0_i32_18, %c8_i32_27 : i32
    %73 = tpu.assume_multiple %72, 8 : i32
    %74 = arith.index_cast %73 : i32 to index
    %c0_28 = arith.constant 0 : index
    %75 = vector.load %arg19[%74, %c0_28] : memref<64x64xf32, #tpu.memory_space<vmem>>, vector<8x32xf32>
    tpu.vector_store %arg19[%74, %c0_28], %71 {strides = array<i32>} : memref<64x64xf32, #tpu.memory_space<vmem>>, vector<8x32xf32>,
    %76 = vector.extract_strided_slice %70 {offsets = [0, 32], sizes = [8, 32], strides = [1, 1]} : vector<8x64xf32> to vector<8x32xf32>
    %c8_i32_29 = arith.constant 8 : i32
    %77 = arith.muli %34, %c8_i32_29 : i32
    %78 = tpu.assume_multiple %77, 8 : i32
    %79 = arith.index_cast %78 : i32 to index
    %c32 = arith.constant 32 : index
    %80 = vector.load %arg19[%79, %c32] : memref<64x64xf32, #tpu.memory_space<vmem>>, vector<8x32xf32>
    tpu.vector_store %arg19[%79, %c32], %76 {strides = array<i32>} : memref<64x64xf32, #tpu.memory_space<vmem>>, vector<8x32xf32>,
    %c1_i32_30 = arith.constant 1 : i32
    %c7_i32_31 = arith.constant 7 : i32
    %81 = arith.subi %c7_i32_31, %c1_i32_30 : i32
    %c8_i32_32 = arith.constant 8 : i32
    %82 = arith.muli %c1_i32_30, %c8_i32_32 : i32
    %83 = tpu.assume_multiple %82, 8 : i32
    %84 = arith.index_cast %83 : i32 to index
    %c0_33 = arith.constant 0 : index
    %85 = vector.load %arg18[%84, %c0_33] : memref<64x192xf32, #tpu.memory_space<vmem>>, vector<8x192xf32>
    %c8_i32_34 = arith.constant 8 : i32
    %86 = arith.muli %81, %c8_i32_34 : i32
    %87 = tpu.assume_multiple %86, 8 : i32
    %88 = arith.index_cast %87 : i32 to index
    %c0_35 = arith.constant 0 : index
    %89 = vector.load %arg18[%88, %c0_35] : memref<64x192xf32, #tpu.memory_space<vmem>>, vector<8x192xf32>
    %90 = arith.select %18, %85, %89 : vector<8x192xi1>, vector<8x192xf32>
    %cst_36 = arith.constant dense<0.000000e+00> : vector<8x192xf32>
    %91 = tpu.matmul %70, %29, %cst_36 {dimension_numbers = #tpu.dot_dimension_numbers<[1], [0], [0], [1], [0, 0, 1, 1], [], []>} : vector<8x64xf32>, vector<64x192xf32>, vector<8x192xf32> -> vector<8x192xf32>
    %92 = vector.extract_strided_slice %90 {offsets = [0, 0], sizes = [8, 128], strides = [1, 1]} : vector<8x192xf32> to vector<8x128xf32>
    %93 = vector.extract_strided_slice %91 {offsets = [0, 0], sizes = [8, 128], strides = [1, 1]} : vector<8x192xf32> to vector<8x128xf32>
    %94 = arith.addf %92, %93 : vector<8x128xf32>
    %95 = arith.negf %94 : vector<8x128xf32>
    %96 = math.exp %95 : vector<8x128xf32>
    %cst_37 = arith.constant 1.000000e+00 : f32
    %97 = vector.broadcast %cst_37 : f32 to vector<8x128xf32>
    %98 = arith.addf %97, %96 : vector<8x128xf32>
    %99 = arith.divf %97, %98 : vector<8x128xf32>
    %100 = vector.extract_strided_slice %99 {offsets = [0, 0], sizes = [8, 64], strides = [1, 1]} : vector<8x128xf32> to vector<8x64xf32>
    %101 = vector.extract_strided_slice %99 {offsets = [0, 64], sizes = [8, 64], strides = [1, 1]} : vector<8x128xf32> to vector<8x64xf32>
    %102 = vector.extract_strided_slice %90 {offsets = [0, 128], sizes = [8, 64], strides = [1, 1]} : vector<8x192xf32> to vector<8x64xf32>
    %103 = vector.extract_strided_slice %91 {offsets = [0, 128], sizes = [8, 64], strides = [1, 1]} : vector<8x192xf32> to vector<8x64xf32>
    %104 = arith.addf %103, %33 : vector<8x64xf32>
    %105 = arith.mulf %100, %104 : vector<8x64xf32>
    %106 = arith.addf %102, %105 : vector<8x64xf32>
    %107 = math.tanh %106 : vector<8x64xf32>
    %108 = arith.subf %70, %107 : vector<8x64xf32>
    %109 = arith.mulf %101, %108 : vector<8x64xf32>
    %110 = arith.addf %107, %109 : vector<8x64xf32>
    %c8_i32_38 = arith.constant 8 : i32
    %111 = arith.muli %c1_i32_30, %c8_i32_38 : i32
    %112 = tpu.assume_multiple %111, 8 : i32
    %113 = arith.index_cast %112 : i32 to index
    %c0_39 = arith.constant 0 : index
    %114 = vector.load %arg1[%113, %c0_39] : memref<64x64xf32, #tpu.memory_space<vmem>>, vector<8x64xf32>
    %cst_40 = arith.constant 0.000000e+00 : f32
    %115 = vector.broadcast %cst_40 : f32 to vector<8x64xf32>
    %116 = arith.cmpf ogt, %114, %115 : vector<8x64xf32>
    %117 = arith.select %116, %110, %70 : vector<8x64xi1>, vector<8x64xf32>
    %118 = vector.extract_strided_slice %117 {offsets = [0, 0], sizes = [8, 32], strides = [1, 1]} : vector<8x64xf32> to vector<8x32xf32>
    %c8_i32_41 = arith.constant 8 : i32
    %119 = arith.muli %c1_i32_30, %c8_i32_41 : i32
    %120 = tpu.assume_multiple %119, 8 : i32
    %121 = arith.index_cast %120 : i32 to index
    %c0_42 = arith.constant 0 : index
    %122 = vector.load %arg19[%121, %c0_42] : memref<64x64xf32, #tpu.memory_space<vmem>>, vector<8x32xf32>
    tpu.vector_store %arg19[%121, %c0_42], %118 {strides = array<i32>} : memref<64x64xf32, #tpu.memory_space<vmem>>, vector<8x32xf32>,
    %123 = vector.extract_strided_slice %117 {offsets = [0, 32], sizes = [8, 32], strides = [1, 1]} : vector<8x64xf32> to vector<8x32xf32>
    %c8_i32_43 = arith.constant 8 : i32
    %124 = arith.muli %81, %c8_i32_43 : i32
    %125 = tpu.assume_multiple %124, 8 : i32
    %126 = arith.index_cast %125 : i32 to index
    %c32_44 = arith.constant 32 : index
    %127 = vector.load %arg19[%126, %c32_44] : memref<64x64xf32, #tpu.memory_space<vmem>>, vector<8x32xf32>
    tpu.vector_store %arg19[%126, %c32_44], %123 {strides = array<i32>} : memref<64x64xf32, #tpu.memory_space<vmem>>, vector<8x32xf32>,
    %c2_i32 = arith.constant 2 : i32
    %c7_i32_45 = arith.constant 7 : i32
    %128 = arith.subi %c7_i32_45, %c2_i32 : i32
    %c8_i32_46 = arith.constant 8 : i32
    %129 = arith.muli %c2_i32, %c8_i32_46 : i32
    %130 = tpu.assume_multiple %129, 8 : i32
    %131 = arith.index_cast %130 : i32 to index
    %c0_47 = arith.constant 0 : index
    %132 = vector.load %arg18[%131, %c0_47] : memref<64x192xf32, #tpu.memory_space<vmem>>, vector<8x192xf32>
    %c8_i32_48 = arith.constant 8 : i32
    %133 = arith.muli %128, %c8_i32_48 : i32
    %134 = tpu.assume_multiple %133, 8 : i32
    %135 = arith.index_cast %134 : i32 to index
    %c0_49 = arith.constant 0 : index
    %136 = vector.load %arg18[%135, %c0_49] : memref<64x192xf32, #tpu.memory_space<vmem>>, vector<8x192xf32>
    %137 = arith.select %18, %132, %136 : vector<8x192xi1>, vector<8x192xf32>
    %cst_50 = arith.constant dense<0.000000e+00> : vector<8x192xf32>
    %138 = tpu.matmul %117, %29, %cst_50 {dimension_numbers = #tpu.dot_dimension_numbers<[1], [0], [0], [1], [0, 0, 1, 1], [], []>} : vector<8x64xf32>, vector<64x192xf32>, vector<8x192xf32> -> vector<8x192xf32>
    %139 = vector.extract_strided_slice %137 {offsets = [0, 0], sizes = [8, 128], strides = [1, 1]} : vector<8x192xf32> to vector<8x128xf32>
    %140 = vector.extract_strided_slice %138 {offsets = [0, 0], sizes = [8, 128], strides = [1, 1]} : vector<8x192xf32> to vector<8x128xf32>
    %141 = arith.addf %139, %140 : vector<8x128xf32>
    %142 = arith.negf %141 : vector<8x128xf32>
    %143 = math.exp %142 : vector<8x128xf32>
    %cst_51 = arith.constant 1.000000e+00 : f32
    %144 = vector.broadcast %cst_51 : f32 to vector<8x128xf32>
    %145 = arith.addf %144, %143 : vector<8x128xf32>
    %146 = arith.divf %144, %145 : vector<8x128xf32>
    %147 = vector.extract_strided_slice %146 {offsets = [0, 0], sizes = [8, 64], strides = [1, 1]} : vector<8x128xf32> to vector<8x64xf32>
    %148 = vector.extract_strided_slice %146 {offsets = [0, 64], sizes = [8, 64], strides = [1, 1]} : vector<8x128xf32> to vector<8x64xf32>
    %149 = vector.extract_strided_slice %137 {offsets = [0, 128], sizes = [8, 64], strides = [1, 1]} : vector<8x192xf32> to vector<8x64xf32>
    %150 = vector.extract_strided_slice %138 {offsets = [0, 128], sizes = [8, 64], strides = [1, 1]} : vector<8x192xf32> to vector<8x64xf32>
    %151 = arith.addf %150, %33 : vector<8x64xf32>
    %152 = arith.mulf %147, %151 : vector<8x64xf32>
    %153 = arith.addf %149, %152 : vector<8x64xf32>
    %154 = math.tanh %153 : vector<8x64xf32>
    %155 = arith.subf %117, %154 : vector<8x64xf32>
    %156 = arith.mulf %148, %155 : vector<8x64xf32>
    %157 = arith.addf %154, %156 : vector<8x64xf32>
    %c8_i32_52 = arith.constant 8 : i32
    %158 = arith.muli %c2_i32, %c8_i32_52 : i32
    %159 = tpu.assume_multiple %158, 8 : i32
    %160 = arith.index_cast %159 : i32 to index
    %c0_53 = arith.constant 0 : index
    %161 = vector.load %arg1[%160, %c0_53] : memref<64x64xf32, #tpu.memory_space<vmem>>, vector<8x64xf32>
    %cst_54 = arith.constant 0.000000e+00 : f32
    %162 = vector.broadcast %cst_54 : f32 to vector<8x64xf32>
    %163 = arith.cmpf ogt, %161, %162 : vector<8x64xf32>
    %164 = arith.select %163, %157, %117 : vector<8x64xi1>, vector<8x64xf32>
    %165 = vector.extract_strided_slice %164 {offsets = [0, 0], sizes = [8, 32], strides = [1, 1]} : vector<8x64xf32> to vector<8x32xf32>
    %c8_i32_55 = arith.constant 8 : i32
    %166 = arith.muli %c2_i32, %c8_i32_55 : i32
    %167 = tpu.assume_multiple %166, 8 : i32
    %168 = arith.index_cast %167 : i32 to index
    %c0_56 = arith.constant 0 : index
    %169 = vector.load %arg19[%168, %c0_56] : memref<64x64xf32, #tpu.memory_space<vmem>>, vector<8x32xf32>
    tpu.vector_store %arg19[%168, %c0_56], %165 {strides = array<i32>} : memref<64x64xf32, #tpu.memory_space<vmem>>, vector<8x32xf32>,
    %170 = vector.extract_strided_slice %164 {offsets = [0, 32], sizes = [8, 32], strides = [1, 1]} : vector<8x64xf32> to vector<8x32xf32>
    %c8_i32_57 = arith.constant 8 : i32
    %171 = arith.muli %128, %c8_i32_57 : i32
    %172 = tpu.assume_multiple %171, 8 : i32
    %173 = arith.index_cast %172 : i32 to index
    %c32_58 = arith.constant 32 : index
    %174 = vector.load %arg19[%173, %c32_58] : memref<64x64xf32, #tpu.memory_space<vmem>>, vector<8x32xf32>
    tpu.vector_store %arg19[%173, %c32_58], %170 {strides = array<i32>} : memref<64x64xf32, #tpu.memory_space<vmem>>, vector<8x32xf32>,
    %c3_i32 = arith.constant 3 : i32
    %c7_i32_59 = arith.constant 7 : i32
    %175 = arith.subi %c7_i32_59, %c3_i32 : i32
    %c8_i32_60 = arith.constant 8 : i32
    %176 = arith.muli %c3_i32, %c8_i32_60 : i32
    %177 = tpu.assume_multiple %176, 8 : i32
    %178 = arith.index_cast %177 : i32 to index
    %c0_61 = arith.constant 0 : index
    %179 = vector.load %arg18[%178, %c0_61] : memref<64x192xf32, #tpu.memory_space<vmem>>, vector<8x192xf32>
    %c8_i32_62 = arith.constant 8 : i32
    %180 = arith.muli %175, %c8_i32_62 : i32
    %181 = tpu.assume_multiple %180, 8 : i32
    %182 = arith.index_cast %181 : i32 to index
    %c0_63 = arith.constant 0 : index
    %183 = vector.load %arg18[%182, %c0_63] : memref<64x192xf32, #tpu.memory_space<vmem>>, vector<8x192xf32>
    %184 = arith.select %18, %179, %183 : vector<8x192xi1>, vector<8x192xf32>
    %cst_64 = arith.constant dense<0.000000e+00> : vector<8x192xf32>
    %185 = tpu.matmul %164, %29, %cst_64 {dimension_numbers = #tpu.dot_dimension_numbers<[1], [0], [0], [1], [0, 0, 1, 1], [], []>} : vector<8x64xf32>, vector<64x192xf32>, vector<8x192xf32> -> vector<8x192xf32>
    %186 = vector.extract_strided_slice %184 {offsets = [0, 0], sizes = [8, 128], strides = [1, 1]} : vector<8x192xf32> to vector<8x128xf32>
    %187 = vector.extract_strided_slice %185 {offsets = [0, 0], sizes = [8, 128], strides = [1, 1]} : vector<8x192xf32> to vector<8x128xf32>
    %188 = arith.addf %186, %187 : vector<8x128xf32>
    %189 = arith.negf %188 : vector<8x128xf32>
    %190 = math.exp %189 : vector<8x128xf32>
    %cst_65 = arith.constant 1.000000e+00 : f32
    %191 = vector.broadcast %cst_65 : f32 to vector<8x128xf32>
    %192 = arith.addf %191, %190 : vector<8x128xf32>
    %193 = arith.divf %191, %192 : vector<8x128xf32>
    %194 = vector.extract_strided_slice %193 {offsets = [0, 0], sizes = [8, 64], strides = [1, 1]} : vector<8x128xf32> to vector<8x64xf32>
    %195 = vector.extract_strided_slice %193 {offsets = [0, 64], sizes = [8, 64], strides = [1, 1]} : vector<8x128xf32> to vector<8x64xf32>
    %196 = vector.extract_strided_slice %184 {offsets = [0, 128], sizes = [8, 64], strides = [1, 1]} : vector<8x192xf32> to vector<8x64xf32>
    %197 = vector.extract_strided_slice %185 {offsets = [0, 128], sizes = [8, 64], strides = [1, 1]} : vector<8x192xf32> to vector<8x64xf32>
    %198 = arith.addf %197, %33 : vector<8x64xf32>
    %199 = arith.mulf %194, %198 : vector<8x64xf32>
    %200 = arith.addf %196, %199 : vector<8x64xf32>
    %201 = math.tanh %200 : vector<8x64xf32>
    %202 = arith.subf %164, %201 : vector<8x64xf32>
    %203 = arith.mulf %195, %202 : vector<8x64xf32>
    %204 = arith.addf %201, %203 : vector<8x64xf32>
    %c8_i32_66 = arith.constant 8 : i32
    %205 = arith.muli %c3_i32, %c8_i32_66 : i32
    %206 = tpu.assume_multiple %205, 8 : i32
    %207 = arith.index_cast %206 : i32 to index
    %c0_67 = arith.constant 0 : index
    %208 = vector.load %arg1[%207, %c0_67] : memref<64x64xf32, #tpu.memory_space<vmem>>, vector<8x64xf32>
    %cst_68 = arith.constant 0.000000e+00 : f32
    %209 = vector.broadcast %cst_68 : f32 to vector<8x64xf32>
    %210 = arith.cmpf ogt, %208, %209 : vector<8x64xf32>
    %211 = arith.select %210, %204, %164 : vector<8x64xi1>, vector<8x64xf32>
    %212 = vector.extract_strided_slice %211 {offsets = [0, 0], sizes = [8, 32], strides = [1, 1]} : vector<8x64xf32> to vector<8x32xf32>
    %c8_i32_69 = arith.constant 8 : i32
    %213 = arith.muli %c3_i32, %c8_i32_69 : i32
    %214 = tpu.assume_multiple %213, 8 : i32
    %215 = arith.index_cast %214 : i32 to index
    %c0_70 = arith.constant 0 : index
    %216 = vector.load %arg19[%215, %c0_70] : memref<64x64xf32, #tpu.memory_space<vmem>>, vector<8x32xf32>
    tpu.vector_store %arg19[%215, %c0_70], %212 {strides = array<i32>} : memref<64x64xf32, #tpu.memory_space<vmem>>, vector<8x32xf32>,
    %217 = vector.extract_strided_slice %211 {offsets = [0, 32], sizes = [8, 32], strides = [1, 1]} : vector<8x64xf32> to vector<8x32xf32>
    %c8_i32_71 = arith.constant 8 : i32
    %218 = arith.muli %175, %c8_i32_71 : i32
    %219 = tpu.assume_multiple %218, 8 : i32
    %220 = arith.index_cast %219 : i32 to index
    %c32_72 = arith.constant 32 : index
    %221 = vector.load %arg19[%220, %c32_72] : memref<64x64xf32, #tpu.memory_space<vmem>>, vector<8x32xf32>
    tpu.vector_store %arg19[%220, %c32_72], %217 {strides = array<i32>} : memref<64x64xf32, #tpu.memory_space<vmem>>, vector<8x32xf32>,
    %c4_i32 = arith.constant 4 : i32
    %c7_i32_73 = arith.constant 7 : i32
    %222 = arith.subi %c7_i32_73, %c4_i32 : i32
    %c8_i32_74 = arith.constant 8 : i32
    %223 = arith.muli %c4_i32, %c8_i32_74 : i32
    %224 = tpu.assume_multiple %223, 8 : i32
    %225 = arith.index_cast %224 : i32 to index
    %c0_75 = arith.constant 0 : index
    %226 = vector.load %arg18[%225, %c0_75] : memref<64x192xf32, #tpu.memory_space<vmem>>, vector<8x192xf32>
    %c8_i32_76 = arith.constant 8 : i32
    %227 = arith.muli %222, %c8_i32_76 : i32
    %228 = tpu.assume_multiple %227, 8 : i32
    %229 = arith.index_cast %228 : i32 to index
    %c0_77 = arith.constant 0 : index
    %230 = vector.load %arg18[%229, %c0_77] : memref<64x192xf32, #tpu.memory_space<vmem>>, vector<8x192xf32>
    %231 = arith.select %18, %226, %230 : vector<8x192xi1>, vector<8x192xf32>
    %cst_78 = arith.constant dense<0.000000e+00> : vector<8x192xf32>
    %232 = tpu.matmul %211, %29, %cst_78 {dimension_numbers = #tpu.dot_dimension_numbers<[1], [0], [0], [1], [0, 0, 1, 1], [], []>} : vector<8x64xf32>, vector<64x192xf32>, vector<8x192xf32> -> vector<8x192xf32>
    %233 = vector.extract_strided_slice %231 {offsets = [0, 0], sizes = [8, 128], strides = [1, 1]} : vector<8x192xf32> to vector<8x128xf32>
    %234 = vector.extract_strided_slice %232 {offsets = [0, 0], sizes = [8, 128], strides = [1, 1]} : vector<8x192xf32> to vector<8x128xf32>
    %235 = arith.addf %233, %234 : vector<8x128xf32>
    %236 = arith.negf %235 : vector<8x128xf32>
    %237 = math.exp %236 : vector<8x128xf32>
    %cst_79 = arith.constant 1.000000e+00 : f32
    %238 = vector.broadcast %cst_79 : f32 to vector<8x128xf32>
    %239 = arith.addf %238, %237 : vector<8x128xf32>
    %240 = arith.divf %238, %239 : vector<8x128xf32>
    %241 = vector.extract_strided_slice %240 {offsets = [0, 0], sizes = [8, 64], strides = [1, 1]} : vector<8x128xf32> to vector<8x64xf32>
    %242 = vector.extract_strided_slice %240 {offsets = [0, 64], sizes = [8, 64], strides = [1, 1]} : vector<8x128xf32> to vector<8x64xf32>
    %243 = vector.extract_strided_slice %231 {offsets = [0, 128], sizes = [8, 64], strides = [1, 1]} : vector<8x192xf32> to vector<8x64xf32>
    %244 = vector.extract_strided_slice %232 {offsets = [0, 128], sizes = [8, 64], strides = [1, 1]} : vector<8x192xf32> to vector<8x64xf32>
    %245 = arith.addf %244, %33 : vector<8x64xf32>
    %246 = arith.mulf %241, %245 : vector<8x64xf32>
    %247 = arith.addf %243, %246 : vector<8x64xf32>
    %248 = math.tanh %247 : vector<8x64xf32>
    %249 = arith.subf %211, %248 : vector<8x64xf32>
    %250 = arith.mulf %242, %249 : vector<8x64xf32>
    %251 = arith.addf %248, %250 : vector<8x64xf32>
    %c8_i32_80 = arith.constant 8 : i32
    %252 = arith.muli %c4_i32, %c8_i32_80 : i32
    %253 = tpu.assume_multiple %252, 8 : i32
    %254 = arith.index_cast %253 : i32 to index
    %c0_81 = arith.constant 0 : index
    %255 = vector.load %arg1[%254, %c0_81] : memref<64x64xf32, #tpu.memory_space<vmem>>, vector<8x64xf32>
    %cst_82 = arith.constant 0.000000e+00 : f32
    %256 = vector.broadcast %cst_82 : f32 to vector<8x64xf32>
    %257 = arith.cmpf ogt, %255, %256 : vector<8x64xf32>
    %258 = arith.select %257, %251, %211 : vector<8x64xi1>, vector<8x64xf32>
    %259 = vector.extract_strided_slice %258 {offsets = [0, 0], sizes = [8, 32], strides = [1, 1]} : vector<8x64xf32> to vector<8x32xf32>
    %c8_i32_83 = arith.constant 8 : i32
    %260 = arith.muli %c4_i32, %c8_i32_83 : i32
    %261 = tpu.assume_multiple %260, 8 : i32
    %262 = arith.index_cast %261 : i32 to index
    %c0_84 = arith.constant 0 : index
    %263 = vector.load %arg19[%262, %c0_84] : memref<64x64xf32, #tpu.memory_space<vmem>>, vector<8x32xf32>
    tpu.vector_store %arg19[%262, %c0_84], %259 {strides = array<i32>} : memref<64x64xf32, #tpu.memory_space<vmem>>, vector<8x32xf32>,
    %264 = vector.extract_strided_slice %258 {offsets = [0, 32], sizes = [8, 32], strides = [1, 1]} : vector<8x64xf32> to vector<8x32xf32>
    %c8_i32_85 = arith.constant 8 : i32
    %265 = arith.muli %222, %c8_i32_85 : i32
    %266 = tpu.assume_multiple %265, 8 : i32
    %267 = arith.index_cast %266 : i32 to index
    %c32_86 = arith.constant 32 : index
    %268 = vector.load %arg19[%267, %c32_86] : memref<64x64xf32, #tpu.memory_space<vmem>>, vector<8x32xf32>
    tpu.vector_store %arg19[%267, %c32_86], %264 {strides = array<i32>} : memref<64x64xf32, #tpu.memory_space<vmem>>, vector<8x32xf32>,
    %c5_i32 = arith.constant 5 : i32
    %c7_i32_87 = arith.constant 7 : i32
    %269 = arith.subi %c7_i32_87, %c5_i32 : i32
    %c8_i32_88 = arith.constant 8 : i32
    %270 = arith.muli %c5_i32, %c8_i32_88 : i32
    %271 = tpu.assume_multiple %270, 8 : i32
    %272 = arith.index_cast %271 : i32 to index
    %c0_89 = arith.constant 0 : index
    %273 = vector.load %arg18[%272, %c0_89] : memref<64x192xf32, #tpu.memory_space<vmem>>, vector<8x192xf32>
    %c8_i32_90 = arith.constant 8 : i32
    %274 = arith.muli %269, %c8_i32_90 : i32
    %275 = tpu.assume_multiple %274, 8 : i32
    %276 = arith.index_cast %275 : i32 to index
    %c0_91 = arith.constant 0 : index
    %277 = vector.load %arg18[%276, %c0_91] : memref<64x192xf32, #tpu.memory_space<vmem>>, vector<8x192xf32>
    %278 = arith.select %18, %273, %277 : vector<8x192xi1>, vector<8x192xf32>
    %cst_92 = arith.constant dense<0.000000e+00> : vector<8x192xf32>
    %279 = tpu.matmul %258, %29, %cst_92 {dimension_numbers = #tpu.dot_dimension_numbers<[1], [0], [0], [1], [0, 0, 1, 1], [], []>} : vector<8x64xf32>, vector<64x192xf32>, vector<8x192xf32> -> vector<8x192xf32>
    %280 = vector.extract_strided_slice %278 {offsets = [0, 0], sizes = [8, 128], strides = [1, 1]} : vector<8x192xf32> to vector<8x128xf32>
    %281 = vector.extract_strided_slice %279 {offsets = [0, 0], sizes = [8, 128], strides = [1, 1]} : vector<8x192xf32> to vector<8x128xf32>
    %282 = arith.addf %280, %281 : vector<8x128xf32>
    %283 = arith.negf %282 : vector<8x128xf32>
    %284 = math.exp %283 : vector<8x128xf32>
    %cst_93 = arith.constant 1.000000e+00 : f32
    %285 = vector.broadcast %cst_93 : f32 to vector<8x128xf32>
    %286 = arith.addf %285, %284 : vector<8x128xf32>
    %287 = arith.divf %285, %286 : vector<8x128xf32>
    %288 = vector.extract_strided_slice %287 {offsets = [0, 0], sizes = [8, 64], strides = [1, 1]} : vector<8x128xf32> to vector<8x64xf32>
    %289 = vector.extract_strided_slice %287 {offsets = [0, 64], sizes = [8, 64], strides = [1, 1]} : vector<8x128xf32> to vector<8x64xf32>
    %290 = vector.extract_strided_slice %278 {offsets = [0, 128], sizes = [8, 64], strides = [1, 1]} : vector<8x192xf32> to vector<8x64xf32>
    %291 = vector.extract_strided_slice %279 {offsets = [0, 128], sizes = [8, 64], strides = [1, 1]} : vector<8x192xf32> to vector<8x64xf32>
    %292 = arith.addf %291, %33 : vector<8x64xf32>
    %293 = arith.mulf %288, %292 : vector<8x64xf32>
    %294 = arith.addf %290, %293 : vector<8x64xf32>
    %295 = math.tanh %294 : vector<8x64xf32>
    %296 = arith.subf %258, %295 : vector<8x64xf32>
    %297 = arith.mulf %289, %296 : vector<8x64xf32>
    %298 = arith.addf %295, %297 : vector<8x64xf32>
    %c8_i32_94 = arith.constant 8 : i32
    %299 = arith.muli %c5_i32, %c8_i32_94 : i32
    %300 = tpu.assume_multiple %299, 8 : i32
    %301 = arith.index_cast %300 : i32 to index
    %c0_95 = arith.constant 0 : index
    %302 = vector.load %arg1[%301, %c0_95] : memref<64x64xf32, #tpu.memory_space<vmem>>, vector<8x64xf32>
    %cst_96 = arith.constant 0.000000e+00 : f32
    %303 = vector.broadcast %cst_96 : f32 to vector<8x64xf32>
    %304 = arith.cmpf ogt, %302, %303 : vector<8x64xf32>
    %305 = arith.select %304, %298, %258 : vector<8x64xi1>, vector<8x64xf32>
    %306 = vector.extract_strided_slice %305 {offsets = [0, 0], sizes = [8, 32], strides = [1, 1]} : vector<8x64xf32> to vector<8x32xf32>
    %c8_i32_97 = arith.constant 8 : i32
    %307 = arith.muli %c5_i32, %c8_i32_97 : i32
    %308 = tpu.assume_multiple %307, 8 : i32
    %309 = arith.index_cast %308 : i32 to index
    %c0_98 = arith.constant 0 : index
    %310 = vector.load %arg19[%309, %c0_98] : memref<64x64xf32, #tpu.memory_space<vmem>>, vector<8x32xf32>
    tpu.vector_store %arg19[%309, %c0_98], %306 {strides = array<i32>} : memref<64x64xf32, #tpu.memory_space<vmem>>, vector<8x32xf32>,
    %311 = vector.extract_strided_slice %305 {offsets = [0, 32], sizes = [8, 32], strides = [1, 1]} : vector<8x64xf32> to vector<8x32xf32>
    %c8_i32_99 = arith.constant 8 : i32
    %312 = arith.muli %269, %c8_i32_99 : i32
    %313 = tpu.assume_multiple %312, 8 : i32
    %314 = arith.index_cast %313 : i32 to index
    %c32_100 = arith.constant 32 : index
    %315 = vector.load %arg19[%314, %c32_100] : memref<64x64xf32, #tpu.memory_space<vmem>>, vector<8x32xf32>
    tpu.vector_store %arg19[%314, %c32_100], %311 {strides = array<i32>} : memref<64x64xf32, #tpu.memory_space<vmem>>, vector<8x32xf32>,
    %c6_i32 = arith.constant 6 : i32
    %c7_i32_101 = arith.constant 7 : i32
    %316 = arith.subi %c7_i32_101, %c6_i32 : i32
    %c8_i32_102 = arith.constant 8 : i32
    %317 = arith.muli %c6_i32, %c8_i32_102 : i32
    %318 = tpu.assume_multiple %317, 8 : i32
    %319 = arith.index_cast %318 : i32 to index
    %c0_103 = arith.constant 0 : index
    %320 = vector.load %arg18[%319, %c0_103] : memref<64x192xf32, #tpu.memory_space<vmem>>, vector<8x192xf32>
    %c8_i32_104 = arith.constant 8 : i32
    %321 = arith.muli %316, %c8_i32_104 : i32
    %322 = tpu.assume_multiple %321, 8 : i32
    %323 = arith.index_cast %322 : i32 to index
    %c0_105 = arith.constant 0 : index
    %324 = vector.load %arg18[%323, %c0_105] : memref<64x192xf32, #tpu.memory_space<vmem>>, vector<8x192xf32>
    %325 = arith.select %18, %320, %324 : vector<8x192xi1>, vector<8x192xf32>
    %cst_106 = arith.constant dense<0.000000e+00> : vector<8x192xf32>
    %326 = tpu.matmul %305, %29, %cst_106 {dimension_numbers = #tpu.dot_dimension_numbers<[1], [0], [0], [1], [0, 0, 1, 1], [], []>} : vector<8x64xf32>, vector<64x192xf32>, vector<8x192xf32> -> vector<8x192xf32>
    %327 = vector.extract_strided_slice %325 {offsets = [0, 0], sizes = [8, 128], strides = [1, 1]} : vector<8x192xf32> to vector<8x128xf32>
    %328 = vector.extract_strided_slice %326 {offsets = [0, 0], sizes = [8, 128], strides = [1, 1]} : vector<8x192xf32> to vector<8x128xf32>
    %329 = arith.addf %327, %328 : vector<8x128xf32>
    %330 = arith.negf %329 : vector<8x128xf32>
    %331 = math.exp %330 : vector<8x128xf32>
    %cst_107 = arith.constant 1.000000e+00 : f32
    %332 = vector.broadcast %cst_107 : f32 to vector<8x128xf32>
    %333 = arith.addf %332, %331 : vector<8x128xf32>
    %334 = arith.divf %332, %333 : vector<8x128xf32>
    %335 = vector.extract_strided_slice %334 {offsets = [0, 0], sizes = [8, 64], strides = [1, 1]} : vector<8x128xf32> to vector<8x64xf32>
    %336 = vector.extract_strided_slice %334 {offsets = [0, 64], sizes = [8, 64], strides = [1, 1]} : vector<8x128xf32> to vector<8x64xf32>
    %337 = vector.extract_strided_slice %325 {offsets = [0, 128], sizes = [8, 64], strides = [1, 1]} : vector<8x192xf32> to vector<8x64xf32>
    %338 = vector.extract_strided_slice %326 {offsets = [0, 128], sizes = [8, 64], strides = [1, 1]} : vector<8x192xf32> to vector<8x64xf32>
    %339 = arith.addf %338, %33 : vector<8x64xf32>
    %340 = arith.mulf %335, %339 : vector<8x64xf32>
    %341 = arith.addf %337, %340 : vector<8x64xf32>
    %342 = math.tanh %341 : vector<8x64xf32>
    %343 = arith.subf %305, %342 : vector<8x64xf32>
    %344 = arith.mulf %336, %343 : vector<8x64xf32>
    %345 = arith.addf %342, %344 : vector<8x64xf32>
    %c8_i32_108 = arith.constant 8 : i32
    %346 = arith.muli %c6_i32, %c8_i32_108 : i32
    %347 = tpu.assume_multiple %346, 8 : i32
    %348 = arith.index_cast %347 : i32 to index
    %c0_109 = arith.constant 0 : index
    %349 = vector.load %arg1[%348, %c0_109] : memref<64x64xf32, #tpu.memory_space<vmem>>, vector<8x64xf32>
    %cst_110 = arith.constant 0.000000e+00 : f32
    %350 = vector.broadcast %cst_110 : f32 to vector<8x64xf32>
    %351 = arith.cmpf ogt, %349, %350 : vector<8x64xf32>
    %352 = arith.select %351, %345, %305 : vector<8x64xi1>, vector<8x64xf32>
    %353 = vector.extract_strided_slice %352 {offsets = [0, 0], sizes = [8, 32], strides = [1, 1]} : vector<8x64xf32> to vector<8x32xf32>
    %c8_i32_111 = arith.constant 8 : i32
    %354 = arith.muli %c6_i32, %c8_i32_111 : i32
    %355 = tpu.assume_multiple %354, 8 : i32
    %356 = arith.index_cast %355 : i32 to index
    %c0_112 = arith.constant 0 : index
    %357 = vector.load %arg19[%356, %c0_112] : memref<64x64xf32, #tpu.memory_space<vmem>>, vector<8x32xf32>
    tpu.vector_store %arg19[%356, %c0_112], %353 {strides = array<i32>} : memref<64x64xf32, #tpu.memory_space<vmem>>, vector<8x32xf32>,
    %358 = vector.extract_strided_slice %352 {offsets = [0, 32], sizes = [8, 32], strides = [1, 1]} : vector<8x64xf32> to vector<8x32xf32>
    %c8_i32_113 = arith.constant 8 : i32
    %359 = arith.muli %316, %c8_i32_113 : i32
    %360 = tpu.assume_multiple %359, 8 : i32
    %361 = arith.index_cast %360 : i32 to index
    %c32_114 = arith.constant 32 : index
    %362 = vector.load %arg19[%361, %c32_114] : memref<64x64xf32, #tpu.memory_space<vmem>>, vector<8x32xf32>
    tpu.vector_store %arg19[%361, %c32_114], %358 {strides = array<i32>} : memref<64x64xf32, #tpu.memory_space<vmem>>, vector<8x32xf32>,
    %c7_i32_115 = arith.constant 7 : i32
    %c7_i32_116 = arith.constant 7 : i32
    %363 = arith.subi %c7_i32_116, %c7_i32_115 : i32
    %c8_i32_117 = arith.constant 8 : i32
    %364 = arith.muli %c7_i32_115, %c8_i32_117 : i32
    %365 = tpu.assume_multiple %364, 8 : i32
    %366 = arith.index_cast %365 : i32 to index
    %c0_118 = arith.constant 0 : index
    %367 = vector.load %arg18[%366, %c0_118] : memref<64x192xf32, #tpu.memory_space<vmem>>, vector<8x192xf32>
    %c8_i32_119 = arith.constant 8 : i32
    %368 = arith.muli %363, %c8_i32_119 : i32
    %369 = tpu.assume_multiple %368, 8 : i32
    %370 = arith.index_cast %369 : i32 to index
    %c0_120 = arith.constant 0 : index
    %371 = vector.load %arg18[%370, %c0_120] : memref<64x192xf32, #tpu.memory_space<vmem>>, vector<8x192xf32>
    %372 = arith.select %18, %367, %371 : vector<8x192xi1>, vector<8x192xf32>
    %cst_121 = arith.constant dense<0.000000e+00> : vector<8x192xf32>
    %373 = tpu.matmul %352, %29, %cst_121 {dimension_numbers = #tpu.dot_dimension_numbers<[1], [0], [0], [1], [0, 0, 1, 1], [], []>} : vector<8x64xf32>, vector<64x192xf32>, vector<8x192xf32> -> vector<8x192xf32>
    %374 = vector.extract_strided_slice %372 {offsets = [0, 0], sizes = [8, 128], strides = [1, 1]} : vector<8x192xf32> to vector<8x128xf32>
    %375 = vector.extract_strided_slice %373 {offsets = [0, 0], sizes = [8, 128], strides = [1, 1]} : vector<8x192xf32> to vector<8x128xf32>
    %376 = arith.addf %374, %375 : vector<8x128xf32>
    %377 = arith.negf %376 : vector<8x128xf32>
    %378 = math.exp %377 : vector<8x128xf32>
    %cst_122 = arith.constant 1.000000e+00 : f32
    %379 = vector.broadcast %cst_122 : f32 to vector<8x128xf32>
    %380 = arith.addf %379, %378 : vector<8x128xf32>
    %381 = arith.divf %379, %380 : vector<8x128xf32>
    %382 = vector.extract_strided_slice %381 {offsets = [0, 0], sizes = [8, 64], strides = [1, 1]} : vector<8x128xf32> to vector<8x64xf32>
    %383 = vector.extract_strided_slice %381 {offsets = [0, 64], sizes = [8, 64], strides = [1, 1]} : vector<8x128xf32> to vector<8x64xf32>
    %384 = vector.extract_strided_slice %372 {offsets = [0, 128], sizes = [8, 64], strides = [1, 1]} : vector<8x192xf32> to vector<8x64xf32>
    %385 = vector.extract_strided_slice %373 {offsets = [0, 128], sizes = [8, 64], strides = [1, 1]} : vector<8x192xf32> to vector<8x64xf32>
    %386 = arith.addf %385, %33 : vector<8x64xf32>
    %387 = arith.mulf %382, %386 : vector<8x64xf32>
    %388 = arith.addf %384, %387 : vector<8x64xf32>
    %389 = math.tanh %388 : vector<8x64xf32>
    %390 = arith.subf %352, %389 : vector<8x64xf32>
    %391 = arith.mulf %383, %390 : vector<8x64xf32>
    %392 = arith.addf %389, %391 : vector<8x64xf32>
    %c8_i32_123 = arith.constant 8 : i32
    %393 = arith.muli %c7_i32_115, %c8_i32_123 : i32
    %394 = tpu.assume_multiple %393, 8 : i32
    %395 = arith.index_cast %394 : i32 to index
    %c0_124 = arith.constant 0 : index
    %396 = vector.load %arg1[%395, %c0_124] : memref<64x64xf32, #tpu.memory_space<vmem>>, vector<8x64xf32>
    %cst_125 = arith.constant 0.000000e+00 : f32
    %397 = vector.broadcast %cst_125 : f32 to vector<8x64xf32>
    %398 = arith.cmpf ogt, %396, %397 : vector<8x64xf32>
    %399 = arith.select %398, %392, %352 : vector<8x64xi1>, vector<8x64xf32>
    %400 = vector.extract_strided_slice %399 {offsets = [0, 0], sizes = [8, 32], strides = [1, 1]} : vector<8x64xf32> to vector<8x32xf32>
    %c8_i32_126 = arith.constant 8 : i32
    %401 = arith.muli %c7_i32_115, %c8_i32_126 : i32
    %402 = tpu.assume_multiple %401, 8 : i32
    %403 = arith.index_cast %402 : i32 to index
    %c0_127 = arith.constant 0 : index
    %404 = vector.load %arg19[%403, %c0_127] : memref<64x64xf32, #tpu.memory_space<vmem>>, vector<8x32xf32>
    tpu.vector_store %arg19[%403, %c0_127], %400 {strides = array<i32>} : memref<64x64xf32, #tpu.memory_space<vmem>>, vector<8x32xf32>,
    %405 = vector.extract_strided_slice %399 {offsets = [0, 32], sizes = [8, 32], strides = [1, 1]} : vector<8x64xf32> to vector<8x32xf32>
    %c8_i32_128 = arith.constant 8 : i32
    %406 = arith.muli %363, %c8_i32_128 : i32
    %407 = tpu.assume_multiple %406, 8 : i32
    %408 = arith.index_cast %407 : i32 to index
    %c32_129 = arith.constant 32 : index
    %409 = vector.load %arg19[%408, %c32_129] : memref<64x64xf32, #tpu.memory_space<vmem>>, vector<8x32xf32>
    tpu.vector_store %arg19[%408, %c32_129], %405 {strides = array<i32>} : memref<64x64xf32, #tpu.memory_space<vmem>>, vector<8x32xf32>,
    %c8_i32_130 = arith.constant 8 : i32
    %c0_131 = arith.constant 0 : index
    %c0_132 = arith.constant 0 : index
    %410 = vector.load %arg19[%c0_131, %c0_132] : memref<64x64xf32, #tpu.memory_space<vmem>>, vector<64x64xf32>
    %c0_133 = arith.constant 0 : index
    %c0_134 = arith.constant 0 : index
    %c0_135 = arith.constant 0 : index
    %411 = vector.load %arg3[%c0_133, %c0_134, %c0_135] : memref<2x64x192xf32, #tpu.memory_space<vmem>>, vector<1x64x192xf32>
    %412 = vector.shape_cast %411 : vector<1x64x192xf32> to vector<64x192xf32>
    %cst_136 = arith.constant dense<0.000000e+00> : vector<64x192xf32>
    %413 = tpu.matmul %410, %412, %cst_136 {dimension_numbers = #tpu.dot_dimension_numbers<[1], [0], [0], [1], [0, 0, 1, 1], [], []>} : vector<64x64xf32>, vector<64x192xf32>, vector<64x192xf32> -> vector<64x192xf32>
    %c1 = arith.constant 1 : index
    %c0_137 = arith.constant 0 : index
    %c0_138 = arith.constant 0 : index
    %414 = vector.load %arg5[%c1, %c0_137, %c0_138] : memref<3x1x192xf32, #tpu.memory_space<vmem>>, vector<1x1x192xf32>
    %415 = vector.shape_cast %414 : vector<1x1x192xf32> to vector<1x192xf32>
    %416 = vector.broadcast %415 : vector<1x192xf32> to vector<64x192xf32>
    %417 = arith.addf %413, %416 : vector<64x192xf32>
    %c0_139 = arith.constant 0 : index
    %c0_140 = arith.constant 0 : index
    %418 = vector.load %arg18[%c0_139, %c0_140] : memref<64x192xf32, #tpu.memory_space<vmem>>, vector<64x192xf32>
    tpu.vector_store %arg18[%c0_139, %c0_140], %417 {strides = array<i32>} : memref<64x192xf32, #tpu.memory_space<vmem>>, vector<64x192xf32>,
    %c1_141 = arith.constant 1 : index
    %c0_142 = arith.constant 0 : index
    %c0_143 = arith.constant 0 : index
    %419 = vector.load %arg4[%c1_141, %c0_142, %c0_143] : memref<3x64x192xf32, #tpu.memory_space<vmem>>, vector<1x64x192xf32>
    %420 = vector.shape_cast %419 : vector<1x64x192xf32> to vector<64x192xf32>
    %c1_144 = arith.constant 1 : index
    %c0_145 = arith.constant 0 : index
    %c0_146 = arith.constant 0 : index
    %421 = vector.load %arg6[%c1_144, %c0_145, %c0_146] : memref<3x1x64xf32, #tpu.memory_space<vmem>>, vector<1x1x64xf32>
    %422 = vector.shape_cast %421 : vector<1x1x64xf32> to vector<1x64xf32>
    %423 = vector.shape_cast %422 : vector<1x64xf32> to vector<1x64xf32>
    %424 = vector.broadcast %423 : vector<1x64xf32> to vector<8x64xf32>
    %c0_i32_147 = arith.constant 0 : i32
    %c7_i32_148 = arith.constant 7 : i32
    %425 = arith.subi %c7_i32_148, %c0_i32_147 : i32
    %c8_i32_149 = arith.constant 8 : i32
    %426 = arith.muli %c0_i32_147, %c8_i32_149 : i32
    %427 = tpu.assume_multiple %426, 8 : i32
    %428 = arith.index_cast %427 : i32 to index
    %c0_150 = arith.constant 0 : index
    %429 = vector.load %arg18[%428, %c0_150] : memref<64x192xf32, #tpu.memory_space<vmem>>, vector<8x192xf32>
    %c8_i32_151 = arith.constant 8 : i32
    %430 = arith.muli %425, %c8_i32_151 : i32
    %431 = tpu.assume_multiple %430, 8 : i32
    %432 = arith.index_cast %431 : i32 to index
    %c0_152 = arith.constant 0 : index
    %433 = vector.load %arg18[%432, %c0_152] : memref<64x192xf32, #tpu.memory_space<vmem>>, vector<8x192xf32>
    %434 = arith.select %18, %429, %433 : vector<8x192xi1>, vector<8x192xf32>
    %cst_153 = arith.constant dense<0.000000e+00> : vector<8x192xf32>
    %435 = tpu.matmul %19, %420, %cst_153 {dimension_numbers = #tpu.dot_dimension_numbers<[1], [0], [0], [1], [0, 0, 1, 1], [], []>} : vector<8x64xf32>, vector<64x192xf32>, vector<8x192xf32> -> vector<8x192xf32>
    %436 = vector.extract_strided_slice %434 {offsets = [0, 0], sizes = [8, 128], strides = [1, 1]} : vector<8x192xf32> to vector<8x128xf32>
    %437 = vector.extract_strided_slice %435 {offsets = [0, 0], sizes = [8, 128], strides = [1, 1]} : vector<8x192xf32> to vector<8x128xf32>
    %438 = arith.addf %436, %437 : vector<8x128xf32>
    %439 = arith.negf %438 : vector<8x128xf32>
    %440 = math.exp %439 : vector<8x128xf32>
    %cst_154 = arith.constant 1.000000e+00 : f32
    %441 = vector.broadcast %cst_154 : f32 to vector<8x128xf32>
    %442 = arith.addf %441, %440 : vector<8x128xf32>
    %443 = arith.divf %441, %442 : vector<8x128xf32>
    %444 = vector.extract_strided_slice %443 {offsets = [0, 0], sizes = [8, 64], strides = [1, 1]} : vector<8x128xf32> to vector<8x64xf32>
    %445 = vector.extract_strided_slice %443 {offsets = [0, 64], sizes = [8, 64], strides = [1, 1]} : vector<8x128xf32> to vector<8x64xf32>
    %446 = vector.extract_strided_slice %434 {offsets = [0, 128], sizes = [8, 64], strides = [1, 1]} : vector<8x192xf32> to vector<8x64xf32>
    %447 = vector.extract_strided_slice %435 {offsets = [0, 128], sizes = [8, 64], strides = [1, 1]} : vector<8x192xf32> to vector<8x64xf32>
    %448 = arith.addf %447, %424 : vector<8x64xf32>
    %449 = arith.mulf %444, %448 : vector<8x64xf32>
    %450 = arith.addf %446, %449 : vector<8x64xf32>
    %451 = math.tanh %450 : vector<8x64xf32>
    %452 = arith.subf %19, %451 : vector<8x64xf32>
    %453 = arith.mulf %445, %452 : vector<8x64xf32>
    %454 = arith.addf %451, %453 : vector<8x64xf32>
    %c8_i32_155 = arith.constant 8 : i32
    %455 = arith.muli %c0_i32_147, %c8_i32_155 : i32
    %456 = tpu.assume_multiple %455, 8 : i32
    %457 = arith.index_cast %456 : i32 to index
    %c0_156 = arith.constant 0 : index
    %458 = vector.load %arg1[%457, %c0_156] : memref<64x64xf32, #tpu.memory_space<vmem>>, vector<8x64xf32>
    %cst_157 = arith.constant 0.000000e+00 : f32
    %459 = vector.broadcast %cst_157 : f32 to vector<8x64xf32>
    %460 = arith.cmpf ogt, %458, %459 : vector<8x64xf32>
    %461 = arith.select %460, %454, %19 : vector<8x64xi1>, vector<8x64xf32>
    %462 = vector.extract_strided_slice %461 {offsets = [0, 0], sizes = [8, 32], strides = [1, 1]} : vector<8x64xf32> to vector<8x32xf32>
    %c8_i32_158 = arith.constant 8 : i32
    %463 = arith.muli %c0_i32_147, %c8_i32_158 : i32
    %464 = tpu.assume_multiple %463, 8 : i32
    %465 = arith.index_cast %464 : i32 to index
    %c0_159 = arith.constant 0 : index
    %466 = vector.load %arg19[%465, %c0_159] : memref<64x64xf32, #tpu.memory_space<vmem>>, vector<8x32xf32>
    tpu.vector_store %arg19[%465, %c0_159], %462 {strides = array<i32>} : memref<64x64xf32, #tpu.memory_space<vmem>>, vector<8x32xf32>,
    %467 = vector.extract_strided_slice %461 {offsets = [0, 32], sizes = [8, 32], strides = [1, 1]} : vector<8x64xf32> to vector<8x32xf32>
    %c8_i32_160 = arith.constant 8 : i32
    %468 = arith.muli %425, %c8_i32_160 : i32
    %469 = tpu.assume_multiple %468, 8 : i32
    %470 = arith.index_cast %469 : i32 to index
    %c32_161 = arith.constant 32 : index
    %471 = vector.load %arg19[%470, %c32_161] : memref<64x64xf32, #tpu.memory_space<vmem>>, vector<8x32xf32>
    tpu.vector_store %arg19[%470, %c32_161], %467 {strides = array<i32>} : memref<64x64xf32, #tpu.memory_space<vmem>>, vector<8x32xf32>,
    %c1_i32_162 = arith.constant 1 : i32
    %c7_i32_163 = arith.constant 7 : i32
    %472 = arith.subi %c7_i32_163, %c1_i32_162 : i32
    %c8_i32_164 = arith.constant 8 : i32
    %473 = arith.muli %c1_i32_162, %c8_i32_164 : i32
    %474 = tpu.assume_multiple %473, 8 : i32
    %475 = arith.index_cast %474 : i32 to index
    %c0_165 = arith.constant 0 : index
    %476 = vector.load %arg18[%475, %c0_165] : memref<64x192xf32, #tpu.memory_space<vmem>>, vector<8x192xf32>
    %c8_i32_166 = arith.constant 8 : i32
    %477 = arith.muli %472, %c8_i32_166 : i32
    %478 = tpu.assume_multiple %477, 8 : i32
    %479 = arith.index_cast %478 : i32 to index
    %c0_167 = arith.constant 0 : index
    %480 = vector.load %arg18[%479, %c0_167] : memref<64x192xf32, #tpu.memory_space<vmem>>, vector<8x192xf32>
    %481 = arith.select %18, %476, %480 : vector<8x192xi1>, vector<8x192xf32>
    %cst_168 = arith.constant dense<0.000000e+00> : vector<8x192xf32>
    %482 = tpu.matmul %461, %420, %cst_168 {dimension_numbers = #tpu.dot_dimension_numbers<[1], [0], [0], [1], [0, 0, 1, 1], [], []>} : vector<8x64xf32>, vector<64x192xf32>, vector<8x192xf32> -> vector<8x192xf32>
    %483 = vector.extract_strided_slice %481 {offsets = [0, 0], sizes = [8, 128], strides = [1, 1]} : vector<8x192xf32> to vector<8x128xf32>
    %484 = vector.extract_strided_slice %482 {offsets = [0, 0], sizes = [8, 128], strides = [1, 1]} : vector<8x192xf32> to vector<8x128xf32>
    %485 = arith.addf %483, %484 : vector<8x128xf32>
    %486 = arith.negf %485 : vector<8x128xf32>
    %487 = math.exp %486 : vector<8x128xf32>
    %cst_169 = arith.constant 1.000000e+00 : f32
    %488 = vector.broadcast %cst_169 : f32 to vector<8x128xf32>
    %489 = arith.addf %488, %487 : vector<8x128xf32>
    %490 = arith.divf %488, %489 : vector<8x128xf32>
    %491 = vector.extract_strided_slice %490 {offsets = [0, 0], sizes = [8, 64], strides = [1, 1]} : vector<8x128xf32> to vector<8x64xf32>
    %492 = vector.extract_strided_slice %490 {offsets = [0, 64], sizes = [8, 64], strides = [1, 1]} : vector<8x128xf32> to vector<8x64xf32>
    %493 = vector.extract_strided_slice %481 {offsets = [0, 128], sizes = [8, 64], strides = [1, 1]} : vector<8x192xf32> to vector<8x64xf32>
    %494 = vector.extract_strided_slice %482 {offsets = [0, 128], sizes = [8, 64], strides = [1, 1]} : vector<8x192xf32> to vector<8x64xf32>
    %495 = arith.addf %494, %424 : vector<8x64xf32>
    %496 = arith.mulf %491, %495 : vector<8x64xf32>
    %497 = arith.addf %493, %496 : vector<8x64xf32>
    %498 = math.tanh %497 : vector<8x64xf32>
    %499 = arith.subf %461, %498 : vector<8x64xf32>
    %500 = arith.mulf %492, %499 : vector<8x64xf32>
    %501 = arith.addf %498, %500 : vector<8x64xf32>
    %c8_i32_170 = arith.constant 8 : i32
    %502 = arith.muli %c1_i32_162, %c8_i32_170 : i32
    %503 = tpu.assume_multiple %502, 8 : i32
    %504 = arith.index_cast %503 : i32 to index
    %c0_171 = arith.constant 0 : index
    %505 = vector.load %arg1[%504, %c0_171] : memref<64x64xf32, #tpu.memory_space<vmem>>, vector<8x64xf32>
    %cst_172 = arith.constant 0.000000e+00 : f32
    %506 = vector.broadcast %cst_172 : f32 to vector<8x64xf32>
    %507 = arith.cmpf ogt, %505, %506 : vector<8x64xf32>
    %508 = arith.select %507, %501, %461 : vector<8x64xi1>, vector<8x64xf32>
    %509 = vector.extract_strided_slice %508 {offsets = [0, 0], sizes = [8, 32], strides = [1, 1]} : vector<8x64xf32> to vector<8x32xf32>
    %c8_i32_173 = arith.constant 8 : i32
    %510 = arith.muli %c1_i32_162, %c8_i32_173 : i32
    %511 = tpu.assume_multiple %510, 8 : i32
    %512 = arith.index_cast %511 : i32 to index
    %c0_174 = arith.constant 0 : index
    %513 = vector.load %arg19[%512, %c0_174] : memref<64x64xf32, #tpu.memory_space<vmem>>, vector<8x32xf32>
    tpu.vector_store %arg19[%512, %c0_174], %509 {strides = array<i32>} : memref<64x64xf32, #tpu.memory_space<vmem>>, vector<8x32xf32>,
    %514 = vector.extract_strided_slice %508 {offsets = [0, 32], sizes = [8, 32], strides = [1, 1]} : vector<8x64xf32> to vector<8x32xf32>
    %c8_i32_175 = arith.constant 8 : i32
    %515 = arith.muli %472, %c8_i32_175 : i32
    %516 = tpu.assume_multiple %515, 8 : i32
    %517 = arith.index_cast %516 : i32 to index
    %c32_176 = arith.constant 32 : index
    %518 = vector.load %arg19[%517, %c32_176] : memref<64x64xf32, #tpu.memory_space<vmem>>, vector<8x32xf32>
    tpu.vector_store %arg19[%517, %c32_176], %514 {strides = array<i32>} : memref<64x64xf32, #tpu.memory_space<vmem>>, vector<8x32xf32>,
    %c2_i32_177 = arith.constant 2 : i32
    %c7_i32_178 = arith.constant 7 : i32
    %519 = arith.subi %c7_i32_178, %c2_i32_177 : i32
    %c8_i32_179 = arith.constant 8 : i32
    %520 = arith.muli %c2_i32_177, %c8_i32_179 : i32
    %521 = tpu.assume_multiple %520, 8 : i32
    %522 = arith.index_cast %521 : i32 to index
    %c0_180 = arith.constant 0 : index
    %523 = vector.load %arg18[%522, %c0_180] : memref<64x192xf32, #tpu.memory_space<vmem>>, vector<8x192xf32>
    %c8_i32_181 = arith.constant 8 : i32
    %524 = arith.muli %519, %c8_i32_181 : i32
    %525 = tpu.assume_multiple %524, 8 : i32
    %526 = arith.index_cast %525 : i32 to index
    %c0_182 = arith.constant 0 : index
    %527 = vector.load %arg18[%526, %c0_182] : memref<64x192xf32, #tpu.memory_space<vmem>>, vector<8x192xf32>
    %528 = arith.select %18, %523, %527 : vector<8x192xi1>, vector<8x192xf32>
    %cst_183 = arith.constant dense<0.000000e+00> : vector<8x192xf32>
    %529 = tpu.matmul %508, %420, %cst_183 {dimension_numbers = #tpu.dot_dimension_numbers<[1], [0], [0], [1], [0, 0, 1, 1], [], []>} : vector<8x64xf32>, vector<64x192xf32>, vector<8x192xf32> -> vector<8x192xf32>
    %530 = vector.extract_strided_slice %528 {offsets = [0, 0], sizes = [8, 128], strides = [1, 1]} : vector<8x192xf32> to vector<8x128xf32>
    %531 = vector.extract_strided_slice %529 {offsets = [0, 0], sizes = [8, 128], strides = [1, 1]} : vector<8x192xf32> to vector<8x128xf32>
    %532 = arith.addf %530, %531 : vector<8x128xf32>
    %533 = arith.negf %532 : vector<8x128xf32>
    %534 = math.exp %533 : vector<8x128xf32>
    %cst_184 = arith.constant 1.000000e+00 : f32
    %535 = vector.broadcast %cst_184 : f32 to vector<8x128xf32>
    %536 = arith.addf %535, %534 : vector<8x128xf32>
    %537 = arith.divf %535, %536 : vector<8x128xf32>
    %538 = vector.extract_strided_slice %537 {offsets = [0, 0], sizes = [8, 64], strides = [1, 1]} : vector<8x128xf32> to vector<8x64xf32>
    %539 = vector.extract_strided_slice %537 {offsets = [0, 64], sizes = [8, 64], strides = [1, 1]} : vector<8x128xf32> to vector<8x64xf32>
    %540 = vector.extract_strided_slice %528 {offsets = [0, 128], sizes = [8, 64], strides = [1, 1]} : vector<8x192xf32> to vector<8x64xf32>
    %541 = vector.extract_strided_slice %529 {offsets = [0, 128], sizes = [8, 64], strides = [1, 1]} : vector<8x192xf32> to vector<8x64xf32>
    %542 = arith.addf %541, %424 : vector<8x64xf32>
    %543 = arith.mulf %538, %542 : vector<8x64xf32>
    %544 = arith.addf %540, %543 : vector<8x64xf32>
    %545 = math.tanh %544 : vector<8x64xf32>
    %546 = arith.subf %508, %545 : vector<8x64xf32>
    %547 = arith.mulf %539, %546 : vector<8x64xf32>
    %548 = arith.addf %545, %547 : vector<8x64xf32>
    %c8_i32_185 = arith.constant 8 : i32
    %549 = arith.muli %c2_i32_177, %c8_i32_185 : i32
    %550 = tpu.assume_multiple %549, 8 : i32
    %551 = arith.index_cast %550 : i32 to index
    %c0_186 = arith.constant 0 : index
    %552 = vector.load %arg1[%551, %c0_186] : memref<64x64xf32, #tpu.memory_space<vmem>>, vector<8x64xf32>
    %cst_187 = arith.constant 0.000000e+00 : f32
    %553 = vector.broadcast %cst_187 : f32 to vector<8x64xf32>
    %554 = arith.cmpf ogt, %552, %553 : vector<8x64xf32>
    %555 = arith.select %554, %548, %508 : vector<8x64xi1>, vector<8x64xf32>
    %556 = vector.extract_strided_slice %555 {offsets = [0, 0], sizes = [8, 32], strides = [1, 1]} : vector<8x64xf32> to vector<8x32xf32>
    %c8_i32_188 = arith.constant 8 : i32
    %557 = arith.muli %c2_i32_177, %c8_i32_188 : i32
    %558 = tpu.assume_multiple %557, 8 : i32
    %559 = arith.index_cast %558 : i32 to index
    %c0_189 = arith.constant 0 : index
    %560 = vector.load %arg19[%559, %c0_189] : memref<64x64xf32, #tpu.memory_space<vmem>>, vector<8x32xf32>
    tpu.vector_store %arg19[%559, %c0_189], %556 {strides = array<i32>} : memref<64x64xf32, #tpu.memory_space<vmem>>, vector<8x32xf32>,
    %561 = vector.extract_strided_slice %555 {offsets = [0, 32], sizes = [8, 32], strides = [1, 1]} : vector<8x64xf32> to vector<8x32xf32>
    %c8_i32_190 = arith.constant 8 : i32
    %562 = arith.muli %519, %c8_i32_190 : i32
    %563 = tpu.assume_multiple %562, 8 : i32
    %564 = arith.index_cast %563 : i32 to index
    %c32_191 = arith.constant 32 : index
    %565 = vector.load %arg19[%564, %c32_191] : memref<64x64xf32, #tpu.memory_space<vmem>>, vector<8x32xf32>
    tpu.vector_store %arg19[%564, %c32_191], %561 {strides = array<i32>} : memref<64x64xf32, #tpu.memory_space<vmem>>, vector<8x32xf32>,
    %c3_i32_192 = arith.constant 3 : i32
    %c7_i32_193 = arith.constant 7 : i32
    %566 = arith.subi %c7_i32_193, %c3_i32_192 : i32
    %c8_i32_194 = arith.constant 8 : i32
    %567 = arith.muli %c3_i32_192, %c8_i32_194 : i32
    %568 = tpu.assume_multiple %567, 8 : i32
    %569 = arith.index_cast %568 : i32 to index
    %c0_195 = arith.constant 0 : index
    %570 = vector.load %arg18[%569, %c0_195] : memref<64x192xf32, #tpu.memory_space<vmem>>, vector<8x192xf32>
    %c8_i32_196 = arith.constant 8 : i32
    %571 = arith.muli %566, %c8_i32_196 : i32
    %572 = tpu.assume_multiple %571, 8 : i32
    %573 = arith.index_cast %572 : i32 to index
    %c0_197 = arith.constant 0 : index
    %574 = vector.load %arg18[%573, %c0_197] : memref<64x192xf32, #tpu.memory_space<vmem>>, vector<8x192xf32>
    %575 = arith.select %18, %570, %574 : vector<8x192xi1>, vector<8x192xf32>
    %cst_198 = arith.constant dense<0.000000e+00> : vector<8x192xf32>
    %576 = tpu.matmul %555, %420, %cst_198 {dimension_numbers = #tpu.dot_dimension_numbers<[1], [0], [0], [1], [0, 0, 1, 1], [], []>} : vector<8x64xf32>, vector<64x192xf32>, vector<8x192xf32> -> vector<8x192xf32>
    %577 = vector.extract_strided_slice %575 {offsets = [0, 0], sizes = [8, 128], strides = [1, 1]} : vector<8x192xf32> to vector<8x128xf32>
    %578 = vector.extract_strided_slice %576 {offsets = [0, 0], sizes = [8, 128], strides = [1, 1]} : vector<8x192xf32> to vector<8x128xf32>
    %579 = arith.addf %577, %578 : vector<8x128xf32>
    %580 = arith.negf %579 : vector<8x128xf32>
    %581 = math.exp %580 : vector<8x128xf32>
    %cst_199 = arith.constant 1.000000e+00 : f32
    %582 = vector.broadcast %cst_199 : f32 to vector<8x128xf32>
    %583 = arith.addf %582, %581 : vector<8x128xf32>
    %584 = arith.divf %582, %583 : vector<8x128xf32>
    %585 = vector.extract_strided_slice %584 {offsets = [0, 0], sizes = [8, 64], strides = [1, 1]} : vector<8x128xf32> to vector<8x64xf32>
    %586 = vector.extract_strided_slice %584 {offsets = [0, 64], sizes = [8, 64], strides = [1, 1]} : vector<8x128xf32> to vector<8x64xf32>
    %587 = vector.extract_strided_slice %575 {offsets = [0, 128], sizes = [8, 64], strides = [1, 1]} : vector<8x192xf32> to vector<8x64xf32>
    %588 = vector.extract_strided_slice %576 {offsets = [0, 128], sizes = [8, 64], strides = [1, 1]} : vector<8x192xf32> to vector<8x64xf32>
    %589 = arith.addf %588, %424 : vector<8x64xf32>
    %590 = arith.mulf %585, %589 : vector<8x64xf32>
    %591 = arith.addf %587, %590 : vector<8x64xf32>
    %592 = math.tanh %591 : vector<8x64xf32>
    %593 = arith.subf %555, %592 : vector<8x64xf32>
    %594 = arith.mulf %586, %593 : vector<8x64xf32>
    %595 = arith.addf %592, %594 : vector<8x64xf32>
    %c8_i32_200 = arith.constant 8 : i32
    %596 = arith.muli %c3_i32_192, %c8_i32_200 : i32
    %597 = tpu.assume_multiple %596, 8 : i32
    %598 = arith.index_cast %597 : i32 to index
    %c0_201 = arith.constant 0 : index
    %599 = vector.load %arg1[%598, %c0_201] : memref<64x64xf32, #tpu.memory_space<vmem>>, vector<8x64xf32>
    %cst_202 = arith.constant 0.000000e+00 : f32
    %600 = vector.broadcast %cst_202 : f32 to vector<8x64xf32>
    %601 = arith.cmpf ogt, %599, %600 : vector<8x64xf32>
    %602 = arith.select %601, %595, %555 : vector<8x64xi1>, vector<8x64xf32>
    %603 = vector.extract_strided_slice %602 {offsets = [0, 0], sizes = [8, 32], strides = [1, 1]} : vector<8x64xf32> to vector<8x32xf32>
    %c8_i32_203 = arith.constant 8 : i32
    %604 = arith.muli %c3_i32_192, %c8_i32_203 : i32
    %605 = tpu.assume_multiple %604, 8 : i32
    %606 = arith.index_cast %605 : i32 to index
    %c0_204 = arith.constant 0 : index
    %607 = vector.load %arg19[%606, %c0_204] : memref<64x64xf32, #tpu.memory_space<vmem>>, vector<8x32xf32>
    tpu.vector_store %arg19[%606, %c0_204], %603 {strides = array<i32>} : memref<64x64xf32, #tpu.memory_space<vmem>>, vector<8x32xf32>,
    %608 = vector.extract_strided_slice %602 {offsets = [0, 32], sizes = [8, 32], strides = [1, 1]} : vector<8x64xf32> to vector<8x32xf32>
    %c8_i32_205 = arith.constant 8 : i32
    %609 = arith.muli %566, %c8_i32_205 : i32
    %610 = tpu.assume_multiple %609, 8 : i32
    %611 = arith.index_cast %610 : i32 to index
    %c32_206 = arith.constant 32 : index
    %612 = vector.load %arg19[%611, %c32_206] : memref<64x64xf32, #tpu.memory_space<vmem>>, vector<8x32xf32>
    tpu.vector_store %arg19[%611, %c32_206], %608 {strides = array<i32>} : memref<64x64xf32, #tpu.memory_space<vmem>>, vector<8x32xf32>,
    %c4_i32_207 = arith.constant 4 : i32
    %c7_i32_208 = arith.constant 7 : i32
    %613 = arith.subi %c7_i32_208, %c4_i32_207 : i32
    %c8_i32_209 = arith.constant 8 : i32
    %614 = arith.muli %c4_i32_207, %c8_i32_209 : i32
    %615 = tpu.assume_multiple %614, 8 : i32
    %616 = arith.index_cast %615 : i32 to index
    %c0_210 = arith.constant 0 : index
    %617 = vector.load %arg18[%616, %c0_210] : memref<64x192xf32, #tpu.memory_space<vmem>>, vector<8x192xf32>
    %c8_i32_211 = arith.constant 8 : i32
    %618 = arith.muli %613, %c8_i32_211 : i32
    %619 = tpu.assume_multiple %618, 8 : i32
    %620 = arith.index_cast %619 : i32 to index
    %c0_212 = arith.constant 0 : index
    %621 = vector.load %arg18[%620, %c0_212] : memref<64x192xf32, #tpu.memory_space<vmem>>, vector<8x192xf32>
    %622 = arith.select %18, %617, %621 : vector<8x192xi1>, vector<8x192xf32>
    %cst_213 = arith.constant dense<0.000000e+00> : vector<8x192xf32>
    %623 = tpu.matmul %602, %420, %cst_213 {dimension_numbers = #tpu.dot_dimension_numbers<[1], [0], [0], [1], [0, 0, 1, 1], [], []>} : vector<8x64xf32>, vector<64x192xf32>, vector<8x192xf32> -> vector<8x192xf32>
    %624 = vector.extract_strided_slice %622 {offsets = [0, 0], sizes = [8, 128], strides = [1, 1]} : vector<8x192xf32> to vector<8x128xf32>
    %625 = vector.extract_strided_slice %623 {offsets = [0, 0], sizes = [8, 128], strides = [1, 1]} : vector<8x192xf32> to vector<8x128xf32>
    %626 = arith.addf %624, %625 : vector<8x128xf32>
    %627 = arith.negf %626 : vector<8x128xf32>
    %628 = math.exp %627 : vector<8x128xf32>
    %cst_214 = arith.constant 1.000000e+00 : f32
    %629 = vector.broadcast %cst_214 : f32 to vector<8x128xf32>
    %630 = arith.addf %629, %628 : vector<8x128xf32>
    %631 = arith.divf %629, %630 : vector<8x128xf32>
    %632 = vector.extract_strided_slice %631 {offsets = [0, 0], sizes = [8, 64], strides = [1, 1]} : vector<8x128xf32> to vector<8x64xf32>
    %633 = vector.extract_strided_slice %631 {offsets = [0, 64], sizes = [8, 64], strides = [1, 1]} : vector<8x128xf32> to vector<8x64xf32>
    %634 = vector.extract_strided_slice %622 {offsets = [0, 128], sizes = [8, 64], strides = [1, 1]} : vector<8x192xf32> to vector<8x64xf32>
    %635 = vector.extract_strided_slice %623 {offsets = [0, 128], sizes = [8, 64], strides = [1, 1]} : vector<8x192xf32> to vector<8x64xf32>
    %636 = arith.addf %635, %424 : vector<8x64xf32>
    %637 = arith.mulf %632, %636 : vector<8x64xf32>
    %638 = arith.addf %634, %637 : vector<8x64xf32>
    %639 = math.tanh %638 : vector<8x64xf32>
    %640 = arith.subf %602, %639 : vector<8x64xf32>
    %641 = arith.mulf %633, %640 : vector<8x64xf32>
    %642 = arith.addf %639, %641 : vector<8x64xf32>
    %c8_i32_215 = arith.constant 8 : i32
    %643 = arith.muli %c4_i32_207, %c8_i32_215 : i32
    %644 = tpu.assume_multiple %643, 8 : i32
    %645 = arith.index_cast %644 : i32 to index
    %c0_216 = arith.constant 0 : index
    %646 = vector.load %arg1[%645, %c0_216] : memref<64x64xf32, #tpu.memory_space<vmem>>, vector<8x64xf32>
    %cst_217 = arith.constant 0.000000e+00 : f32
    %647 = vector.broadcast %cst_217 : f32 to vector<8x64xf32>
    %648 = arith.cmpf ogt, %646, %647 : vector<8x64xf32>
    %649 = arith.select %648, %642, %602 : vector<8x64xi1>, vector<8x64xf32>
    %650 = vector.extract_strided_slice %649 {offsets = [0, 0], sizes = [8, 32], strides = [1, 1]} : vector<8x64xf32> to vector<8x32xf32>
    %c8_i32_218 = arith.constant 8 : i32
    %651 = arith.muli %c4_i32_207, %c8_i32_218 : i32
    %652 = tpu.assume_multiple %651, 8 : i32
    %653 = arith.index_cast %652 : i32 to index
    %c0_219 = arith.constant 0 : index
    %654 = vector.load %arg19[%653, %c0_219] : memref<64x64xf32, #tpu.memory_space<vmem>>, vector<8x32xf32>
    tpu.vector_store %arg19[%653, %c0_219], %650 {strides = array<i32>} : memref<64x64xf32, #tpu.memory_space<vmem>>, vector<8x32xf32>,
    %655 = vector.extract_strided_slice %649 {offsets = [0, 32], sizes = [8, 32], strides = [1, 1]} : vector<8x64xf32> to vector<8x32xf32>
    %c8_i32_220 = arith.constant 8 : i32
    %656 = arith.muli %613, %c8_i32_220 : i32
    %657 = tpu.assume_multiple %656, 8 : i32
    %658 = arith.index_cast %657 : i32 to index
    %c32_221 = arith.constant 32 : index
    %659 = vector.load %arg19[%658, %c32_221] : memref<64x64xf32, #tpu.memory_space<vmem>>, vector<8x32xf32>
    tpu.vector_store %arg19[%658, %c32_221], %655 {strides = array<i32>} : memref<64x64xf32, #tpu.memory_space<vmem>>, vector<8x32xf32>,
    %c5_i32_222 = arith.constant 5 : i32
    %c7_i32_223 = arith.constant 7 : i32
    %660 = arith.subi %c7_i32_223, %c5_i32_222 : i32
    %c8_i32_224 = arith.constant 8 : i32
    %661 = arith.muli %c5_i32_222, %c8_i32_224 : i32
    %662 = tpu.assume_multiple %661, 8 : i32
    %663 = arith.index_cast %662 : i32 to index
    %c0_225 = arith.constant 0 : index
    %664 = vector.load %arg18[%663, %c0_225] : memref<64x192xf32, #tpu.memory_space<vmem>>, vector<8x192xf32>
    %c8_i32_226 = arith.constant 8 : i32
    %665 = arith.muli %660, %c8_i32_226 : i32
    %666 = tpu.assume_multiple %665, 8 : i32
    %667 = arith.index_cast %666 : i32 to index
    %c0_227 = arith.constant 0 : index
    %668 = vector.load %arg18[%667, %c0_227] : memref<64x192xf32, #tpu.memory_space<vmem>>, vector<8x192xf32>
    %669 = arith.select %18, %664, %668 : vector<8x192xi1>, vector<8x192xf32>
    %cst_228 = arith.constant dense<0.000000e+00> : vector<8x192xf32>
    %670 = tpu.matmul %649, %420, %cst_228 {dimension_numbers = #tpu.dot_dimension_numbers<[1], [0], [0], [1], [0, 0, 1, 1], [], []>} : vector<8x64xf32>, vector<64x192xf32>, vector<8x192xf32> -> vector<8x192xf32>
    %671 = vector.extract_strided_slice %669 {offsets = [0, 0], sizes = [8, 128], strides = [1, 1]} : vector<8x192xf32> to vector<8x128xf32>
    %672 = vector.extract_strided_slice %670 {offsets = [0, 0], sizes = [8, 128], strides = [1, 1]} : vector<8x192xf32> to vector<8x128xf32>
    %673 = arith.addf %671, %672 : vector<8x128xf32>
    %674 = arith.negf %673 : vector<8x128xf32>
    %675 = math.exp %674 : vector<8x128xf32>
    %cst_229 = arith.constant 1.000000e+00 : f32
    %676 = vector.broadcast %cst_229 : f32 to vector<8x128xf32>
    %677 = arith.addf %676, %675 : vector<8x128xf32>
    %678 = arith.divf %676, %677 : vector<8x128xf32>
    %679 = vector.extract_strided_slice %678 {offsets = [0, 0], sizes = [8, 64], strides = [1, 1]} : vector<8x128xf32> to vector<8x64xf32>
    %680 = vector.extract_strided_slice %678 {offsets = [0, 64], sizes = [8, 64], strides = [1, 1]} : vector<8x128xf32> to vector<8x64xf32>
    %681 = vector.extract_strided_slice %669 {offsets = [0, 128], sizes = [8, 64], strides = [1, 1]} : vector<8x192xf32> to vector<8x64xf32>
    %682 = vector.extract_strided_slice %670 {offsets = [0, 128], sizes = [8, 64], strides = [1, 1]} : vector<8x192xf32> to vector<8x64xf32>
    %683 = arith.addf %682, %424 : vector<8x64xf32>
    %684 = arith.mulf %679, %683 : vector<8x64xf32>
    %685 = arith.addf %681, %684 : vector<8x64xf32>
    %686 = math.tanh %685 : vector<8x64xf32>
    %687 = arith.subf %649, %686 : vector<8x64xf32>
    %688 = arith.mulf %680, %687 : vector<8x64xf32>
    %689 = arith.addf %686, %688 : vector<8x64xf32>
    %c8_i32_230 = arith.constant 8 : i32
    %690 = arith.muli %c5_i32_222, %c8_i32_230 : i32
    %691 = tpu.assume_multiple %690, 8 : i32
    %692 = arith.index_cast %691 : i32 to index
    %c0_231 = arith.constant 0 : index
    %693 = vector.load %arg1[%692, %c0_231] : memref<64x64xf32, #tpu.memory_space<vmem>>, vector<8x64xf32>
    %cst_232 = arith.constant 0.000000e+00 : f32
    %694 = vector.broadcast %cst_232 : f32 to vector<8x64xf32>
    %695 = arith.cmpf ogt, %693, %694 : vector<8x64xf32>
    %696 = arith.select %695, %689, %649 : vector<8x64xi1>, vector<8x64xf32>
    %697 = vector.extract_strided_slice %696 {offsets = [0, 0], sizes = [8, 32], strides = [1, 1]} : vector<8x64xf32> to vector<8x32xf32>
    %c8_i32_233 = arith.constant 8 : i32
    %698 = arith.muli %c5_i32_222, %c8_i32_233 : i32
    %699 = tpu.assume_multiple %698, 8 : i32
    %700 = arith.index_cast %699 : i32 to index
    %c0_234 = arith.constant 0 : index
    %701 = vector.load %arg19[%700, %c0_234] : memref<64x64xf32, #tpu.memory_space<vmem>>, vector<8x32xf32>
    tpu.vector_store %arg19[%700, %c0_234], %697 {strides = array<i32>} : memref<64x64xf32, #tpu.memory_space<vmem>>, vector<8x32xf32>,
    %702 = vector.extract_strided_slice %696 {offsets = [0, 32], sizes = [8, 32], strides = [1, 1]} : vector<8x64xf32> to vector<8x32xf32>
    %c8_i32_235 = arith.constant 8 : i32
    %703 = arith.muli %660, %c8_i32_235 : i32
    %704 = tpu.assume_multiple %703, 8 : i32
    %705 = arith.index_cast %704 : i32 to index
    %c32_236 = arith.constant 32 : index
    %706 = vector.load %arg19[%705, %c32_236] : memref<64x64xf32, #tpu.memory_space<vmem>>, vector<8x32xf32>
    tpu.vector_store %arg19[%705, %c32_236], %702 {strides = array<i32>} : memref<64x64xf32, #tpu.memory_space<vmem>>, vector<8x32xf32>,
    %c6_i32_237 = arith.constant 6 : i32
    %c7_i32_238 = arith.constant 7 : i32
    %707 = arith.subi %c7_i32_238, %c6_i32_237 : i32
    %c8_i32_239 = arith.constant 8 : i32
    %708 = arith.muli %c6_i32_237, %c8_i32_239 : i32
    %709 = tpu.assume_multiple %708, 8 : i32
    %710 = arith.index_cast %709 : i32 to index
    %c0_240 = arith.constant 0 : index
    %711 = vector.load %arg18[%710, %c0_240] : memref<64x192xf32, #tpu.memory_space<vmem>>, vector<8x192xf32>
    %c8_i32_241 = arith.constant 8 : i32
    %712 = arith.muli %707, %c8_i32_241 : i32
    %713 = tpu.assume_multiple %712, 8 : i32
    %714 = arith.index_cast %713 : i32 to index
    %c0_242 = arith.constant 0 : index
    %715 = vector.load %arg18[%714, %c0_242] : memref<64x192xf32, #tpu.memory_space<vmem>>, vector<8x192xf32>
    %716 = arith.select %18, %711, %715 : vector<8x192xi1>, vector<8x192xf32>
    %cst_243 = arith.constant dense<0.000000e+00> : vector<8x192xf32>
    %717 = tpu.matmul %696, %420, %cst_243 {dimension_numbers = #tpu.dot_dimension_numbers<[1], [0], [0], [1], [0, 0, 1, 1], [], []>} : vector<8x64xf32>, vector<64x192xf32>, vector<8x192xf32> -> vector<8x192xf32>
    %718 = vector.extract_strided_slice %716 {offsets = [0, 0], sizes = [8, 128], strides = [1, 1]} : vector<8x192xf32> to vector<8x128xf32>
    %719 = vector.extract_strided_slice %717 {offsets = [0, 0], sizes = [8, 128], strides = [1, 1]} : vector<8x192xf32> to vector<8x128xf32>
    %720 = arith.addf %718, %719 : vector<8x128xf32>
    %721 = arith.negf %720 : vector<8x128xf32>
    %722 = math.exp %721 : vector<8x128xf32>
    %cst_244 = arith.constant 1.000000e+00 : f32
    %723 = vector.broadcast %cst_244 : f32 to vector<8x128xf32>
    %724 = arith.addf %723, %722 : vector<8x128xf32>
    %725 = arith.divf %723, %724 : vector<8x128xf32>
    %726 = vector.extract_strided_slice %725 {offsets = [0, 0], sizes = [8, 64], strides = [1, 1]} : vector<8x128xf32> to vector<8x64xf32>
    %727 = vector.extract_strided_slice %725 {offsets = [0, 64], sizes = [8, 64], strides = [1, 1]} : vector<8x128xf32> to vector<8x64xf32>
    %728 = vector.extract_strided_slice %716 {offsets = [0, 128], sizes = [8, 64], strides = [1, 1]} : vector<8x192xf32> to vector<8x64xf32>
    %729 = vector.extract_strided_slice %717 {offsets = [0, 128], sizes = [8, 64], strides = [1, 1]} : vector<8x192xf32> to vector<8x64xf32>
    %730 = arith.addf %729, %424 : vector<8x64xf32>
    %731 = arith.mulf %726, %730 : vector<8x64xf32>
    %732 = arith.addf %728, %731 : vector<8x64xf32>
    %733 = math.tanh %732 : vector<8x64xf32>
    %734 = arith.subf %696, %733 : vector<8x64xf32>
    %735 = arith.mulf %727, %734 : vector<8x64xf32>
    %736 = arith.addf %733, %735 : vector<8x64xf32>
    %c8_i32_245 = arith.constant 8 : i32
    %737 = arith.muli %c6_i32_237, %c8_i32_245 : i32
    %738 = tpu.assume_multiple %737, 8 : i32
    %739 = arith.index_cast %738 : i32 to index
    %c0_246 = arith.constant 0 : index
    %740 = vector.load %arg1[%739, %c0_246] : memref<64x64xf32, #tpu.memory_space<vmem>>, vector<8x64xf32>
    %cst_247 = arith.constant 0.000000e+00 : f32
    %741 = vector.broadcast %cst_247 : f32 to vector<8x64xf32>
    %742 = arith.cmpf ogt, %740, %741 : vector<8x64xf32>
    %743 = arith.select %742, %736, %696 : vector<8x64xi1>, vector<8x64xf32>
    %744 = vector.extract_strided_slice %743 {offsets = [0, 0], sizes = [8, 32], strides = [1, 1]} : vector<8x64xf32> to vector<8x32xf32>
    %c8_i32_248 = arith.constant 8 : i32
    %745 = arith.muli %c6_i32_237, %c8_i32_248 : i32
    %746 = tpu.assume_multiple %745, 8 : i32
    %747 = arith.index_cast %746 : i32 to index
    %c0_249 = arith.constant 0 : index
    %748 = vector.load %arg19[%747, %c0_249] : memref<64x64xf32, #tpu.memory_space<vmem>>, vector<8x32xf32>
    tpu.vector_store %arg19[%747, %c0_249], %744 {strides = array<i32>} : memref<64x64xf32, #tpu.memory_space<vmem>>, vector<8x32xf32>,
    %749 = vector.extract_strided_slice %743 {offsets = [0, 32], sizes = [8, 32], strides = [1, 1]} : vector<8x64xf32> to vector<8x32xf32>
    %c8_i32_250 = arith.constant 8 : i32
    %750 = arith.muli %707, %c8_i32_250 : i32
    %751 = tpu.assume_multiple %750, 8 : i32
    %752 = arith.index_cast %751 : i32 to index
    %c32_251 = arith.constant 32 : index
    %753 = vector.load %arg19[%752, %c32_251] : memref<64x64xf32, #tpu.memory_space<vmem>>, vector<8x32xf32>
    tpu.vector_store %arg19[%752, %c32_251], %749 {strides = array<i32>} : memref<64x64xf32, #tpu.memory_space<vmem>>, vector<8x32xf32>,
    %c7_i32_252 = arith.constant 7 : i32
    %c7_i32_253 = arith.constant 7 : i32
    %754 = arith.subi %c7_i32_253, %c7_i32_252 : i32
    %c8_i32_254 = arith.constant 8 : i32
    %755 = arith.muli %c7_i32_252, %c8_i32_254 : i32
    %756 = tpu.assume_multiple %755, 8 : i32
    %757 = arith.index_cast %756 : i32 to index
    %c0_255 = arith.constant 0 : index
    %758 = vector.load %arg18[%757, %c0_255] : memref<64x192xf32, #tpu.memory_space<vmem>>, vector<8x192xf32>
    %c8_i32_256 = arith.constant 8 : i32
    %759 = arith.muli %754, %c8_i32_256 : i32
    %760 = tpu.assume_multiple %759, 8 : i32
    %761 = arith.index_cast %760 : i32 to index
    %c0_257 = arith.constant 0 : index
    %762 = vector.load %arg18[%761, %c0_257] : memref<64x192xf32, #tpu.memory_space<vmem>>, vector<8x192xf32>
    %763 = arith.select %18, %758, %762 : vector<8x192xi1>, vector<8x192xf32>
    %cst_258 = arith.constant dense<0.000000e+00> : vector<8x192xf32>
    %764 = tpu.matmul %743, %420, %cst_258 {dimension_numbers = #tpu.dot_dimension_numbers<[1], [0], [0], [1], [0, 0, 1, 1], [], []>} : vector<8x64xf32>, vector<64x192xf32>, vector<8x192xf32> -> vector<8x192xf32>
    %765 = vector.extract_strided_slice %763 {offsets = [0, 0], sizes = [8, 128], strides = [1, 1]} : vector<8x192xf32> to vector<8x128xf32>
    %766 = vector.extract_strided_slice %764 {offsets = [0, 0], sizes = [8, 128], strides = [1, 1]} : vector<8x192xf32> to vector<8x128xf32>
    %767 = arith.addf %765, %766 : vector<8x128xf32>
    %768 = arith.negf %767 : vector<8x128xf32>
    %769 = math.exp %768 : vector<8x128xf32>
    %cst_259 = arith.constant 1.000000e+00 : f32
    %770 = vector.broadcast %cst_259 : f32 to vector<8x128xf32>
    %771 = arith.addf %770, %769 : vector<8x128xf32>
    %772 = arith.divf %770, %771 : vector<8x128xf32>
    %773 = vector.extract_strided_slice %772 {offsets = [0, 0], sizes = [8, 64], strides = [1, 1]} : vector<8x128xf32> to vector<8x64xf32>
    %774 = vector.extract_strided_slice %772 {offsets = [0, 64], sizes = [8, 64], strides = [1, 1]} : vector<8x128xf32> to vector<8x64xf32>
    %775 = vector.extract_strided_slice %763 {offsets = [0, 128], sizes = [8, 64], strides = [1, 1]} : vector<8x192xf32> to vector<8x64xf32>
    %776 = vector.extract_strided_slice %764 {offsets = [0, 128], sizes = [8, 64], strides = [1, 1]} : vector<8x192xf32> to vector<8x64xf32>
    %777 = arith.addf %776, %424 : vector<8x64xf32>
    %778 = arith.mulf %773, %777 : vector<8x64xf32>
    %779 = arith.addf %775, %778 : vector<8x64xf32>
    %780 = math.tanh %779 : vector<8x64xf32>
    %781 = arith.subf %743, %780 : vector<8x64xf32>
    %782 = arith.mulf %774, %781 : vector<8x64xf32>
    %783 = arith.addf %780, %782 : vector<8x64xf32>
    %c8_i32_260 = arith.constant 8 : i32
    %784 = arith.muli %c7_i32_252, %c8_i32_260 : i32
    %785 = tpu.assume_multiple %784, 8 : i32
    %786 = arith.index_cast %785 : i32 to index
    %c0_261 = arith.constant 0 : index
    %787 = vector.load %arg1[%786, %c0_261] : memref<64x64xf32, #tpu.memory_space<vmem>>, vector<8x64xf32>
    %cst_262 = arith.constant 0.000000e+00 : f32
    %788 = vector.broadcast %cst_262 : f32 to vector<8x64xf32>
    %789 = arith.cmpf ogt, %787, %788 : vector<8x64xf32>
    %790 = arith.select %789, %783, %743 : vector<8x64xi1>, vector<8x64xf32>
    %791 = vector.extract_strided_slice %790 {offsets = [0, 0], sizes = [8, 32], strides = [1, 1]} : vector<8x64xf32> to vector<8x32xf32>
    %c8_i32_263 = arith.constant 8 : i32
    %792 = arith.muli %c7_i32_252, %c8_i32_263 : i32
    %793 = tpu.assume_multiple %792, 8 : i32
    %794 = arith.index_cast %793 : i32 to index
    %c0_264 = arith.constant 0 : index
    %795 = vector.load %arg19[%794, %c0_264] : memref<64x64xf32, #tpu.memory_space<vmem>>, vector<8x32xf32>
    tpu.vector_store %arg19[%794, %c0_264], %791 {strides = array<i32>} : memref<64x64xf32, #tpu.memory_space<vmem>>, vector<8x32xf32>,
    %796 = vector.extract_strided_slice %790 {offsets = [0, 32], sizes = [8, 32], strides = [1, 1]} : vector<8x64xf32> to vector<8x32xf32>
    %c8_i32_265 = arith.constant 8 : i32
    %797 = arith.muli %754, %c8_i32_265 : i32
    %798 = tpu.assume_multiple %797, 8 : i32
    %799 = arith.index_cast %798 : i32 to index
    %c32_266 = arith.constant 32 : index
    %800 = vector.load %arg19[%799, %c32_266] : memref<64x64xf32, #tpu.memory_space<vmem>>, vector<8x32xf32>
    tpu.vector_store %arg19[%799, %c32_266], %796 {strides = array<i32>} : memref<64x64xf32, #tpu.memory_space<vmem>>, vector<8x32xf32>,
    %c8_i32_267 = arith.constant 8 : i32
    %c0_268 = arith.constant 0 : index
    %c0_269 = arith.constant 0 : index
    %801 = vector.load %arg19[%c0_268, %c0_269] : memref<64x64xf32, #tpu.memory_space<vmem>>, vector<64x64xf32>
    %c1_270 = arith.constant 1 : index
    %c0_271 = arith.constant 0 : index
    %c0_272 = arith.constant 0 : index
    %802 = vector.load %arg3[%c1_270, %c0_271, %c0_272] : memref<2x64x192xf32, #tpu.memory_space<vmem>>, vector<1x64x192xf32>
    %803 = vector.shape_cast %802 : vector<1x64x192xf32> to vector<64x192xf32>
    %cst_273 = arith.constant dense<0.000000e+00> : vector<64x192xf32>
    %804 = tpu.matmul %801, %803, %cst_273 {dimension_numbers = #tpu.dot_dimension_numbers<[1], [0], [0], [1], [0, 0, 1, 1], [], []>} : vector<64x64xf32>, vector<64x192xf32>, vector<64x192xf32> -> vector<64x192xf32>
    %c2 = arith.constant 2 : index
    %c0_274 = arith.constant 0 : index
    %c0_275 = arith.constant 0 : index
    %805 = vector.load %arg5[%c2, %c0_274, %c0_275] : memref<3x1x192xf32, #tpu.memory_space<vmem>>, vector<1x1x192xf32>
    %806 = vector.shape_cast %805 : vector<1x1x192xf32> to vector<1x192xf32>
    %807 = vector.broadcast %806 : vector<1x192xf32> to vector<64x192xf32>
    %808 = arith.addf %804, %807 : vector<64x192xf32>
    %c0_276 = arith.constant 0 : index
    %c0_277 = arith.constant 0 : index
    %809 = vector.load %arg18[%c0_276, %c0_277] : memref<64x192xf32, #tpu.memory_space<vmem>>, vector<64x192xf32>
    tpu.vector_store %arg18[%c0_276, %c0_277], %808 {strides = array<i32>} : memref<64x192xf32, #tpu.memory_space<vmem>>, vector<64x192xf32>,
    %c2_278 = arith.constant 2 : index
    %c0_279 = arith.constant 0 : index
    %c0_280 = arith.constant 0 : index
    %810 = vector.load %arg4[%c2_278, %c0_279, %c0_280] : memref<3x64x192xf32, #tpu.memory_space<vmem>>, vector<1x64x192xf32>
    %811 = vector.shape_cast %810 : vector<1x64x192xf32> to vector<64x192xf32>
    %c2_281 = arith.constant 2 : index
    %c0_282 = arith.constant 0 : index
    %c0_283 = arith.constant 0 : index
    %812 = vector.load %arg6[%c2_281, %c0_282, %c0_283] : memref<3x1x64xf32, #tpu.memory_space<vmem>>, vector<1x1x64xf32>
    %813 = vector.shape_cast %812 : vector<1x1x64xf32> to vector<1x64xf32>
    %814 = vector.shape_cast %813 : vector<1x64xf32> to vector<1x64xf32>
    %815 = vector.broadcast %814 : vector<1x64xf32> to vector<8x64xf32>
    %c0_i32_284 = arith.constant 0 : i32
    %c7_i32_285 = arith.constant 7 : i32
    %816 = arith.subi %c7_i32_285, %c0_i32_284 : i32
    %c8_i32_286 = arith.constant 8 : i32
    %817 = arith.muli %c0_i32_284, %c8_i32_286 : i32
    %818 = tpu.assume_multiple %817, 8 : i32
    %819 = arith.index_cast %818 : i32 to index
    %c0_287 = arith.constant 0 : index
    %820 = vector.load %arg18[%819, %c0_287] : memref<64x192xf32, #tpu.memory_space<vmem>>, vector<8x192xf32>
    %c8_i32_288 = arith.constant 8 : i32
    %821 = arith.muli %816, %c8_i32_288 : i32
    %822 = tpu.assume_multiple %821, 8 : i32
    %823 = arith.index_cast %822 : i32 to index
    %c0_289 = arith.constant 0 : index
    %824 = vector.load %arg18[%823, %c0_289] : memref<64x192xf32, #tpu.memory_space<vmem>>, vector<8x192xf32>
    %825 = arith.select %18, %820, %824 : vector<8x192xi1>, vector<8x192xf32>
    %cst_290 = arith.constant dense<0.000000e+00> : vector<8x192xf32>
    %826 = tpu.matmul %19, %811, %cst_290 {dimension_numbers = #tpu.dot_dimension_numbers<[1], [0], [0], [1], [0, 0, 1, 1], [], []>} : vector<8x64xf32>, vector<64x192xf32>, vector<8x192xf32> -> vector<8x192xf32>
    %827 = vector.extract_strided_slice %825 {offsets = [0, 0], sizes = [8, 128], strides = [1, 1]} : vector<8x192xf32> to vector<8x128xf32>
    %828 = vector.extract_strided_slice %826 {offsets = [0, 0], sizes = [8, 128], strides = [1, 1]} : vector<8x192xf32> to vector<8x128xf32>
    %829 = arith.addf %827, %828 : vector<8x128xf32>
    %830 = arith.negf %829 : vector<8x128xf32>
    %831 = math.exp %830 : vector<8x128xf32>
    %cst_291 = arith.constant 1.000000e+00 : f32
    %832 = vector.broadcast %cst_291 : f32 to vector<8x128xf32>
    %833 = arith.addf %832, %831 : vector<8x128xf32>
    %834 = arith.divf %832, %833 : vector<8x128xf32>
    %835 = vector.extract_strided_slice %834 {offsets = [0, 0], sizes = [8, 64], strides = [1, 1]} : vector<8x128xf32> to vector<8x64xf32>
    %836 = vector.extract_strided_slice %834 {offsets = [0, 64], sizes = [8, 64], strides = [1, 1]} : vector<8x128xf32> to vector<8x64xf32>
    %837 = vector.extract_strided_slice %825 {offsets = [0, 128], sizes = [8, 64], strides = [1, 1]} : vector<8x192xf32> to vector<8x64xf32>
    %838 = vector.extract_strided_slice %826 {offsets = [0, 128], sizes = [8, 64], strides = [1, 1]} : vector<8x192xf32> to vector<8x64xf32>
    %839 = arith.addf %838, %815 : vector<8x64xf32>
    %840 = arith.mulf %835, %839 : vector<8x64xf32>
    %841 = arith.addf %837, %840 : vector<8x64xf32>
    %842 = math.tanh %841 : vector<8x64xf32>
    %843 = arith.subf %19, %842 : vector<8x64xf32>
    %844 = arith.mulf %836, %843 : vector<8x64xf32>
    %845 = arith.addf %842, %844 : vector<8x64xf32>
    %c8_i32_292 = arith.constant 8 : i32
    %846 = arith.muli %c0_i32_284, %c8_i32_292 : i32
    %847 = tpu.assume_multiple %846, 8 : i32
    %848 = arith.index_cast %847 : i32 to index
    %c0_293 = arith.constant 0 : index
    %849 = vector.load %arg1[%848, %c0_293] : memref<64x64xf32, #tpu.memory_space<vmem>>, vector<8x64xf32>
    %cst_294 = arith.constant 0.000000e+00 : f32
    %850 = vector.broadcast %cst_294 : f32 to vector<8x64xf32>
    %851 = arith.cmpf ogt, %849, %850 : vector<8x64xf32>
    %852 = arith.select %851, %845, %19 : vector<8x64xi1>, vector<8x64xf32>
    %c1_i32_295 = arith.constant 1 : i32
    %c7_i32_296 = arith.constant 7 : i32
    %853 = arith.subi %c7_i32_296, %c1_i32_295 : i32
    %c8_i32_297 = arith.constant 8 : i32
    %854 = arith.muli %c1_i32_295, %c8_i32_297 : i32
    %855 = tpu.assume_multiple %854, 8 : i32
    %856 = arith.index_cast %855 : i32 to index
    %c0_298 = arith.constant 0 : index
    %857 = vector.load %arg18[%856, %c0_298] : memref<64x192xf32, #tpu.memory_space<vmem>>, vector<8x192xf32>
    %c8_i32_299 = arith.constant 8 : i32
    %858 = arith.muli %853, %c8_i32_299 : i32
    %859 = tpu.assume_multiple %858, 8 : i32
    %860 = arith.index_cast %859 : i32 to index
    %c0_300 = arith.constant 0 : index
    %861 = vector.load %arg18[%860, %c0_300] : memref<64x192xf32, #tpu.memory_space<vmem>>, vector<8x192xf32>
    %862 = arith.select %18, %857, %861 : vector<8x192xi1>, vector<8x192xf32>
    %cst_301 = arith.constant dense<0.000000e+00> : vector<8x192xf32>
    %863 = tpu.matmul %852, %811, %cst_301 {dimension_numbers = #tpu.dot_dimension_numbers<[1], [0], [0], [1], [0, 0, 1, 1], [], []>} : vector<8x64xf32>, vector<64x192xf32>, vector<8x192xf32> -> vector<8x192xf32>
    %864 = vector.extract_strided_slice %862 {offsets = [0, 0], sizes = [8, 128], strides = [1, 1]} : vector<8x192xf32> to vector<8x128xf32>
    %865 = vector.extract_strided_slice %863 {offsets = [0, 0], sizes = [8, 128], strides = [1, 1]} : vector<8x192xf32> to vector<8x128xf32>
    %866 = arith.addf %864, %865 : vector<8x128xf32>
    %867 = arith.negf %866 : vector<8x128xf32>
    %868 = math.exp %867 : vector<8x128xf32>
    %cst_302 = arith.constant 1.000000e+00 : f32
    %869 = vector.broadcast %cst_302 : f32 to vector<8x128xf32>
    %870 = arith.addf %869, %868 : vector<8x128xf32>
    %871 = arith.divf %869, %870 : vector<8x128xf32>
    %872 = vector.extract_strided_slice %871 {offsets = [0, 0], sizes = [8, 64], strides = [1, 1]} : vector<8x128xf32> to vector<8x64xf32>
    %873 = vector.extract_strided_slice %871 {offsets = [0, 64], sizes = [8, 64], strides = [1, 1]} : vector<8x128xf32> to vector<8x64xf32>
    %874 = vector.extract_strided_slice %862 {offsets = [0, 128], sizes = [8, 64], strides = [1, 1]} : vector<8x192xf32> to vector<8x64xf32>
    %875 = vector.extract_strided_slice %863 {offsets = [0, 128], sizes = [8, 64], strides = [1, 1]} : vector<8x192xf32> to vector<8x64xf32>
    %876 = arith.addf %875, %815 : vector<8x64xf32>
    %877 = arith.mulf %872, %876 : vector<8x64xf32>
    %878 = arith.addf %874, %877 : vector<8x64xf32>
    %879 = math.tanh %878 : vector<8x64xf32>
    %880 = arith.subf %852, %879 : vector<8x64xf32>
    %881 = arith.mulf %873, %880 : vector<8x64xf32>
    %882 = arith.addf %879, %881 : vector<8x64xf32>
    %c8_i32_303 = arith.constant 8 : i32
    %883 = arith.muli %c1_i32_295, %c8_i32_303 : i32
    %884 = tpu.assume_multiple %883, 8 : i32
    %885 = arith.index_cast %884 : i32 to index
    %c0_304 = arith.constant 0 : index
    %886 = vector.load %arg1[%885, %c0_304] : memref<64x64xf32, #tpu.memory_space<vmem>>, vector<8x64xf32>
    %cst_305 = arith.constant 0.000000e+00 : f32
    %887 = vector.broadcast %cst_305 : f32 to vector<8x64xf32>
    %888 = arith.cmpf ogt, %886, %887 : vector<8x64xf32>
    %889 = arith.select %888, %882, %852 : vector<8x64xi1>, vector<8x64xf32>
    %c2_i32_306 = arith.constant 2 : i32
    %c7_i32_307 = arith.constant 7 : i32
    %890 = arith.subi %c7_i32_307, %c2_i32_306 : i32
    %c8_i32_308 = arith.constant 8 : i32
    %891 = arith.muli %c2_i32_306, %c8_i32_308 : i32
    %892 = tpu.assume_multiple %891, 8 : i32
    %893 = arith.index_cast %892 : i32 to index
    %c0_309 = arith.constant 0 : index
    %894 = vector.load %arg18[%893, %c0_309] : memref<64x192xf32, #tpu.memory_space<vmem>>, vector<8x192xf32>
    %c8_i32_310 = arith.constant 8 : i32
    %895 = arith.muli %890, %c8_i32_310 : i32
    %896 = tpu.assume_multiple %895, 8 : i32
    %897 = arith.index_cast %896 : i32 to index
    %c0_311 = arith.constant 0 : index
    %898 = vector.load %arg18[%897, %c0_311] : memref<64x192xf32, #tpu.memory_space<vmem>>, vector<8x192xf32>
    %899 = arith.select %18, %894, %898 : vector<8x192xi1>, vector<8x192xf32>
    %cst_312 = arith.constant dense<0.000000e+00> : vector<8x192xf32>
    %900 = tpu.matmul %889, %811, %cst_312 {dimension_numbers = #tpu.dot_dimension_numbers<[1], [0], [0], [1], [0, 0, 1, 1], [], []>} : vector<8x64xf32>, vector<64x192xf32>, vector<8x192xf32> -> vector<8x192xf32>
    %901 = vector.extract_strided_slice %899 {offsets = [0, 0], sizes = [8, 128], strides = [1, 1]} : vector<8x192xf32> to vector<8x128xf32>
    %902 = vector.extract_strided_slice %900 {offsets = [0, 0], sizes = [8, 128], strides = [1, 1]} : vector<8x192xf32> to vector<8x128xf32>
    %903 = arith.addf %901, %902 : vector<8x128xf32>
    %904 = arith.negf %903 : vector<8x128xf32>
    %905 = math.exp %904 : vector<8x128xf32>
    %cst_313 = arith.constant 1.000000e+00 : f32
    %906 = vector.broadcast %cst_313 : f32 to vector<8x128xf32>
    %907 = arith.addf %906, %905 : vector<8x128xf32>
    %908 = arith.divf %906, %907 : vector<8x128xf32>
    %909 = vector.extract_strided_slice %908 {offsets = [0, 0], sizes = [8, 64], strides = [1, 1]} : vector<8x128xf32> to vector<8x64xf32>
    %910 = vector.extract_strided_slice %908 {offsets = [0, 64], sizes = [8, 64], strides = [1, 1]} : vector<8x128xf32> to vector<8x64xf32>
    %911 = vector.extract_strided_slice %899 {offsets = [0, 128], sizes = [8, 64], strides = [1, 1]} : vector<8x192xf32> to vector<8x64xf32>
    %912 = vector.extract_strided_slice %900 {offsets = [0, 128], sizes = [8, 64], strides = [1, 1]} : vector<8x192xf32> to vector<8x64xf32>
    %913 = arith.addf %912, %815 : vector<8x64xf32>
    %914 = arith.mulf %909, %913 : vector<8x64xf32>
    %915 = arith.addf %911, %914 : vector<8x64xf32>
    %916 = math.tanh %915 : vector<8x64xf32>
    %917 = arith.subf %889, %916 : vector<8x64xf32>
    %918 = arith.mulf %910, %917 : vector<8x64xf32>
    %919 = arith.addf %916, %918 : vector<8x64xf32>
    %c8_i32_314 = arith.constant 8 : i32
    %920 = arith.muli %c2_i32_306, %c8_i32_314 : i32
    %921 = tpu.assume_multiple %920, 8 : i32
    %922 = arith.index_cast %921 : i32 to index
    %c0_315 = arith.constant 0 : index
    %923 = vector.load %arg1[%922, %c0_315] : memref<64x64xf32, #tpu.memory_space<vmem>>, vector<8x64xf32>
    %cst_316 = arith.constant 0.000000e+00 : f32
    %924 = vector.broadcast %cst_316 : f32 to vector<8x64xf32>
    %925 = arith.cmpf ogt, %923, %924 : vector<8x64xf32>
    %926 = arith.select %925, %919, %889 : vector<8x64xi1>, vector<8x64xf32>
    %c3_i32_317 = arith.constant 3 : i32
    %c7_i32_318 = arith.constant 7 : i32
    %927 = arith.subi %c7_i32_318, %c3_i32_317 : i32
    %c8_i32_319 = arith.constant 8 : i32
    %928 = arith.muli %c3_i32_317, %c8_i32_319 : i32
    %929 = tpu.assume_multiple %928, 8 : i32
    %930 = arith.index_cast %929 : i32 to index
    %c0_320 = arith.constant 0 : index
    %931 = vector.load %arg18[%930, %c0_320] : memref<64x192xf32, #tpu.memory_space<vmem>>, vector<8x192xf32>
    %c8_i32_321 = arith.constant 8 : i32
    %932 = arith.muli %927, %c8_i32_321 : i32
    %933 = tpu.assume_multiple %932, 8 : i32
    %934 = arith.index_cast %933 : i32 to index
    %c0_322 = arith.constant 0 : index
    %935 = vector.load %arg18[%934, %c0_322] : memref<64x192xf32, #tpu.memory_space<vmem>>, vector<8x192xf32>
    %936 = arith.select %18, %931, %935 : vector<8x192xi1>, vector<8x192xf32>
    %cst_323 = arith.constant dense<0.000000e+00> : vector<8x192xf32>
    %937 = tpu.matmul %926, %811, %cst_323 {dimension_numbers = #tpu.dot_dimension_numbers<[1], [0], [0], [1], [0, 0, 1, 1], [], []>} : vector<8x64xf32>, vector<64x192xf32>, vector<8x192xf32> -> vector<8x192xf32>
    %938 = vector.extract_strided_slice %936 {offsets = [0, 0], sizes = [8, 128], strides = [1, 1]} : vector<8x192xf32> to vector<8x128xf32>
    %939 = vector.extract_strided_slice %937 {offsets = [0, 0], sizes = [8, 128], strides = [1, 1]} : vector<8x192xf32> to vector<8x128xf32>
    %940 = arith.addf %938, %939 : vector<8x128xf32>
    %941 = arith.negf %940 : vector<8x128xf32>
    %942 = math.exp %941 : vector<8x128xf32>
    %cst_324 = arith.constant 1.000000e+00 : f32
    %943 = vector.broadcast %cst_324 : f32 to vector<8x128xf32>
    %944 = arith.addf %943, %942 : vector<8x128xf32>
    %945 = arith.divf %943, %944 : vector<8x128xf32>
    %946 = vector.extract_strided_slice %945 {offsets = [0, 0], sizes = [8, 64], strides = [1, 1]} : vector<8x128xf32> to vector<8x64xf32>
    %947 = vector.extract_strided_slice %945 {offsets = [0, 64], sizes = [8, 64], strides = [1, 1]} : vector<8x128xf32> to vector<8x64xf32>
    %948 = vector.extract_strided_slice %936 {offsets = [0, 128], sizes = [8, 64], strides = [1, 1]} : vector<8x192xf32> to vector<8x64xf32>
    %949 = vector.extract_strided_slice %937 {offsets = [0, 128], sizes = [8, 64], strides = [1, 1]} : vector<8x192xf32> to vector<8x64xf32>
    %950 = arith.addf %949, %815 : vector<8x64xf32>
    %951 = arith.mulf %946, %950 : vector<8x64xf32>
    %952 = arith.addf %948, %951 : vector<8x64xf32>
    %953 = math.tanh %952 : vector<8x64xf32>
    %954 = arith.subf %926, %953 : vector<8x64xf32>
    %955 = arith.mulf %947, %954 : vector<8x64xf32>
    %956 = arith.addf %953, %955 : vector<8x64xf32>
    %c8_i32_325 = arith.constant 8 : i32
    %957 = arith.muli %c3_i32_317, %c8_i32_325 : i32
    %958 = tpu.assume_multiple %957, 8 : i32
    %959 = arith.index_cast %958 : i32 to index
    %c0_326 = arith.constant 0 : index
    %960 = vector.load %arg1[%959, %c0_326] : memref<64x64xf32, #tpu.memory_space<vmem>>, vector<8x64xf32>
    %cst_327 = arith.constant 0.000000e+00 : f32
    %961 = vector.broadcast %cst_327 : f32 to vector<8x64xf32>
    %962 = arith.cmpf ogt, %960, %961 : vector<8x64xf32>
    %963 = arith.select %962, %956, %926 : vector<8x64xi1>, vector<8x64xf32>
    %c4_i32_328 = arith.constant 4 : i32
    %c7_i32_329 = arith.constant 7 : i32
    %964 = arith.subi %c7_i32_329, %c4_i32_328 : i32
    %c8_i32_330 = arith.constant 8 : i32
    %965 = arith.muli %c4_i32_328, %c8_i32_330 : i32
    %966 = tpu.assume_multiple %965, 8 : i32
    %967 = arith.index_cast %966 : i32 to index
    %c0_331 = arith.constant 0 : index
    %968 = vector.load %arg18[%967, %c0_331] : memref<64x192xf32, #tpu.memory_space<vmem>>, vector<8x192xf32>
    %c8_i32_332 = arith.constant 8 : i32
    %969 = arith.muli %964, %c8_i32_332 : i32
    %970 = tpu.assume_multiple %969, 8 : i32
    %971 = arith.index_cast %970 : i32 to index
    %c0_333 = arith.constant 0 : index
    %972 = vector.load %arg18[%971, %c0_333] : memref<64x192xf32, #tpu.memory_space<vmem>>, vector<8x192xf32>
    %973 = arith.select %18, %968, %972 : vector<8x192xi1>, vector<8x192xf32>
    %cst_334 = arith.constant dense<0.000000e+00> : vector<8x192xf32>
    %974 = tpu.matmul %963, %811, %cst_334 {dimension_numbers = #tpu.dot_dimension_numbers<[1], [0], [0], [1], [0, 0, 1, 1], [], []>} : vector<8x64xf32>, vector<64x192xf32>, vector<8x192xf32> -> vector<8x192xf32>
    %975 = vector.extract_strided_slice %973 {offsets = [0, 0], sizes = [8, 128], strides = [1, 1]} : vector<8x192xf32> to vector<8x128xf32>
    %976 = vector.extract_strided_slice %974 {offsets = [0, 0], sizes = [8, 128], strides = [1, 1]} : vector<8x192xf32> to vector<8x128xf32>
    %977 = arith.addf %975, %976 : vector<8x128xf32>
    %978 = arith.negf %977 : vector<8x128xf32>
    %979 = math.exp %978 : vector<8x128xf32>
    %cst_335 = arith.constant 1.000000e+00 : f32
    %980 = vector.broadcast %cst_335 : f32 to vector<8x128xf32>
    %981 = arith.addf %980, %979 : vector<8x128xf32>
    %982 = arith.divf %980, %981 : vector<8x128xf32>
    %983 = vector.extract_strided_slice %982 {offsets = [0, 0], sizes = [8, 64], strides = [1, 1]} : vector<8x128xf32> to vector<8x64xf32>
    %984 = vector.extract_strided_slice %982 {offsets = [0, 64], sizes = [8, 64], strides = [1, 1]} : vector<8x128xf32> to vector<8x64xf32>
    %985 = vector.extract_strided_slice %973 {offsets = [0, 128], sizes = [8, 64], strides = [1, 1]} : vector<8x192xf32> to vector<8x64xf32>
    %986 = vector.extract_strided_slice %974 {offsets = [0, 128], sizes = [8, 64], strides = [1, 1]} : vector<8x192xf32> to vector<8x64xf32>
    %987 = arith.addf %986, %815 : vector<8x64xf32>
    %988 = arith.mulf %983, %987 : vector<8x64xf32>
    %989 = arith.addf %985, %988 : vector<8x64xf32>
    %990 = math.tanh %989 : vector<8x64xf32>
    %991 = arith.subf %963, %990 : vector<8x64xf32>
    %992 = arith.mulf %984, %991 : vector<8x64xf32>
    %993 = arith.addf %990, %992 : vector<8x64xf32>
    %c8_i32_336 = arith.constant 8 : i32
    %994 = arith.muli %c4_i32_328, %c8_i32_336 : i32
    %995 = tpu.assume_multiple %994, 8 : i32
    %996 = arith.index_cast %995 : i32 to index
    %c0_337 = arith.constant 0 : index
    %997 = vector.load %arg1[%996, %c0_337] : memref<64x64xf32, #tpu.memory_space<vmem>>, vector<8x64xf32>
    %cst_338 = arith.constant 0.000000e+00 : f32
    %998 = vector.broadcast %cst_338 : f32 to vector<8x64xf32>
    %999 = arith.cmpf ogt, %997, %998 : vector<8x64xf32>
    %1000 = arith.select %999, %993, %963 : vector<8x64xi1>, vector<8x64xf32>
    %c5_i32_339 = arith.constant 5 : i32
    %c7_i32_340 = arith.constant 7 : i32
    %1001 = arith.subi %c7_i32_340, %c5_i32_339 : i32
    %c8_i32_341 = arith.constant 8 : i32
    %1002 = arith.muli %c5_i32_339, %c8_i32_341 : i32
    %1003 = tpu.assume_multiple %1002, 8 : i32
    %1004 = arith.index_cast %1003 : i32 to index
    %c0_342 = arith.constant 0 : index
    %1005 = vector.load %arg18[%1004, %c0_342] : memref<64x192xf32, #tpu.memory_space<vmem>>, vector<8x192xf32>
    %c8_i32_343 = arith.constant 8 : i32
    %1006 = arith.muli %1001, %c8_i32_343 : i32
    %1007 = tpu.assume_multiple %1006, 8 : i32
    %1008 = arith.index_cast %1007 : i32 to index
    %c0_344 = arith.constant 0 : index
    %1009 = vector.load %arg18[%1008, %c0_344] : memref<64x192xf32, #tpu.memory_space<vmem>>, vector<8x192xf32>
    %1010 = arith.select %18, %1005, %1009 : vector<8x192xi1>, vector<8x192xf32>
    %cst_345 = arith.constant dense<0.000000e+00> : vector<8x192xf32>
    %1011 = tpu.matmul %1000, %811, %cst_345 {dimension_numbers = #tpu.dot_dimension_numbers<[1], [0], [0], [1], [0, 0, 1, 1], [], []>} : vector<8x64xf32>, vector<64x192xf32>, vector<8x192xf32> -> vector<8x192xf32>
    %1012 = vector.extract_strided_slice %1010 {offsets = [0, 0], sizes = [8, 128], strides = [1, 1]} : vector<8x192xf32> to vector<8x128xf32>
    %1013 = vector.extract_strided_slice %1011 {offsets = [0, 0], sizes = [8, 128], strides = [1, 1]} : vector<8x192xf32> to vector<8x128xf32>
    %1014 = arith.addf %1012, %1013 : vector<8x128xf32>
    %1015 = arith.negf %1014 : vector<8x128xf32>
    %1016 = math.exp %1015 : vector<8x128xf32>
    %cst_346 = arith.constant 1.000000e+00 : f32
    %1017 = vector.broadcast %cst_346 : f32 to vector<8x128xf32>
    %1018 = arith.addf %1017, %1016 : vector<8x128xf32>
    %1019 = arith.divf %1017, %1018 : vector<8x128xf32>
    %1020 = vector.extract_strided_slice %1019 {offsets = [0, 0], sizes = [8, 64], strides = [1, 1]} : vector<8x128xf32> to vector<8x64xf32>
    %1021 = vector.extract_strided_slice %1019 {offsets = [0, 64], sizes = [8, 64], strides = [1, 1]} : vector<8x128xf32> to vector<8x64xf32>
    %1022 = vector.extract_strided_slice %1010 {offsets = [0, 128], sizes = [8, 64], strides = [1, 1]} : vector<8x192xf32> to vector<8x64xf32>
    %1023 = vector.extract_strided_slice %1011 {offsets = [0, 128], sizes = [8, 64], strides = [1, 1]} : vector<8x192xf32> to vector<8x64xf32>
    %1024 = arith.addf %1023, %815 : vector<8x64xf32>
    %1025 = arith.mulf %1020, %1024 : vector<8x64xf32>
    %1026 = arith.addf %1022, %1025 : vector<8x64xf32>
    %1027 = math.tanh %1026 : vector<8x64xf32>
    %1028 = arith.subf %1000, %1027 : vector<8x64xf32>
    %1029 = arith.mulf %1021, %1028 : vector<8x64xf32>
    %1030 = arith.addf %1027, %1029 : vector<8x64xf32>
    %c8_i32_347 = arith.constant 8 : i32
    %1031 = arith.muli %c5_i32_339, %c8_i32_347 : i32
    %1032 = tpu.assume_multiple %1031, 8 : i32
    %1033 = arith.index_cast %1032 : i32 to index
    %c0_348 = arith.constant 0 : index
    %1034 = vector.load %arg1[%1033, %c0_348] : memref<64x64xf32, #tpu.memory_space<vmem>>, vector<8x64xf32>
    %cst_349 = arith.constant 0.000000e+00 : f32
    %1035 = vector.broadcast %cst_349 : f32 to vector<8x64xf32>
    %1036 = arith.cmpf ogt, %1034, %1035 : vector<8x64xf32>
    %1037 = arith.select %1036, %1030, %1000 : vector<8x64xi1>, vector<8x64xf32>
    %c6_i32_350 = arith.constant 6 : i32
    %c7_i32_351 = arith.constant 7 : i32
    %1038 = arith.subi %c7_i32_351, %c6_i32_350 : i32
    %c8_i32_352 = arith.constant 8 : i32
    %1039 = arith.muli %c6_i32_350, %c8_i32_352 : i32
    %1040 = tpu.assume_multiple %1039, 8 : i32
    %1041 = arith.index_cast %1040 : i32 to index
    %c0_353 = arith.constant 0 : index
    %1042 = vector.load %arg18[%1041, %c0_353] : memref<64x192xf32, #tpu.memory_space<vmem>>, vector<8x192xf32>
    %c8_i32_354 = arith.constant 8 : i32
    %1043 = arith.muli %1038, %c8_i32_354 : i32
    %1044 = tpu.assume_multiple %1043, 8 : i32
    %1045 = arith.index_cast %1044 : i32 to index
    %c0_355 = arith.constant 0 : index
    %1046 = vector.load %arg18[%1045, %c0_355] : memref<64x192xf32, #tpu.memory_space<vmem>>, vector<8x192xf32>
    %1047 = arith.select %18, %1042, %1046 : vector<8x192xi1>, vector<8x192xf32>
    %cst_356 = arith.constant dense<0.000000e+00> : vector<8x192xf32>
    %1048 = tpu.matmul %1037, %811, %cst_356 {dimension_numbers = #tpu.dot_dimension_numbers<[1], [0], [0], [1], [0, 0, 1, 1], [], []>} : vector<8x64xf32>, vector<64x192xf32>, vector<8x192xf32> -> vector<8x192xf32>
    %1049 = vector.extract_strided_slice %1047 {offsets = [0, 0], sizes = [8, 128], strides = [1, 1]} : vector<8x192xf32> to vector<8x128xf32>
    %1050 = vector.extract_strided_slice %1048 {offsets = [0, 0], sizes = [8, 128], strides = [1, 1]} : vector<8x192xf32> to vector<8x128xf32>
    %1051 = arith.addf %1049, %1050 : vector<8x128xf32>
    %1052 = arith.negf %1051 : vector<8x128xf32>
    %1053 = math.exp %1052 : vector<8x128xf32>
    %cst_357 = arith.constant 1.000000e+00 : f32
    %1054 = vector.broadcast %cst_357 : f32 to vector<8x128xf32>
    %1055 = arith.addf %1054, %1053 : vector<8x128xf32>
    %1056 = arith.divf %1054, %1055 : vector<8x128xf32>
    %1057 = vector.extract_strided_slice %1056 {offsets = [0, 0], sizes = [8, 64], strides = [1, 1]} : vector<8x128xf32> to vector<8x64xf32>
    %1058 = vector.extract_strided_slice %1056 {offsets = [0, 64], sizes = [8, 64], strides = [1, 1]} : vector<8x128xf32> to vector<8x64xf32>
    %1059 = vector.extract_strided_slice %1047 {offsets = [0, 128], sizes = [8, 64], strides = [1, 1]} : vector<8x192xf32> to vector<8x64xf32>
    %1060 = vector.extract_strided_slice %1048 {offsets = [0, 128], sizes = [8, 64], strides = [1, 1]} : vector<8x192xf32> to vector<8x64xf32>
    %1061 = arith.addf %1060, %815 : vector<8x64xf32>
    %1062 = arith.mulf %1057, %1061 : vector<8x64xf32>
    %1063 = arith.addf %1059, %1062 : vector<8x64xf32>
    %1064 = math.tanh %1063 : vector<8x64xf32>
    %1065 = arith.subf %1037, %1064 : vector<8x64xf32>
    %1066 = arith.mulf %1058, %1065 : vector<8x64xf32>
    %1067 = arith.addf %1064, %1066 : vector<8x64xf32>
    %c8_i32_358 = arith.constant 8 : i32
    %1068 = arith.muli %c6_i32_350, %c8_i32_358 : i32
    %1069 = tpu.assume_multiple %1068, 8 : i32
    %1070 = arith.index_cast %1069 : i32 to index
    %c0_359 = arith.constant 0 : index
    %1071 = vector.load %arg1[%1070, %c0_359] : memref<64x64xf32, #tpu.memory_space<vmem>>, vector<8x64xf32>
    %cst_360 = arith.constant 0.000000e+00 : f32
    %1072 = vector.broadcast %cst_360 : f32 to vector<8x64xf32>
    %1073 = arith.cmpf ogt, %1071, %1072 : vector<8x64xf32>
    %1074 = arith.select %1073, %1067, %1037 : vector<8x64xi1>, vector<8x64xf32>
    %c7_i32_361 = arith.constant 7 : i32
    %c7_i32_362 = arith.constant 7 : i32
    %1075 = arith.subi %c7_i32_362, %c7_i32_361 : i32
    %c8_i32_363 = arith.constant 8 : i32
    %1076 = arith.muli %c7_i32_361, %c8_i32_363 : i32
    %1077 = tpu.assume_multiple %1076, 8 : i32
    %1078 = arith.index_cast %1077 : i32 to index
    %c0_364 = arith.constant 0 : index
    %1079 = vector.load %arg18[%1078, %c0_364] : memref<64x192xf32, #tpu.memory_space<vmem>>, vector<8x192xf32>
    %c8_i32_365 = arith.constant 8 : i32
    %1080 = arith.muli %1075, %c8_i32_365 : i32
    %1081 = tpu.assume_multiple %1080, 8 : i32
    %1082 = arith.index_cast %1081 : i32 to index
    %c0_366 = arith.constant 0 : index
    %1083 = vector.load %arg18[%1082, %c0_366] : memref<64x192xf32, #tpu.memory_space<vmem>>, vector<8x192xf32>
    %1084 = arith.select %18, %1079, %1083 : vector<8x192xi1>, vector<8x192xf32>
    %cst_367 = arith.constant dense<0.000000e+00> : vector<8x192xf32>
    %1085 = tpu.matmul %1074, %811, %cst_367 {dimension_numbers = #tpu.dot_dimension_numbers<[1], [0], [0], [1], [0, 0, 1, 1], [], []>} : vector<8x64xf32>, vector<64x192xf32>, vector<8x192xf32> -> vector<8x192xf32>
    %1086 = vector.extract_strided_slice %1084 {offsets = [0, 0], sizes = [8, 128], strides = [1, 1]} : vector<8x192xf32> to vector<8x128xf32>
    %1087 = vector.extract_strided_slice %1085 {offsets = [0, 0], sizes = [8, 128], strides = [1, 1]} : vector<8x192xf32> to vector<8x128xf32>
    %1088 = arith.addf %1086, %1087 : vector<8x128xf32>
    %1089 = arith.negf %1088 : vector<8x128xf32>
    %1090 = math.exp %1089 : vector<8x128xf32>
    %cst_368 = arith.constant 1.000000e+00 : f32
    %1091 = vector.broadcast %cst_368 : f32 to vector<8x128xf32>
    %1092 = arith.addf %1091, %1090 : vector<8x128xf32>
    %1093 = arith.divf %1091, %1092 : vector<8x128xf32>
    %1094 = vector.extract_strided_slice %1093 {offsets = [0, 0], sizes = [8, 64], strides = [1, 1]} : vector<8x128xf32> to vector<8x64xf32>
    %1095 = vector.extract_strided_slice %1093 {offsets = [0, 64], sizes = [8, 64], strides = [1, 1]} : vector<8x128xf32> to vector<8x64xf32>
    %1096 = vector.extract_strided_slice %1084 {offsets = [0, 128], sizes = [8, 64], strides = [1, 1]} : vector<8x192xf32> to vector<8x64xf32>
    %1097 = vector.extract_strided_slice %1085 {offsets = [0, 128], sizes = [8, 64], strides = [1, 1]} : vector<8x192xf32> to vector<8x64xf32>
    %1098 = arith.addf %1097, %815 : vector<8x64xf32>
    %1099 = arith.mulf %1094, %1098 : vector<8x64xf32>
    %1100 = arith.addf %1096, %1099 : vector<8x64xf32>
    %1101 = math.tanh %1100 : vector<8x64xf32>
    %1102 = arith.subf %1074, %1101 : vector<8x64xf32>
    %1103 = arith.mulf %1095, %1102 : vector<8x64xf32>
    %1104 = arith.addf %1101, %1103 : vector<8x64xf32>
    %c8_i32_369 = arith.constant 8 : i32
    %1105 = arith.muli %c7_i32_361, %c8_i32_369 : i32
    %1106 = tpu.assume_multiple %1105, 8 : i32
    %1107 = arith.index_cast %1106 : i32 to index
    %c0_370 = arith.constant 0 : index
    %1108 = vector.load %arg1[%1107, %c0_370] : memref<64x64xf32, #tpu.memory_space<vmem>>, vector<8x64xf32>
    %cst_371 = arith.constant 0.000000e+00 : f32
    %1109 = vector.broadcast %cst_371 : f32 to vector<8x64xf32>
    %1110 = arith.cmpf ogt, %1108, %1109 : vector<8x64xf32>
    %1111 = arith.select %1110, %1104, %1074 : vector<8x64xi1>, vector<8x64xf32>
    %c8_i32_372 = arith.constant 8 : i32
    %c0_373 = arith.constant 0 : index
    %c0_374 = arith.constant 0 : index
    %1112 = vector.load %arg15[%c0_373, %c0_374] : memref<8x64xf32, #tpu.memory_space<vmem>>, vector<8x64xf32>
    tpu.vector_store %arg15[%c0_373, %c0_374], %1111 {strides = array<i32>} : memref<8x64xf32, #tpu.memory_space<vmem>>, vector<8x64xf32>,
    %c0_375 = arith.constant 0 : index
    %c0_376 = arith.constant 0 : index
    %1113 = vector.load %arg13[%c0_375, %c0_376] : memref<64x8xf32, #tpu.memory_space<vmem>>, vector<64x8xf32>
    %cst_377 = arith.constant dense<0.000000e+00> : vector<8x8xf32>
    %1114 = tpu.matmul %1111, %1113, %cst_377 {dimension_numbers = #tpu.dot_dimension_numbers<[1], [0], [0], [1], [0, 0, 1, 1], [], []>} : vector<8x64xf32>, vector<64x8xf32>, vector<8x8xf32> -> vector<8x8xf32>
    %c0_378 = arith.constant 0 : index
    %c0_379 = arith.constant 0 : index
    %1115 = vector.load %arg14[%c0_378, %c0_379] : memref<1x8xf32, #tpu.memory_space<vmem>>, vector<1x8xf32>
    %1116 = vector.broadcast %1115 : vector<1x8xf32> to vector<8x8xf32>
    %1117 = arith.addf %1114, %1116 : vector<8x8xf32>
    %c0_380 = arith.constant 0 : index
    %c0_381 = arith.constant 0 : index
    %1118 = vector.load %arg17[%c0_380, %c0_381] : memref<8x8xf32, #tpu.memory_space<vmem>>, vector<8x8xf32>
    tpu.vector_store %arg17[%c0_380, %c0_381], %1117 {strides = array<i32>} : memref<8x8xf32, #tpu.memory_space<vmem>>, vector<8x8xf32>,
    %c0_382 = arith.constant 0 : index
    %c0_383 = arith.constant 0 : index
    %1119 = vector.load %arg7[%c0_382, %c0_383] : memref<64x192xf32, #tpu.memory_space<vmem>>, vector<64x192xf32>
    %c0_384 = arith.constant 0 : index
    %c0_385 = arith.constant 0 : index
    %1120 = vector.load %arg8[%c0_384, %c0_385] : memref<1x128xf32, #tpu.memory_space<vmem>>, vector<1x128xf32>
    %1121 = vector.shape_cast %1120 : vector<1x128xf32> to vector<1x128xf32>
    %1122 = vector.broadcast %1121 : vector<1x128xf32> to vector<8x128xf32>
    %c0_386 = arith.constant 0 : index
    %c0_387 = arith.constant 0 : index
    %1123 = vector.load %arg9[%c0_386, %c0_387] : memref<1x64xf32, #tpu.memory_space<vmem>>, vector<1x64xf32>
    %1124 = vector.shape_cast %1123 : vector<1x64xf32> to vector<1x64xf32>
    %1125 = vector.broadcast %1124 : vector<1x64xf32> to vector<8x64xf32>
    %c0_388 = arith.constant 0 : index
    %c0_389 = arith.constant 0 : index
    %1126 = vector.load %arg10[%c0_388, %c0_389] : memref<1x64xf32, #tpu.memory_space<vmem>>, vector<1x64xf32>
    %1127 = vector.shape_cast %1126 : vector<1x64xf32> to vector<1x64xf32>
    %1128 = vector.broadcast %1127 : vector<1x64xf32> to vector<8x64xf32>
    %c0_i32_390 = arith.constant 0 : i32
    %cst_391 = arith.constant dense<0.000000e+00> : vector<8x192xf32>
    %1129 = tpu.matmul %1111, %1119, %cst_391 {dimension_numbers = #tpu.dot_dimension_numbers<[1], [0], [0], [1], [0, 0, 1, 1], [], []>} : vector<8x64xf32>, vector<64x192xf32>, vector<8x192xf32> -> vector<8x192xf32>
    %1130 = vector.extract_strided_slice %1129 {offsets = [0, 0], sizes = [8, 128], strides = [1, 1]} : vector<8x192xf32> to vector<8x128xf32>
    %1131 = arith.addf %1130, %1122 : vector<8x128xf32>
    %1132 = arith.negf %1131 : vector<8x128xf32>
    %1133 = math.exp %1132 : vector<8x128xf32>
    %cst_392 = arith.constant 1.000000e+00 : f32
    %1134 = vector.broadcast %cst_392 : f32 to vector<8x128xf32>
    %1135 = arith.addf %1134, %1133 : vector<8x128xf32>
    %1136 = arith.divf %1134, %1135 : vector<8x128xf32>
    %1137 = vector.extract_strided_slice %1136 {offsets = [0, 0], sizes = [8, 64], strides = [1, 1]} : vector<8x128xf32> to vector<8x64xf32>
    %1138 = vector.extract_strided_slice %1136 {offsets = [0, 64], sizes = [8, 64], strides = [1, 1]} : vector<8x128xf32> to vector<8x64xf32>
    %1139 = vector.extract_strided_slice %1129 {offsets = [0, 128], sizes = [8, 64], strides = [1, 1]} : vector<8x192xf32> to vector<8x64xf32>
    %1140 = arith.addf %1139, %1128 : vector<8x64xf32>
    %1141 = arith.mulf %1137, %1140 : vector<8x64xf32>
    %1142 = arith.addf %1125, %1141 : vector<8x64xf32>
    %1143 = math.tanh %1142 : vector<8x64xf32>
    %1144 = arith.subf %1111, %1143 : vector<8x64xf32>
    %1145 = arith.mulf %1138, %1144 : vector<8x64xf32>
    %1146 = arith.addf %1143, %1145 : vector<8x64xf32>
    %c8_i32_393 = arith.constant 8 : i32
    %1147 = arith.muli %c0_i32_390, %c8_i32_393 : i32
    %1148 = tpu.assume_multiple %1147, 8 : i32
    %1149 = arith.index_cast %1148 : i32 to index
    %c0_394 = arith.constant 0 : index
    %1150 = vector.load %arg20[%1149, %c0_394] : memref<64x64xf32, #tpu.memory_space<vmem>>, vector<8x64xf32>
    tpu.vector_store %arg20[%1149, %c0_394], %1146 {strides = array<i32>} : memref<64x64xf32, #tpu.memory_space<vmem>>, vector<8x64xf32>,
    %c1_i32_395 = arith.constant 1 : i32
    %cst_396 = arith.constant dense<0.000000e+00> : vector<8x192xf32>
    %1151 = tpu.matmul %1146, %1119, %cst_396 {dimension_numbers = #tpu.dot_dimension_numbers<[1], [0], [0], [1], [0, 0, 1, 1], [], []>} : vector<8x64xf32>, vector<64x192xf32>, vector<8x192xf32> -> vector<8x192xf32>
    %1152 = vector.extract_strided_slice %1151 {offsets = [0, 0], sizes = [8, 128], strides = [1, 1]} : vector<8x192xf32> to vector<8x128xf32>
    %1153 = arith.addf %1152, %1122 : vector<8x128xf32>
    %1154 = arith.negf %1153 : vector<8x128xf32>
    %1155 = math.exp %1154 : vector<8x128xf32>
    %cst_397 = arith.constant 1.000000e+00 : f32
    %1156 = vector.broadcast %cst_397 : f32 to vector<8x128xf32>
    %1157 = arith.addf %1156, %1155 : vector<8x128xf32>
    %1158 = arith.divf %1156, %1157 : vector<8x128xf32>
    %1159 = vector.extract_strided_slice %1158 {offsets = [0, 0], sizes = [8, 64], strides = [1, 1]} : vector<8x128xf32> to vector<8x64xf32>
    %1160 = vector.extract_strided_slice %1158 {offsets = [0, 64], sizes = [8, 64], strides = [1, 1]} : vector<8x128xf32> to vector<8x64xf32>
    %1161 = vector.extract_strided_slice %1151 {offsets = [0, 128], sizes = [8, 64], strides = [1, 1]} : vector<8x192xf32> to vector<8x64xf32>
    %1162 = arith.addf %1161, %1128 : vector<8x64xf32>
    %1163 = arith.mulf %1159, %1162 : vector<8x64xf32>
    %1164 = arith.addf %1125, %1163 : vector<8x64xf32>
    %1165 = math.tanh %1164 : vector<8x64xf32>
    %1166 = arith.subf %1146, %1165 : vector<8x64xf32>
    %1167 = arith.mulf %1160, %1166 : vector<8x64xf32>
    %1168 = arith.addf %1165, %1167 : vector<8x64xf32>
    %c8_i32_398 = arith.constant 8 : i32
    %1169 = arith.muli %c1_i32_395, %c8_i32_398 : i32
    %1170 = tpu.assume_multiple %1169, 8 : i32
    %1171 = arith.index_cast %1170 : i32 to index
    %c0_399 = arith.constant 0 : index
    %1172 = vector.load %arg20[%1171, %c0_399] : memref<64x64xf32, #tpu.memory_space<vmem>>, vector<8x64xf32>
    tpu.vector_store %arg20[%1171, %c0_399], %1168 {strides = array<i32>} : memref<64x64xf32, #tpu.memory_space<vmem>>, vector<8x64xf32>,
    %c2_i32_400 = arith.constant 2 : i32
    %cst_401 = arith.constant dense<0.000000e+00> : vector<8x192xf32>
    %1173 = tpu.matmul %1168, %1119, %cst_401 {dimension_numbers = #tpu.dot_dimension_numbers<[1], [0], [0], [1], [0, 0, 1, 1], [], []>} : vector<8x64xf32>, vector<64x192xf32>, vector<8x192xf32> -> vector<8x192xf32>
    %1174 = vector.extract_strided_slice %1173 {offsets = [0, 0], sizes = [8, 128], strides = [1, 1]} : vector<8x192xf32> to vector<8x128xf32>
    %1175 = arith.addf %1174, %1122 : vector<8x128xf32>
    %1176 = arith.negf %1175 : vector<8x128xf32>
    %1177 = math.exp %1176 : vector<8x128xf32>
    %cst_402 = arith.constant 1.000000e+00 : f32
    %1178 = vector.broadcast %cst_402 : f32 to vector<8x128xf32>
    %1179 = arith.addf %1178, %1177 : vector<8x128xf32>
    %1180 = arith.divf %1178, %1179 : vector<8x128xf32>
    %1181 = vector.extract_strided_slice %1180 {offsets = [0, 0], sizes = [8, 64], strides = [1, 1]} : vector<8x128xf32> to vector<8x64xf32>
    %1182 = vector.extract_strided_slice %1180 {offsets = [0, 64], sizes = [8, 64], strides = [1, 1]} : vector<8x128xf32> to vector<8x64xf32>
    %1183 = vector.extract_strided_slice %1173 {offsets = [0, 128], sizes = [8, 64], strides = [1, 1]} : vector<8x192xf32> to vector<8x64xf32>
    %1184 = arith.addf %1183, %1128 : vector<8x64xf32>
    %1185 = arith.mulf %1181, %1184 : vector<8x64xf32>
    %1186 = arith.addf %1125, %1185 : vector<8x64xf32>
    %1187 = math.tanh %1186 : vector<8x64xf32>
    %1188 = arith.subf %1168, %1187 : vector<8x64xf32>
    %1189 = arith.mulf %1182, %1188 : vector<8x64xf32>
    %1190 = arith.addf %1187, %1189 : vector<8x64xf32>
    %c8_i32_403 = arith.constant 8 : i32
    %1191 = arith.muli %c2_i32_400, %c8_i32_403 : i32
    %1192 = tpu.assume_multiple %1191, 8 : i32
    %1193 = arith.index_cast %1192 : i32 to index
    %c0_404 = arith.constant 0 : index
    %1194 = vector.load %arg20[%1193, %c0_404] : memref<64x64xf32, #tpu.memory_space<vmem>>, vector<8x64xf32>
    tpu.vector_store %arg20[%1193, %c0_404], %1190 {strides = array<i32>} : memref<64x64xf32, #tpu.memory_space<vmem>>, vector<8x64xf32>,
    %c3_i32_405 = arith.constant 3 : i32
    %cst_406 = arith.constant dense<0.000000e+00> : vector<8x192xf32>
    %1195 = tpu.matmul %1190, %1119, %cst_406 {dimension_numbers = #tpu.dot_dimension_numbers<[1], [0], [0], [1], [0, 0, 1, 1], [], []>} : vector<8x64xf32>, vector<64x192xf32>, vector<8x192xf32> -> vector<8x192xf32>
    %1196 = vector.extract_strided_slice %1195 {offsets = [0, 0], sizes = [8, 128], strides = [1, 1]} : vector<8x192xf32> to vector<8x128xf32>
    %1197 = arith.addf %1196, %1122 : vector<8x128xf32>
    %1198 = arith.negf %1197 : vector<8x128xf32>
    %1199 = math.exp %1198 : vector<8x128xf32>
    %cst_407 = arith.constant 1.000000e+00 : f32
    %1200 = vector.broadcast %cst_407 : f32 to vector<8x128xf32>
    %1201 = arith.addf %1200, %1199 : vector<8x128xf32>
    %1202 = arith.divf %1200, %1201 : vector<8x128xf32>
    %1203 = vector.extract_strided_slice %1202 {offsets = [0, 0], sizes = [8, 64], strides = [1, 1]} : vector<8x128xf32> to vector<8x64xf32>
    %1204 = vector.extract_strided_slice %1202 {offsets = [0, 64], sizes = [8, 64], strides = [1, 1]} : vector<8x128xf32> to vector<8x64xf32>
    %1205 = vector.extract_strided_slice %1195 {offsets = [0, 128], sizes = [8, 64], strides = [1, 1]} : vector<8x192xf32> to vector<8x64xf32>
    %1206 = arith.addf %1205, %1128 : vector<8x64xf32>
    %1207 = arith.mulf %1203, %1206 : vector<8x64xf32>
    %1208 = arith.addf %1125, %1207 : vector<8x64xf32>
    %1209 = math.tanh %1208 : vector<8x64xf32>
    %1210 = arith.subf %1190, %1209 : vector<8x64xf32>
    %1211 = arith.mulf %1204, %1210 : vector<8x64xf32>
    %1212 = arith.addf %1209, %1211 : vector<8x64xf32>
    %c8_i32_408 = arith.constant 8 : i32
    %1213 = arith.muli %c3_i32_405, %c8_i32_408 : i32
    %1214 = tpu.assume_multiple %1213, 8 : i32
    %1215 = arith.index_cast %1214 : i32 to index
    %c0_409 = arith.constant 0 : index
    %1216 = vector.load %arg20[%1215, %c0_409] : memref<64x64xf32, #tpu.memory_space<vmem>>, vector<8x64xf32>
    tpu.vector_store %arg20[%1215, %c0_409], %1212 {strides = array<i32>} : memref<64x64xf32, #tpu.memory_space<vmem>>, vector<8x64xf32>,
    %c4_i32_410 = arith.constant 4 : i32
    %cst_411 = arith.constant dense<0.000000e+00> : vector<8x192xf32>
    %1217 = tpu.matmul %1212, %1119, %cst_411 {dimension_numbers = #tpu.dot_dimension_numbers<[1], [0], [0], [1], [0, 0, 1, 1], [], []>} : vector<8x64xf32>, vector<64x192xf32>, vector<8x192xf32> -> vector<8x192xf32>
    %1218 = vector.extract_strided_slice %1217 {offsets = [0, 0], sizes = [8, 128], strides = [1, 1]} : vector<8x192xf32> to vector<8x128xf32>
    %1219 = arith.addf %1218, %1122 : vector<8x128xf32>
    %1220 = arith.negf %1219 : vector<8x128xf32>
    %1221 = math.exp %1220 : vector<8x128xf32>
    %cst_412 = arith.constant 1.000000e+00 : f32
    %1222 = vector.broadcast %cst_412 : f32 to vector<8x128xf32>
    %1223 = arith.addf %1222, %1221 : vector<8x128xf32>
    %1224 = arith.divf %1222, %1223 : vector<8x128xf32>
    %1225 = vector.extract_strided_slice %1224 {offsets = [0, 0], sizes = [8, 64], strides = [1, 1]} : vector<8x128xf32> to vector<8x64xf32>
    %1226 = vector.extract_strided_slice %1224 {offsets = [0, 64], sizes = [8, 64], strides = [1, 1]} : vector<8x128xf32> to vector<8x64xf32>
    %1227 = vector.extract_strided_slice %1217 {offsets = [0, 128], sizes = [8, 64], strides = [1, 1]} : vector<8x192xf32> to vector<8x64xf32>
    %1228 = arith.addf %1227, %1128 : vector<8x64xf32>
    %1229 = arith.mulf %1225, %1228 : vector<8x64xf32>
    %1230 = arith.addf %1125, %1229 : vector<8x64xf32>
    %1231 = math.tanh %1230 : vector<8x64xf32>
    %1232 = arith.subf %1212, %1231 : vector<8x64xf32>
    %1233 = arith.mulf %1226, %1232 : vector<8x64xf32>
    %1234 = arith.addf %1231, %1233 : vector<8x64xf32>
    %c8_i32_413 = arith.constant 8 : i32
    %1235 = arith.muli %c4_i32_410, %c8_i32_413 : i32
    %1236 = tpu.assume_multiple %1235, 8 : i32
    %1237 = arith.index_cast %1236 : i32 to index
    %c0_414 = arith.constant 0 : index
    %1238 = vector.load %arg20[%1237, %c0_414] : memref<64x64xf32, #tpu.memory_space<vmem>>, vector<8x64xf32>
    tpu.vector_store %arg20[%1237, %c0_414], %1234 {strides = array<i32>} : memref<64x64xf32, #tpu.memory_space<vmem>>, vector<8x64xf32>,
    %c5_i32_415 = arith.constant 5 : i32
    %cst_416 = arith.constant dense<0.000000e+00> : vector<8x192xf32>
    %1239 = tpu.matmul %1234, %1119, %cst_416 {dimension_numbers = #tpu.dot_dimension_numbers<[1], [0], [0], [1], [0, 0, 1, 1], [], []>} : vector<8x64xf32>, vector<64x192xf32>, vector<8x192xf32> -> vector<8x192xf32>
    %1240 = vector.extract_strided_slice %1239 {offsets = [0, 0], sizes = [8, 128], strides = [1, 1]} : vector<8x192xf32> to vector<8x128xf32>
    %1241 = arith.addf %1240, %1122 : vector<8x128xf32>
    %1242 = arith.negf %1241 : vector<8x128xf32>
    %1243 = math.exp %1242 : vector<8x128xf32>
    %cst_417 = arith.constant 1.000000e+00 : f32
    %1244 = vector.broadcast %cst_417 : f32 to vector<8x128xf32>
    %1245 = arith.addf %1244, %1243 : vector<8x128xf32>
    %1246 = arith.divf %1244, %1245 : vector<8x128xf32>
    %1247 = vector.extract_strided_slice %1246 {offsets = [0, 0], sizes = [8, 64], strides = [1, 1]} : vector<8x128xf32> to vector<8x64xf32>
    %1248 = vector.extract_strided_slice %1246 {offsets = [0, 64], sizes = [8, 64], strides = [1, 1]} : vector<8x128xf32> to vector<8x64xf32>
    %1249 = vector.extract_strided_slice %1239 {offsets = [0, 128], sizes = [8, 64], strides = [1, 1]} : vector<8x192xf32> to vector<8x64xf32>
    %1250 = arith.addf %1249, %1128 : vector<8x64xf32>
    %1251 = arith.mulf %1247, %1250 : vector<8x64xf32>
    %1252 = arith.addf %1125, %1251 : vector<8x64xf32>
    %1253 = math.tanh %1252 : vector<8x64xf32>
    %1254 = arith.subf %1234, %1253 : vector<8x64xf32>
    %1255 = arith.mulf %1248, %1254 : vector<8x64xf32>
    %1256 = arith.addf %1253, %1255 : vector<8x64xf32>
    %c8_i32_418 = arith.constant 8 : i32
    %1257 = arith.muli %c5_i32_415, %c8_i32_418 : i32
    %1258 = tpu.assume_multiple %1257, 8 : i32
    %1259 = arith.index_cast %1258 : i32 to index
    %c0_419 = arith.constant 0 : index
    %1260 = vector.load %arg20[%1259, %c0_419] : memref<64x64xf32, #tpu.memory_space<vmem>>, vector<8x64xf32>
    tpu.vector_store %arg20[%1259, %c0_419], %1256 {strides = array<i32>} : memref<64x64xf32, #tpu.memory_space<vmem>>, vector<8x64xf32>,
    %c6_i32_420 = arith.constant 6 : i32
    %cst_421 = arith.constant dense<0.000000e+00> : vector<8x192xf32>
    %1261 = tpu.matmul %1256, %1119, %cst_421 {dimension_numbers = #tpu.dot_dimension_numbers<[1], [0], [0], [1], [0, 0, 1, 1], [], []>} : vector<8x64xf32>, vector<64x192xf32>, vector<8x192xf32> -> vector<8x192xf32>
    %1262 = vector.extract_strided_slice %1261 {offsets = [0, 0], sizes = [8, 128], strides = [1, 1]} : vector<8x192xf32> to vector<8x128xf32>
    %1263 = arith.addf %1262, %1122 : vector<8x128xf32>
    %1264 = arith.negf %1263 : vector<8x128xf32>
    %1265 = math.exp %1264 : vector<8x128xf32>
    %cst_422 = arith.constant 1.000000e+00 : f32
    %1266 = vector.broadcast %cst_422 : f32 to vector<8x128xf32>
    %1267 = arith.addf %1266, %1265 : vector<8x128xf32>
    %1268 = arith.divf %1266, %1267 : vector<8x128xf32>
    %1269 = vector.extract_strided_slice %1268 {offsets = [0, 0], sizes = [8, 64], strides = [1, 1]} : vector<8x128xf32> to vector<8x64xf32>
    %1270 = vector.extract_strided_slice %1268 {offsets = [0, 64], sizes = [8, 64], strides = [1, 1]} : vector<8x128xf32> to vector<8x64xf32>
    %1271 = vector.extract_strided_slice %1261 {offsets = [0, 128], sizes = [8, 64], strides = [1, 1]} : vector<8x192xf32> to vector<8x64xf32>
    %1272 = arith.addf %1271, %1128 : vector<8x64xf32>
    %1273 = arith.mulf %1269, %1272 : vector<8x64xf32>
    %1274 = arith.addf %1125, %1273 : vector<8x64xf32>
    %1275 = math.tanh %1274 : vector<8x64xf32>
    %1276 = arith.subf %1256, %1275 : vector<8x64xf32>
    %1277 = arith.mulf %1270, %1276 : vector<8x64xf32>
    %1278 = arith.addf %1275, %1277 : vector<8x64xf32>
    %c8_i32_423 = arith.constant 8 : i32
    %1279 = arith.muli %c6_i32_420, %c8_i32_423 : i32
    %1280 = tpu.assume_multiple %1279, 8 : i32
    %1281 = arith.index_cast %1280 : i32 to index
    %c0_424 = arith.constant 0 : index
    %1282 = vector.load %arg20[%1281, %c0_424] : memref<64x64xf32, #tpu.memory_space<vmem>>, vector<8x64xf32>
    tpu.vector_store %arg20[%1281, %c0_424], %1278 {strides = array<i32>} : memref<64x64xf32, #tpu.memory_space<vmem>>, vector<8x64xf32>,
    %c7_i32_425 = arith.constant 7 : i32
    %cst_426 = arith.constant dense<0.000000e+00> : vector<8x192xf32>
    %1283 = tpu.matmul %1278, %1119, %cst_426 {dimension_numbers = #tpu.dot_dimension_numbers<[1], [0], [0], [1], [0, 0, 1, 1], [], []>} : vector<8x64xf32>, vector<64x192xf32>, vector<8x192xf32> -> vector<8x192xf32>
    %1284 = vector.extract_strided_slice %1283 {offsets = [0, 0], sizes = [8, 128], strides = [1, 1]} : vector<8x192xf32> to vector<8x128xf32>
    %1285 = arith.addf %1284, %1122 : vector<8x128xf32>
    %1286 = arith.negf %1285 : vector<8x128xf32>
    %1287 = math.exp %1286 : vector<8x128xf32>
    %cst_427 = arith.constant 1.000000e+00 : f32
    %1288 = vector.broadcast %cst_427 : f32 to vector<8x128xf32>
    %1289 = arith.addf %1288, %1287 : vector<8x128xf32>
    %1290 = arith.divf %1288, %1289 : vector<8x128xf32>
    %1291 = vector.extract_strided_slice %1290 {offsets = [0, 0], sizes = [8, 64], strides = [1, 1]} : vector<8x128xf32> to vector<8x64xf32>
    %1292 = vector.extract_strided_slice %1290 {offsets = [0, 64], sizes = [8, 64], strides = [1, 1]} : vector<8x128xf32> to vector<8x64xf32>
    %1293 = vector.extract_strided_slice %1283 {offsets = [0, 128], sizes = [8, 64], strides = [1, 1]} : vector<8x192xf32> to vector<8x64xf32>
    %1294 = arith.addf %1293, %1128 : vector<8x64xf32>
    %1295 = arith.mulf %1291, %1294 : vector<8x64xf32>
    %1296 = arith.addf %1125, %1295 : vector<8x64xf32>
    %1297 = math.tanh %1296 : vector<8x64xf32>
    %1298 = arith.subf %1278, %1297 : vector<8x64xf32>
    %1299 = arith.mulf %1292, %1298 : vector<8x64xf32>
    %1300 = arith.addf %1297, %1299 : vector<8x64xf32>
    %c8_i32_428 = arith.constant 8 : i32
    %1301 = arith.muli %c7_i32_425, %c8_i32_428 : i32
    %1302 = tpu.assume_multiple %1301, 8 : i32
    %1303 = arith.index_cast %1302 : i32 to index
    %c0_429 = arith.constant 0 : index
    %1304 = vector.load %arg20[%1303, %c0_429] : memref<64x64xf32, #tpu.memory_space<vmem>>, vector<8x64xf32>
    tpu.vector_store %arg20[%1303, %c0_429], %1300 {strides = array<i32>} : memref<64x64xf32, #tpu.memory_space<vmem>>, vector<8x64xf32>,
    %c8_i32_430 = arith.constant 8 : i32
    %c0_431 = arith.constant 0 : index
    %c0_432 = arith.constant 0 : index
    %1305 = vector.load %arg20[%c0_431, %c0_432] : memref<64x64xf32, #tpu.memory_space<vmem>>, vector<64x64xf32>
    %c0_433 = arith.constant 0 : index
    %c0_434 = arith.constant 0 : index
    %1306 = vector.load %arg11[%c0_433, %c0_434] : memref<64x16xf32, #tpu.memory_space<vmem>>, vector<64x16xf32>
    %cst_435 = arith.constant dense<0.000000e+00> : vector<64x16xf32>
    %1307 = tpu.matmul %1305, %1306, %cst_435 {dimension_numbers = #tpu.dot_dimension_numbers<[1], [0], [0], [1], [0, 0, 1, 1], [], []>} : vector<64x64xf32>, vector<64x16xf32>, vector<64x16xf32> -> vector<64x16xf32>
    %c0_436 = arith.constant 0 : index
    %c0_437 = arith.constant 0 : index
    %1308 = vector.load %arg12[%c0_436, %c0_437] : memref<1x16xf32, #tpu.memory_space<vmem>>, vector<1x16xf32>
    %1309 = vector.broadcast %1308 : vector<1x16xf32> to vector<64x16xf32>
    %1310 = arith.addf %1307, %1309 : vector<64x16xf32>
    %c0_438 = arith.constant 0 : index
    %c0_439 = arith.constant 0 : index
    %1311 = vector.load %arg16[%c0_438, %c0_439] : memref<64x16xf32, #tpu.memory_space<vmem>>, vector<64x16xf32>
    tpu.vector_store %arg16[%c0_438, %c0_439], %1310 {strides = array<i32>} : memref<64x16xf32, #tpu.memory_space<vmem>>, vector<64x16xf32>,
    return
  }
}

</mosaic_0001>

<llo_original>
// kernel: tpu_custom_call.1
$region0: #{tpu_custom_call.1}
  #allocation0 [shape = 'u32[]', space=smem, size = 0x4, offset = 0x4, fixed_abs, tag = 'smem constant byte address 0x4 - core index']
  #allocation1 [shape = 'u32[72,128]{1,0:T(1,128)}', space=vmem, size = 0x9000, scoped, tag = 'internal scratch']
  #allocation2 [shape = 'f32[64,192]{1,0:T(8,128)}', space=vmem, size = 0x10000, scoped, tag = 'scratch operand']
  #allocation3 [shape = 'f32[64,64]{1,0:T(8,128)}', space=vmem, size = 0x8000, scoped, tag = 'scratch operand']
  #allocation4 [shape = 'f32[64,64]{1,0:T(8,128)}', space=vmem, size = 0x8000, scoped, tag = 'scratch operand']
  %s0 = inlined_call_operand.vmem [shape: f32[64,16], index: 0, kind: input, shape index: {}]
  %s1 = inlined_call_operand.vmem [shape: f32[64,64], index: 1, kind: input, shape index: {}]
  %s2 = inlined_call_operand.hbm [shape: f32[16,192], index: 2, kind: input, shape index: {}]
  %s3 = inlined_call_operand.hbm [shape: f32[2,64,192], index: 3, kind: input, shape index: {}]
  %s4 = inlined_call_operand.hbm [shape: f32[3,64,192], index: 4, kind: input, shape index: {}]
  %s5 = inlined_call_operand.vmem [shape: f32[3,1,192], index: 5, kind: input, shape index: {}]
  %s6 = inlined_call_operand.vmem [shape: f32[3,1,64], index: 6, kind: input, shape index: {}]
  %s7 = inlined_call_operand.vmem [shape: f32[64,192], index: 7, kind: input, shape index: {}]
  %s8 = inlined_call_operand.vmem [shape: f32[1,128], index: 8, kind: input, shape index: {}]
  %s9 = inlined_call_operand.vmem [shape: f32[1,64], index: 9, kind: input, shape index: {}]
  %s10 = inlined_call_operand.vmem [shape: f32[1,64], index: 10, kind: input, shape index: {}]
  %s11 = inlined_call_operand.vmem [shape: f32[64,16], index: 11, kind: input, shape index: {}]
  %s12 = inlined_call_operand.vmem [shape: f32[1,16], index: 12, kind: input, shape index: {}]
  %s13 = inlined_call_operand.vmem [shape: f32[64,8], index: 13, kind: input, shape index: {}]
  %s14 = inlined_call_operand.vmem [shape: f32[1,8], index: 14, kind: input, shape index: {}]
  %s15 = inlined_call_operand.hbm [shape: f32[8,64], index: 15, kind: output, shape index: {0}]
  %s16 = inlined_call_operand.vmem [shape: f32[64,16], index: 16, kind: output, shape index: {1}]
  %s17 = inlined_call_operand.hbm [shape: f32[8,8], index: 17, kind: output, shape index: {2}]
  %18 = xla_tuple %s15, %s16, %s17
  %s19 = sld [smem:[#allocation0]]
  $region98: #{tpu_custom_call.1} parent=0
    _
  %s21 = ssub.s32 1, %s19
  %s22 = scalar_select 0, %s21, %s19
  $region1: #{tpu_custom_call.1} parent=0
    #allocation5 [shape = 'u8[16384]{0}', space=vmem, size = 0x4000, scoped, tag = 'input window, operand 2, single buffered']
    #allocation6 [shape = 's32[1]{0}', space=sflag, size = 0x4, scoped, tag = 'scoped memory for tpu_custom_call.1']
    #allocation7 [shape = 's32[1]{0}', space=sflag, size = 0x4, scoped, tag = 'scoped memory for tpu_custom_call.1']
    #allocation8 [shape = 'u8[131072]{0}', space=vmem, size = 0x20000, scoped, tag = 'input window, operand 3, single buffered']
    #allocation9 [shape = 's32[1]{0}', space=sflag, size = 0x4, scoped, tag = 'scoped memory for tpu_custom_call.1']
    #allocation10 [shape = 'u8[196608]{0}', space=vmem, size = 0x30000, scoped, tag = 'input window, operand 4, single buffered']
    #allocation11 [shape = 'u8[4096]{0}', space=vmem, size = 0x1000, scoped, tag = 'output window, operand 0, single buffered']
    #allocation12 [shape = 'u8[4096]{0}', space=vmem, size = 0x1000, scoped, tag = 'output window, operand 2, single buffered']
    #allocation13 [shape = 's32[1]{0}', space=sflag, size = 0x4, scoped, tag = 'scoped memory for tpu_custom_call.1']
    %23 = vsyncpa [#allocation6], 0
    %24 = vsyncpa [#allocation9], 0
    %25 = vsyncpa [#allocation7], 0
    %26 = vsyncpa [#allocation13], 0
    // Predicated region
    $region2: #{tpu_custom_call.1} parent=1 // pred_check
      _
    $region3: #{tpu_custom_call.1} parent=1 // pred_check_branch
      %28 = sbr.rel (0) target = $region5
    $region4: #{tpu_custom_call.1} parent=1 // pred_region
      _
    $region5: #{tpu_custom_call.1} parent=1 // pred_fallthru
      _
    // Predicated region
    $region6: #{tpu_custom_call.1} parent=1 // pred_check
      _
    $region7: #{tpu_custom_call.1} parent=1 // pred_check_branch
      %30 = sbr.rel (0) target = $region9
    $region8: #{tpu_custom_call.1} parent=1 // pred_region
      _
    $region9: #{tpu_custom_call.1} parent=1 // pred_fallthru
      _
    // Predicated region
    $region10: #{tpu_custom_call.1} parent=1 // pred_check
      _
    $region11: #{tpu_custom_call.1} parent=1 // pred_check_branch
      %32 = sbr.rel (0) target = $region13
    $region12: #{tpu_custom_call.1} parent=1 // pred_region
      %34 = vsyncadd [#allocation6], 0
      %s35 = sshll.u32 %s2, 4
      %s36 = int_to_ptr.hbm [resolvable:$true] %s35
      %s37 = sshll.u32 [#allocation5], 4
      %s38 = int_to_ptr.vmem [resolvable:$true] %s37
      %43 = dma.hbm_to_vmem [thread:$0]  %s36, 512, %s38, [#allocation6], 256, 256, 16
    $region13: #{tpu_custom_call.1} parent=1 // pred_fallthru
      _
    // Predicated region
    $region14: #{tpu_custom_call.1} parent=1 // pred_check
      _
    $region15: #{tpu_custom_call.1} parent=1 // pred_check_branch
      %45 = sbr.rel (0) target = $region17
    $region16: #{tpu_custom_call.1} parent=1 // pred_region
      %47 = vsyncadd [#allocation9], 0
      %s48 = sshll.u32 %s3, 4
      %s49 = int_to_ptr.hbm [resolvable:$true] %s48
      %s50 = sshll.u32 [#allocation8], 4
      %s51 = int_to_ptr.vmem [resolvable:$true] %s50
      %56 = dma.hbm_to_vmem [thread:$0]  %s49, 4096, %s51, [#allocation9], 256, 256, 16
    $region17: #{tpu_custom_call.1} parent=1 // pred_fallthru
      _
    // Predicated region
    $region18: #{tpu_custom_call.1} parent=1 // pred_check
      _
    $region19: #{tpu_custom_call.1} parent=1 // pred_check_branch
      %58 = sbr.rel (0) target = $region21
    $region20: #{tpu_custom_call.1} parent=1 // pred_region
      %60 = vsyncadd [#allocation9], 0
      %s61 = sshll.u32 %s4, 4
      %s62 = int_to_ptr.hbm [resolvable:$true] %s61
      %s63 = sshll.u32 [#allocation10], 4
      %s64 = int_to_ptr.vmem [resolvable:$true] %s63
      %69 = dma.hbm_to_vmem [thread:$0]  %s62, 6144, %s64, [#allocation9], 256, 256, 16
    $region21: #{tpu_custom_call.1} parent=1 // pred_fallthru
      _
    // Predicated region
    $region22: #{tpu_custom_call.1} parent=1 // pred_check
      _
    $region23: #{tpu_custom_call.1} parent=1 // pred_check_branch
      %71 = sbr.rel (0) target = $region25
    $region24: #{tpu_custom_call.1} parent=1 // pred_region
      _
    $region25: #{tpu_custom_call.1} parent=1 // pred_fallthru
      _
    // Predicated region
    $region26: #{tpu_custom_call.1} parent=1 // pred_check
      _
    $region27: #{tpu_custom_call.1} parent=1 // pred_check_branch
      %73 = sbr.rel (0) target = $region29
    $region28: #{tpu_custom_call.1} parent=1 // pred_region
      _
    $region29: #{tpu_custom_call.1} parent=1 // pred_fallthru
      _
    // Predicated region
    $region30: #{tpu_custom_call.1} parent=1 // pred_check
      _
    $region31: #{tpu_custom_call.1} parent=1 // pred_check_branch
      %75 = sbr.rel (0) target = $region33
    $region32: #{tpu_custom_call.1} parent=1 // pred_region
      _
    $region33: #{tpu_custom_call.1} parent=1 // pred_fallthru
      _
    // Predicated region
    $region34: #{tpu_custom_call.1} parent=1 // pred_check
      _
    $region35: #{tpu_custom_call.1} parent=1 // pred_check_branch
      %77 = sbr.rel (0) target = $region37
    $region36: #{tpu_custom_call.1} parent=1 // pred_region
      _
    $region37: #{tpu_custom_call.1} parent=1 // pred_fallthru
      _
    // Predicated region
    $region38: #{tpu_custom_call.1} parent=1 // pred_check
      _
    $region39: #{tpu_custom_call.1} parent=1 // pred_check_branch
      %79 = sbr.rel (0) target = $region41
    $region40: #{tpu_custom_call.1} parent=1 // pred_region
      _
    $region41: #{tpu_custom_call.1} parent=1 // pred_fallthru
      _
    // Predicated region
    $region42: #{tpu_custom_call.1} parent=1 // pred_check
      _
    $region43: #{tpu_custom_call.1} parent=1 // pred_check_branch
      %81 = sbr.rel (0) target = $region45
    $region44: #{tpu_custom_call.1} parent=1 // pred_region
      _
    $region45: #{tpu_custom_call.1} parent=1 // pred_fallthru
      _
    // Predicated region
    $region46: #{tpu_custom_call.1} parent=1 // pred_check
      _
    $region47: #{tpu_custom_call.1} parent=1 // pred_check_branch
      %83 = sbr.rel (0) target = $region49
    $region48: #{tpu_custom_call.1} parent=1 // pred_region
      _
    $region49: #{tpu_custom_call.1} parent=1 // pred_fallthru
      _
    // Predicated region
    $region50: #{tpu_custom_call.1} parent=1 // pred_check
      _
    $region51: #{tpu_custom_call.1} parent=1 // pred_check_branch
      %85 = sbr.rel (0) target = $region53
    $region52: #{tpu_custom_call.1} parent=1 // pred_region
      _
    $region53: #{tpu_custom_call.1} parent=1 // pred_fallthru
      _
    // Predicated region
    $region54: #{tpu_custom_call.1} parent=1 // pred_check
      _
    $region55: #{tpu_custom_call.1} parent=1 // pred_check_branch
      %87 = sbr.rel (0) target = $region57
    $region56: #{tpu_custom_call.1} parent=1 // pred_region
      _
    $region57: #{tpu_custom_call.1} parent=1 // pred_fallthru
      _
    // Predicated region
    $region58: #{tpu_custom_call.1} parent=1 // pred_check
      _
    $region59: #{tpu_custom_call.1} parent=1 // pred_check_branch
      %89 = sbr.rel (0) target = $region61
    $region60: #{tpu_custom_call.1} parent=1 // pred_region
      _
    $region61: #{tpu_custom_call.1} parent=1 // pred_fallthru
      _
    // Predicated region
    $region62: #{tpu_custom_call.1} parent=1 // pred_check
      _
    $region63: #{tpu_custom_call.1} parent=1 // pred_check_branch
      %91 = sbr.rel (0) target = $region65
    $region64: #{tpu_custom_call.1} parent=1 // pred_region
      %93 = dma.done [#allocation6], 512
    $region65: #{tpu_custom_call.1} parent=1 // pred_fallthru
      _
    // Predicated region
    $region66: #{tpu_custom_call.1} parent=1 // pred_check
      _
    $region67: #{tpu_custom_call.1} parent=1 // pred_check_branch
      %95 = sbr.rel (0) target = $region69
    $region68: #{tpu_custom_call.1} parent=1 // pred_region
      %97 = dma.done [#allocation9], 4096
    $region69: #{tpu_custom_call.1} parent=1 // pred_fallthru
      _
    // Predicated region
    $region70: #{tpu_custom_call.1} parent=1 // pred_check
      _
    $region71: #{tpu_custom_call.1} parent=1 // pred_check_branch
      %99 = sbr.rel (0) target = $region73
    $region72: #{tpu_custom_call.1} parent=1 // pred_region
      %101 = dma.done [#allocation9], 6144
    $region73: #{tpu_custom_call.1} parent=1 // pred_fallthru
      _
    %v102 = vlaneseq
    %v103 = vand.u32 %v102, 127
    %v104 = vadd.s32 %v103, 128
    %vm105 = vcmp.lt.s32.totalorder %v103, 0
    %v106 = vsub.s32 0, %v103
    %v107 = vsel %vm105, %v106, %v103
    %v108 = vshrl.u32 %v107, 6
    %v109 = vand.u32 %v107, 63
    %v110 = vsub.s32 0, %v109
    %v111 = vsel %vm105, %v110, %v109
    %vm112 = vcmp.lt.s32.totalorder %v104, 0
    %v113 = vsub.s32 0, %v104
    %v114 = vsel %vm112, %v113, %v104
    %v115 = vshrl.u32 %v114, 6
    %v116 = vand.u32 %v114, 63
    %v117 = vsub.s32 0, %v116
    %v118 = vsel %vm112, %v117, %v116
    %vm119 = vcmp.ne.s32.totalorder %v111, 0
    %vm120 = vcmp.ne.s32.totalorder %v118, 0
    %vm121 = vcmp.lt.s32.totalorder %v111, 0
    %vm122 = vcmp.lt.s32.totalorder %v118, 0
    %vm123 = vmand %vm121, %vm119
    %vm124 = vmand %vm122, %vm120
    %v125 = vadd.s32 %v111, 64
    %v126 = vadd.s32 %v118, 64
    %v127 = vsel %vm123, %v125, %v111
    %v128 = vsel %vm124, %v126, %v118
    %vm129 = vcmp.lt.s32.totalorder %v127, 32
    %vm130 = vcmp.lt.s32.totalorder %v128, 32
    %v131 = vld [vmem:[%s0] sm:$0xff]
    %v132 = vld [vmem:[%s0 + $0x8] sm:$0xff]
    %v133 = vld [vmem:[%s0 + $0x10] sm:$0xff]
    %v134 = vld [vmem:[%s0 + $0x18] sm:$0xff]
    %v135 = vld [vmem:[%s0 + $0x20] sm:$0xff]
    %v136 = vld [vmem:[%s0 + $0x28] sm:$0xff]
    %v137 = vld [vmem:[%s0 + $0x30] sm:$0xff]
    %v138 = vld [vmem:[%s0 + $0x38] sm:$0xff]
    %v139 = vld [vmem:[#allocation5] sm:$0xff]
    %v140 = vld [vmem:[#allocation5 + $0x8] sm:$0xff]
    %v141 = vld [vmem:[#allocation5 + $0x10] sm:$0xff]
    %v142 = vld [vmem:[#allocation5 + $0x18] sm:$0xff]
    %v143 = vld [vmem:[%s5] sm:$0x3]
    %v145 = vperm.slane %v143, 0
    %v146 = vperm.slane %v143, 1
    %vm149 = vcmask 130048
    %v151 = vsel %vm149, %v131, 0
    %v154 = vsel %vm149, %v132, 0
    %v157 = vsel %vm149, %v133, 0
    %v160 = vsel %vm149, %v134, 0
    %v163 = vsel %vm149, %v135, 0
    %v166 = vsel %vm149, %v136, 0
    %v169 = vsel %vm149, %v137, 0
    %v172 = vsel %vm149, %v138, 0
    %174 = vmatpush.msra.mxu0 0.0
    %175 = vmatpush.msra.mxu0 0.0
    %176 = vmatpush.msra.mxu0 0.0
    %177 = vmatpush.msra.mxu0 0.0
    %178 = vmatpush.msra.mxu0 0.0
    %179 = vmatpush.msra.mxu0 0.0
    %180 = vmatpush.msra.mxu0 0.0
    %181 = vmatpush.msra.mxu0 0.0
    %182 = vmatpush.msra.mxu0 0.0
    %183 = vmatpush.msra.mxu0 0.0
    %184 = vmatpush.msra.mxu0 0.0
    %185 = vmatpush.msra.mxu0 0.0
    %186 = vmatpush.msra.mxu0 0.0
    %187 = vmatpush.msra.mxu0 0.0
    %188 = vmatpush.msra.mxu0 %v141
    %189 = vmatpush.msra.mxu0 %v139
    %190 = vmatmul.f32.gmra.mxu0 %v151
    %v191 = vpop.f32.mrf.mxu0
    %v192 = vadd.f32 %v145, %v191
    %193 = vmatmul.f32.gmra.mxu0 %v154
    %v194 = vpop.f32.mrf.mxu0
    %v195 = vadd.f32 %v145, %v194
    %196 = vmatmul.f32.gmra.mxu0 %v157
    %v197 = vpop.f32.mrf.mxu0
    %v198 = vadd.f32 %v145, %v197
    %199 = vmatmul.f32.gmra.mxu0 %v160
    %v200 = vpop.f32.mrf.mxu0
    %v201 = vadd.f32 %v145, %v200
    %202 = vmatmul.f32.gmra.mxu0 %v163
    %v203 = vpop.f32.mrf.mxu0
    %v204 = vadd.f32 %v145, %v203
    %205 = vmatmul.f32.gmra.mxu0 %v166
    %v206 = vpop.f32.mrf.mxu0
    %v207 = vadd.f32 %v145, %v206
    %208 = vmatmul.f32.gmra.mxu0 %v169
    %v209 = vpop.f32.mrf.mxu0
    %v210 = vadd.f32 %v145, %v209
    %211 = vmatmul.f32.gmra.mxu0 %v172
    %v212 = vpop.f32.mrf.mxu0
    %v213 = vadd.f32 %v145, %v212
    %214 = vdwg.mxu0
    %215 = vmatpush.msra.mxu0 0.0
    %216 = vmatpush.msra.mxu0 0.0
    %217 = vmatpush.msra.mxu0 0.0
    %218 = vmatpush.msra.mxu0 0.0
    %219 = vmatpush.msra.mxu0 0.0
    %220 = vmatpush.msra.mxu0 0.0
    %221 = vmatpush.msra.mxu0 0.0
    %222 = vmatpush.msra.mxu0 0.0
    %223 = vmatpush.msra.mxu0 0.0
    %224 = vmatpush.msra.mxu0 0.0
    %225 = vmatpush.msra.mxu0 0.0
    %226 = vmatpush.msra.mxu0 0.0
    %227 = vmatpush.msra.mxu0 0.0
    %228 = vmatpush.msra.mxu0 0.0
    %229 = vmatpush.msra.mxu0 %v142
    %230 = vmatpush.msra.mxu0 %v140
    %231 = vmatmul.f32.gmra.mxu0 %v151
    %v232 = vpop.f32.mrf.mxu0
    %v233 = vadd.f32 %v146, %v232
    %234 = vmatmul.f32.gmra.mxu0 %v154
    %v235 = vpop.f32.mrf.mxu0
    %v236 = vadd.f32 %v146, %v235
    %237 = vmatmul.f32.gmra.mxu0 %v157
    %v238 = vpop.f32.mrf.mxu0
    %v239 = vadd.f32 %v146, %v238
    %240 = vmatmul.f32.gmra.mxu0 %v160
    %v241 = vpop.f32.mrf.mxu0
    %v242 = vadd.f32 %v146, %v241
    %243 = vmatmul.f32.gmra.mxu0 %v163
    %v244 = vpop.f32.mrf.mxu0
    %v245 = vadd.f32 %v146, %v244
    %246 = vmatmul.f32.gmra.mxu0 %v166
    %v247 = vpop.f32.mrf.mxu0
    %v248 = vadd.f32 %v146, %v247
    %249 = vmatmul.f32.gmra.mxu0 %v169
    %v250 = vpop.f32.mrf.mxu0
    %v251 = vadd.f32 %v146, %v250
    %252 = vmatmul.f32.gmra.mxu0 %v172
    %v253 = vpop.f32.mrf.mxu0
    %v254 = vadd.f32 %v146, %v253
    %255 = vdwg.mxu0
    %256 = vst [vmem:[#allocation2] sm:$0xff] %v192
    %vm257 = vcmask 523264
    %258 = vst.msk [vmem:[#allocation2 + $0x8] sm:$0xff] %vm257, %v233
    %259 = vst [vmem:[#allocation2 + $0x10] sm:$0xff] %v195
    %260 = vst.msk [vmem:[#allocation2 + $0x18] sm:$0xff] %vm257, %v236
    %261 = vst [vmem:[#allocation2 + $0x20] sm:$0xff] %v198
    %262 = vst.msk [vmem:[#allocation2 + $0x28] sm:$0xff] %vm257, %v239
    %263 = vst [vmem:[#allocation2 + $0x30] sm:$0xff] %v201
    %264 = vst.msk [vmem:[#allocation2 + $0x38] sm:$0xff] %vm257, %v242
    %265 = vst [vmem:[#allocation2 + $0x40] sm:$0xff] %v204
    %266 = vst.msk [vmem:[#allocation2 + $0x48] sm:$0xff] %vm257, %v245
    %267 = vst [vmem:[#allocation2 + $0x50] sm:$0xff] %v207
    %268 = vst.msk [vmem:[#allocation2 + $0x58] sm:$0xff] %vm257, %v248
    %269 = vst [vmem:[#allocation2 + $0x60] sm:$0xff] %v210
    %270 = vst.msk [vmem:[#allocation2 + $0x68] sm:$0xff] %vm257, %v251
    %271 = vst [vmem:[#allocation2 + $0x70] sm:$0xff] %v213
    %272 = vst.msk [vmem:[#allocation2 + $0x78] sm:$0xff] %vm257, %v254
    %v273 = vld [vmem:[#allocation10] sm:$0xff]
    %v274 = vld [vmem:[#allocation10 + $0x8] sm:$0xff]
    %v275 = vld [vmem:[#allocation10 + $0x10] sm:$0xff]
    %v276 = vld [vmem:[#allocation10 + $0x18] sm:$0xff]
    %v277 = vld [vmem:[#allocation10 + $0x20] sm:$0xff]
    %v278 = vld [vmem:[#allocation10 + $0x28] sm:$0xff]
    %v279 = vld [vmem:[#allocation10 + $0x30] sm:$0xff]
    %v280 = vld [vmem:[#allocation10 + $0x38] sm:$0xff]
    %v281 = vld [vmem:[#allocation10 + $0x40] sm:$0xff]
    %v282 = vld [vmem:[#allocation10 + $0x48] sm:$0xff]
    %v283 = vld [vmem:[#allocation10 + $0x50] sm:$0xff]
    %v284 = vld [vmem:[#allocation10 + $0x58] sm:$0xff]
    %v285 = vld [vmem:[#allocation10 + $0x60] sm:$0xff]
    %v286 = vld [vmem:[#allocation10 + $0x68] sm:$0xff]
    %v287 = vld [vmem:[#allocation10 + $0x70] sm:$0xff]
    %v288 = vld [vmem:[#allocation10 + $0x78] sm:$0xff]
    %v289 = vld [vmem:[%s6] sm:$0x1]
    %v291 = vperm.slane %v289, 0
    %s293 = smul.u32 0, 2
    %s294 = smul.addr %s293, 8
    %s295 = scalar_lea.vmem [#allocation2], %s294
    %v296 = vld [vmem:[%s295] sm:$0xff]
    %v297 = vld [vmem:[%s295 + $0x8] sm:$0xff]
    %s298 = smul.u32 7, 2
    %s299 = smul.addr %s298, 8
    %s300 = scalar_lea.vmem [#allocation2], %s299
    %v301 = vld [vmem:[%s300] sm:$0xff]
    %v302 = vld [vmem:[%s300 + $0x8] sm:$0xff]
    %v303 = vsel %vm129, %v296, %v301
    %v304 = vsel %vm130, %v297, %v302
    %v306 = vsel %vm257, 0.0, 0
    %308 = vmatpush.msra.mxu0 0.0
    %309 = vmatpush.msra.mxu0 0.0
    %310 = vmatpush.msra.mxu0 0.0
    %311 = vmatpush.msra.mxu0 0.0
    %312 = vmatpush.msra.mxu0 0.0
    %313 = vmatpush.msra.mxu0 0.0
    %314 = vmatpush.msra.mxu0 0.0
    %315 = vmatpush.msra.mxu0 0.0
    %316 = vmatpush.msra.mxu0 %v287
    %317 = vmatpush.msra.mxu0 %v285
    %318 = vmatpush.msra.mxu0 %v283
    %319 = vmatpush.msra.mxu0 %v281
    %320 = vmatpush.msra.mxu0 %v279
    %321 = vmatpush.msra.mxu0 %v277
    %322 = vmatpush.msra.mxu0 %v275
    %323 = vmatpush.msra.mxu0 %v273
    %324 = vmatmul.f32.gmra.mxu0 %v306
    %v325 = vpop.f32.mrf.mxu0
    %v326 = vadd.f32 0.0, %v325
    %327 = vdwg.mxu0
    %328 = vmatpush.msra.mxu0 0.0
    %329 = vmatpush.msra.mxu0 0.0
    %330 = vmatpush.msra.mxu0 0.0
    %331 = vmatpush.msra.mxu0 0.0
    %332 = vmatpush.msra.mxu0 0.0
    %333 = vmatpush.msra.mxu0 0.0
    %334 = vmatpush.msra.mxu0 0.0
    %335 = vmatpush.msra.mxu0 0.0
    %336 = vmatpush.msra.mxu0 %v288
    %337 = vmatpush.msra.mxu0 %v286
    %338 = vmatpush.msra.mxu0 %v284
    %339 = vmatpush.msra.mxu0 %v282
    %340 = vmatpush.msra.mxu0 %v280
    %341 = vmatpush.msra.mxu0 %v278
    %342 = vmatpush.msra.mxu0 %v276
    %343 = vmatpush.msra.mxu0 %v274
    %344 = vmatmul.f32.gmra.mxu0 %v306
    %v345 = vpop.f32.mrf.mxu0
    %v346 = vadd.f32 0.0, %v345
    %347 = vdwg.mxu0
    %v348 = vadd.f32 %v303, %v326
    %v349 = vxor.u32 %v348, 2147483648
    %v350 = vmul.f32 %v349, 1.442695
    %v351 = vpow.pop %v350
    %v352 = vadd.f32 %v351, 1.0
    %v353 = vrcp.pop %v352
    %v354 = vmul.f32 %v352, %v353
    %v355 = vsub.f32 1.0, %v354
    %v356 = vmul.f32 %v353, %v355
    %v357 = vadd.f32 %v353, %v356
    %vm358 = vweird.f32 %v352
    %vm359 = vweird.f32 %v353
    %vm360 = vmor %vm358, %vm359
    %v361 = vsel %vm360, %v353, %v357
    %v362 = vand.u32 2147483647, %v352
    %vm363 = vcmp.eq.f32.partialorder %v362, 8.507059e+37
    %v364 = vand.u32 %v352, 2147483648
    %v365 = vor.u32 1.1754944e-38, %v364
    %v366 = vsel %vm363, %v365, %v361
    %v367 = vmul.f32 1.0, %v366
    %v368 = vadd.f32 %v346, %v291
    %v369 = vmul.f32 %v367, %v368
    %v370 = vadd.f32 %v304, %v369
    %v371 = vtanh.pop %v370
    %v372 = vsub.f32 0.0, %v371
    %374 = vrot.lane.b32.xlu0 %v372, 64
    %v375 = vpop.permute.xlu0 %374
    %v377 = vmul.f32 %v367, %v375
    %379 = vrot.lane.b32.xlu0 %v377, 64
    %v380 = vpop.permute.xlu0 %379
    %v382 = vadd.f32 %v371, %v380
    %v383 = vld [vmem:[%s1] sm:$0xff]
    %vm384 = vcmp.gt.f32.partialorder %v383, 0.0
    %v385 = vsel %vm384, %v382, 0.0
    %vm386 = vcmask 261120
    %387 = vst.msk [vmem:[#allocation3] sm:$0xff] %vm386, %v385
    %s388 = scalar_lea.vmem [#allocation3], 56
    %vm389 = vcmask 523520
    %390 = vst.msk [vmem:[%s388] sm:$0xff] %vm389, %v385
    %s391 = smul.u32 1, 2
    %s392 = smul.addr %s391, 8
    %s393 = scalar_lea.vmem [#allocation2], %s392
    %v394 = vld [vmem:[%s393] sm:$0xff]
    %v395 = vld [vmem:[%s393 + $0x8] sm:$0xff]
    %s396 = smul.u32 6, 2
    %s397 = smul.addr %s396, 8
    %s398 = scalar_lea.vmem [#allocation2], %s397
    %v399 = vld [vmem:[%s398] sm:$0xff]
    %v400 = vld [vmem:[%s398 + $0x8] sm:$0xff]
    %v401 = vsel %vm129, %v394, %v399
    %v402 = vsel %vm130, %v395, %v400
    %v404 = vsel %vm257, %v385, 0
    %406 = vmatpush.msra.mxu0 0.0
    %407 = vmatpush.msra.mxu0 0.0
    %408 = vmatpush.msra.mxu0 0.0
    %409 = vmatpush.msra.mxu0 0.0
    %410 = vmatpush.msra.mxu0 0.0
    %411 = vmatpush.msra.mxu0 0.0
    %412 = vmatpush.msra.mxu0 0.0
    %413 = vmatpush.msra.mxu0 0.0
    %414 = vmatpush.msra.mxu0 %v287
    %415 = vmatpush.msra.mxu0 %v285
    %416 = vmatpush.msra.mxu0 %v283
    %417 = vmatpush.msra.mxu0 %v281
    %418 = vmatpush.msra.mxu0 %v279
    %419 = vmatpush.msra.mxu0 %v277
    %420 = vmatpush.msra.mxu0 %v275
    %421 = vmatpush.msra.mxu0 %v273
    %422 = vmatmul.f32.gmra.mxu0 %v404
    %v423 = vpop.f32.mrf.mxu0
    %v424 = vadd.f32 0.0, %v423
    %425 = vdwg.mxu0
    %426 = vmatpush.msra.mxu0 0.0
    %427 = vmatpush.msra.mxu0 0.0
    %428 = vmatpush.msra.mxu0 0.0
    %429 = vmatpush.msra.mxu0 0.0
    %430 = vmatpush.msra.mxu0 0.0
    %431 = vmatpush.msra.mxu0 0.0
    %432 = vmatpush.msra.mxu0 0.0
    %433 = vmatpush.msra.mxu0 0.0
    %434 = vmatpush.msra.mxu0 %v288
    %435 = vmatpush.msra.mxu0 %v286
    %436 = vmatpush.msra.mxu0 %v284
    %437 = vmatpush.msra.mxu0 %v282
    %438 = vmatpush.msra.mxu0 %v280
    %439 = vmatpush.msra.mxu0 %v278
    %440 = vmatpush.msra.mxu0 %v276
    %441 = vmatpush.msra.mxu0 %v274
    %442 = vmatmul.f32.gmra.mxu0 %v404
    %v443 = vpop.f32.mrf.mxu0
    %v444 = vadd.f32 0.0, %v443
    %445 = vdwg.mxu0
    %v446 = vadd.f32 %v401, %v424
    %v447 = vxor.u32 %v446, 2147483648
    %v448 = vmul.f32 %v447, 1.442695
    %v449 = vpow.pop %v448
    %v450 = vadd.f32 %v449, 1.0
    %v451 = vrcp.pop %v450
    %v452 = vmul.f32 %v450, %v451
    %v453 = vsub.f32 1.0, %v452
    %v454 = vmul.f32 %v451, %v453
    %v455 = vadd.f32 %v451, %v454
    %vm456 = vweird.f32 %v450
    %vm457 = vweird.f32 %v451
    %vm458 = vmor %vm456, %vm457
    %v459 = vsel %vm458, %v451, %v455
    %v460 = vand.u32 2147483647, %v450
    %vm461 = vcmp.eq.f32.partialorder %v460, 8.507059e+37
    %v462 = vand.u32 %v450, 2147483648
    %v463 = vor.u32 1.1754944e-38, %v462
    %v464 = vsel %vm461, %v463, %v459
    %v465 = vmul.f32 1.0, %v464
    %v466 = vadd.f32 %v444, %v291
    %v467 = vmul.f32 %v465, %v466
    %v468 = vadd.f32 %v402, %v467
    %v469 = vtanh.pop %v468
    %v470 = vsub.f32 %v385, %v469
    %472 = vrot.lane.b32.xlu0 %v470, 64
    %v473 = vpop.permute.xlu0 %472
    %v475 = vmul.f32 %v465, %v473
    %477 = vrot.lane.b32.xlu0 %v475, 64
    %v478 = vpop.permute.xlu0 %477
    %v480 = vadd.f32 %v469, %v478
    %s481 = scalar_lea.vmem %s1, 8
    %v482 = vld [vmem:[%s481] sm:$0xff]
    %vm483 = vcmp.gt.f32.partialorder %v482, 0.0
    %v484 = vsel %vm483, %v480, %v385
    %s485 = scalar_lea.vmem [#allocation3], 8
    %486 = vst.msk [vmem:[%s485] sm:$0xff] %vm386, %v484
    %s487 = scalar_lea.vmem [#allocation3], 48
    %488 = vst.msk [vmem:[%s487] sm:$0xff] %vm389, %v484
    %s489 = smul.u32 2, 2
    %s490 = smul.addr %s489, 8
    %s491 = scalar_lea.vmem [#allocation2], %s490
    %v492 = vld [vmem:[%s491] sm:$0xff]
    %v493 = vld [vmem:[%s491 + $0x8] sm:$0xff]
    %s494 = smul.u32 5, 2
    %s495 = smul.addr %s494, 8
    %s496 = scalar_lea.vmem [#allocation2], %s495
    %v497 = vld [vmem:[%s496] sm:$0xff]
    %v498 = vld [vmem:[%s496 + $0x8] sm:$0xff]
    %v499 = vsel %vm129, %v492, %v497
    %v500 = vsel %vm130, %v493, %v498
    %v502 = vsel %vm257, %v484, 0
    %504 = vmatpush.msra.mxu0 0.0
    %505 = vmatpush.msra.mxu0 0.0
    %506 = vmatpush.msra.mxu0 0.0
    %507 = vmatpush.msra.mxu0 0.0
    %508 = vmatpush.msra.mxu0 0.0
    %509 = vmatpush.msra.mxu0 0.0
    %510 = vmatpush.msra.mxu0 0.0
    %511 = vmatpush.msra.mxu0 0.0
    %512 = vmatpush.msra.mxu0 %v287
    %513 = vmatpush.msra.mxu0 %v285
    %514 = vmatpush.msra.mxu0 %v283
    %515 = vmatpush.msra.mxu0 %v281
    %516 = vmatpush.msra.mxu0 %v279
    %517 = vmatpush.msra.mxu0 %v277
    %518 = vmatpush.msra.mxu0 %v275
    %519 = vmatpush.msra.mxu0 %v273
    %520 = vmatmul.f32.gmra.mxu0 %v502
    %v521 = vpop.f32.mrf.mxu0
    %v522 = vadd.f32 0.0, %v521
    %523 = vdwg.mxu0
    %524 = vmatpush.msra.mxu0 0.0
    %525 = vmatpush.msra.mxu0 0.0
    %526 = vmatpush.msra.mxu0 0.0
    %527 = vmatpush.msra.mxu0 0.0
    %528 = vmatpush.msra.mxu0 0.0
    %529 = vmatpush.msra.mxu0 0.0
    %530 = vmatpush.msra.mxu0 0.0
    %531 = vmatpush.msra.mxu0 0.0
    %532 = vmatpush.msra.mxu0 %v288
    %533 = vmatpush.msra.mxu0 %v286
    %534 = vmatpush.msra.mxu0 %v284
    %535 = vmatpush.msra.mxu0 %v282
    %536 = vmatpush.msra.mxu0 %v280
    %537 = vmatpush.msra.mxu0 %v278
    %538 = vmatpush.msra.mxu0 %v276
    %539 = vmatpush.msra.mxu0 %v274
    %540 = vmatmul.f32.gmra.mxu0 %v502
    %v541 = vpop.f32.mrf.mxu0
    %v542 = vadd.f32 0.0, %v541
    %543 = vdwg.mxu0
    %v544 = vadd.f32 %v499, %v522
    %v545 = vxor.u32 %v544, 2147483648
    %v546 = vmul.f32 %v545, 1.442695
    %v547 = vpow.pop %v546
    %v548 = vadd.f32 %v547, 1.0
    %v549 = vrcp.pop %v548
    %v550 = vmul.f32 %v548, %v549
    %v551 = vsub.f32 1.0, %v550
    %v552 = vmul.f32 %v549, %v551
    %v553 = vadd.f32 %v549, %v552
    %vm554 = vweird.f32 %v548
    %vm555 = vweird.f32 %v549
    %vm556 = vmor %vm554, %vm555
    %v557 = vsel %vm556, %v549, %v553
    %v558 = vand.u32 2147483647, %v548
    %vm559 = vcmp.eq.f32.partialorder %v558, 8.507059e+37
    %v560 = vand.u32 %v548, 2147483648
    %v561 = vor.u32 1.1754944e-38, %v560
    %v562 = vsel %vm559, %v561, %v557
    %v563 = vmul.f32 1.0, %v562
    %v564 = vadd.f32 %v542, %v291
    %v565 = vmul.f32 %v563, %v564
    %v566 = vadd.f32 %v500, %v565
    %v567 = vtanh.pop %v566
    %v568 = vsub.f32 %v484, %v567
    %570 = vrot.lane.b32.xlu0 %v568, 64
    %v571 = vpop.permute.xlu0 %570
    %v573 = vmul.f32 %v563, %v571
    %575 = vrot.lane.b32.xlu0 %v573, 64
    %v576 = vpop.permute.xlu0 %575
    %v578 = vadd.f32 %v567, %v576
    %s579 = scalar_lea.vmem %s1, 16
    %v580 = vld [vmem:[%s579] sm:$0xff]
    %vm581 = vcmp.gt.f32.partialorder %v580, 0.0
    %v582 = vsel %vm581, %v578, %v484
    %s583 = scalar_lea.vmem [#allocation3], 16
    %584 = vst.msk [vmem:[%s583] sm:$0xff] %vm386, %v582
    %s585 = scalar_lea.vmem [#allocation3], 40
    %586 = vst.msk [vmem:[%s585] sm:$0xff] %vm389, %v582
    %s587 = smul.u32 3, 2
    %s588 = smul.addr %s587, 8
    %s589 = scalar_lea.vmem [#allocation2], %s588
    %v590 = vld [vmem:[%s589] sm:$0xff]
    %v591 = vld [vmem:[%s589 + $0x8] sm:$0xff]
    %s592 = smul.u32 4, 2
    %s593 = smul.addr %s592, 8
    %s594 = scalar_lea.vmem [#allocation2], %s593
    %v595 = vld [vmem:[%s594] sm:$0xff]
    %v596 = vld [vmem:[%s594 + $0x8] sm:$0xff]
    %v597 = vsel %vm129, %v590, %v595
    %v598 = vsel %vm130, %v591, %v596
    %v600 = vsel %vm257, %v582, 0
    %602 = vmatpush.msra.mxu0 0.0
    %603 = vmatpush.msra.mxu0 0.0
    %604 = vmatpush.msra.mxu0 0.0
    %605 = vmatpush.msra.mxu0 0.0
    %606 = vmatpush.msra.mxu0 0.0
    %607 = vmatpush.msra.mxu0 0.0
    %608 = vmatpush.msra.mxu0 0.0
    %609 = vmatpush.msra.mxu0 0.0
    %610 = vmatpush.msra.mxu0 %v287
    %611 = vmatpush.msra.mxu0 %v285
    %612 = vmatpush.msra.mxu0 %v283
    %613 = vmatpush.msra.mxu0 %v281
    %614 = vmatpush.msra.mxu0 %v279
    %615 = vmatpush.msra.mxu0 %v277
    %616 = vmatpush.msra.mxu0 %v275
    %617 = vmatpush.msra.mxu0 %v273
    %618 = vmatmul.f32.gmra.mxu0 %v600
    %v619 = vpop.f32.mrf.mxu0
    %v620 = vadd.f32 0.0, %v619
    %621 = vdwg.mxu0
    %622 = vmatpush.msra.mxu0 0.0
    %623 = vmatpush.msra.mxu0 0.0
    %624 = vmatpush.msra.mxu0 0.0
    %625 = vmatpush.msra.mxu0 0.0
    %626 = vmatpush.msra.mxu0 0.0
    %627 = vmatpush.msra.mxu0 0.0
    %628 = vmatpush.msra.mxu0 0.0
    %629 = vmatpush.msra.mxu0 0.0
    %630 = vmatpush.msra.mxu0 %v288
    %631 = vmatpush.msra.mxu0 %v286
    %632 = vmatpush.msra.mxu0 %v284
    %633 = vmatpush.msra.mxu0 %v282
    %634 = vmatpush.msra.mxu0 %v280
    %635 = vmatpush.msra.mxu0 %v278
    %636 = vmatpush.msra.mxu0 %v276
    %637 = vmatpush.msra.mxu0 %v274
    %638 = vmatmul.f32.gmra.mxu0 %v600
    %v639 = vpop.f32.mrf.mxu0
    %v640 = vadd.f32 0.0, %v639
    %641 = vdwg.mxu0
    %v642 = vadd.f32 %v597, %v620
    %v643 = vxor.u32 %v642, 2147483648
    %v644 = vmul.f32 %v643, 1.442695
    %v645 = vpow.pop %v644
    %v646 = vadd.f32 %v645, 1.0
    %v647 = vrcp.pop %v646
    %v648 = vmul.f32 %v646, %v647
    %v649 = vsub.f32 1.0, %v648
    %v650 = vmul.f32 %v647, %v649
    %v651 = vadd.f32 %v647, %v650
    %vm652 = vweird.f32 %v646
    %vm653 = vweird.f32 %v647
    %vm654 = vmor %vm652, %vm653
    %v655 = vsel %vm654, %v647, %v651
    %v656 = vand.u32 2147483647, %v646
    %vm657 = vcmp.eq.f32.partialorder %v656, 8.507059e+37
    %v658 = vand.u32 %v646, 2147483648
    %v659 = vor.u32 1.1754944e-38, %v658
    %v660 = vsel %vm657, %v659, %v655
    %v661 = vmul.f32 1.0, %v660
    %v662 = vadd.f32 %v640, %v291
    %v663 = vmul.f32 %v661, %v662
    %v664 = vadd.f32 %v598, %v663
    %v665 = vtanh.pop %v664
    %v666 = vsub.f32 %v582, %v665
    %668 = vrot.lane.b32.xlu0 %v666, 64
    %v669 = vpop.permute.xlu0 %668
    %v671 = vmul.f32 %v661, %v669
    %673 = vrot.lane.b32.xlu0 %v671, 64
    %v674 = vpop.permute.xlu0 %673
    %v676 = vadd.f32 %v665, %v674
    %s677 = scalar_lea.vmem %s1, 24
    %v678 = vld [vmem:[%s677] sm:$0xff]
    %vm679 = vcmp.gt.f32.partialorder %v678, 0.0
    %v680 = vsel %vm679, %v676, %v582
    %s681 = scalar_lea.vmem [#allocation3], 24
    %682 = vst.msk [vmem:[%s681] sm:$0xff] %vm386, %v680
    %s683 = scalar_lea.vmem [#allocation3], 32
    %684 = vst.msk [vmem:[%s683] sm:$0xff] %vm389, %v680
    %v685 = vld [vmem:[%s594] sm:$0xff]
    %v686 = vld [vmem:[%s594 + $0x8] sm:$0xff]
    %v687 = vld [vmem:[%s589] sm:$0xff]
    %v688 = vld [vmem:[%s589 + $0x8] sm:$0xff]
    %v689 = vsel %vm129, %v685, %v687
    %v690 = vsel %vm130, %v686, %v688
    %v692 = vsel %vm257, %v680, 0
    %694 = vmatpush.msra.mxu0 0.0
    %695 = vmatpush.msra.mxu0 0.0
    %696 = vmatpush.msra.mxu0 0.0
    %697 = vmatpush.msra.mxu0 0.0
    %698 = vmatpush.msra.mxu0 0.0
    %699 = vmatpush.msra.mxu0 0.0
    %700 = vmatpush.msra.mxu0 0.0
    %701 = vmatpush.msra.mxu0 0.0
    %702 = vmatpush.msra.mxu0 %v287
    %703 = vmatpush.msra.mxu0 %v285
    %704 = vmatpush.msra.mxu0 %v283
    %705 = vmatpush.msra.mxu0 %v281
    %706 = vmatpush.msra.mxu0 %v279
    %707 = vmatpush.msra.mxu0 %v277
    %708 = vmatpush.msra.mxu0 %v275
    %709 = vmatpush.msra.mxu0 %v273
    %710 = vmatmul.f32.gmra.mxu0 %v692
    %v711 = vpop.f32.mrf.mxu0
    %v712 = vadd.f32 0.0, %v711
    %713 = vdwg.mxu0
    %714 = vmatpush.msra.mxu0 0.0
    %715 = vmatpush.msra.mxu0 0.0
    %716 = vmatpush.msra.mxu0 0.0
    %717 = vmatpush.msra.mxu0 0.0
    %718 = vmatpush.msra.mxu0 0.0
    %719 = vmatpush.msra.mxu0 0.0
    %720 = vmatpush.msra.mxu0 0.0
    %721 = vmatpush.msra.mxu0 0.0
    %722 = vmatpush.msra.mxu0 %v288
    %723 = vmatpush.msra.mxu0 %v286
    %724 = vmatpush.msra.mxu0 %v284
    %725 = vmatpush.msra.mxu0 %v282
    %726 = vmatpush.msra.mxu0 %v280
    %727 = vmatpush.msra.mxu0 %v278
    %728 = vmatpush.msra.mxu0 %v276
    %729 = vmatpush.msra.mxu0 %v274
    %730 = vmatmul.f32.gmra.mxu0 %v692
    %v731 = vpop.f32.mrf.mxu0
    %v732 = vadd.f32 0.0, %v731
    %733 = vdwg.mxu0
    %v734 = vadd.f32 %v689, %v712
    %v735 = vxor.u32 %v734, 2147483648
    %v736 = vmul.f32 %v735, 1.442695
    %v737 = vpow.pop %v736
    %v738 = vadd.f32 %v737, 1.0
    %v739 = vrcp.pop %v738
    %v740 = vmul.f32 %v738, %v739
    %v741 = vsub.f32 1.0, %v740
    %v742 = vmul.f32 %v739, %v741
    %v743 = vadd.f32 %v739, %v742
    %vm744 = vweird.f32 %v738
    %vm745 = vweird.f32 %v739
    %vm746 = vmor %vm744, %vm745
    %v747 = vsel %vm746, %v739, %v743
    %v748 = vand.u32 2147483647, %v738
    %vm749 = vcmp.eq.f32.partialorder %v748, 8.507059e+37
    %v750 = vand.u32 %v738, 2147483648
    %v751 = vor.u32 1.1754944e-38, %v750
    %v752 = vsel %vm749, %v751, %v747
    %v753 = vmul.f32 1.0, %v752
    %v754 = vadd.f32 %v732, %v291
    %v755 = vmul.f32 %v753, %v754
    %v756 = vadd.f32 %v690, %v755
    %v757 = vtanh.pop %v756
    %v758 = vsub.f32 %v680, %v757
    %760 = vrot.lane.b32.xlu0 %v758, 64
    %v761 = vpop.permute.xlu0 %760
    %v763 = vmul.f32 %v753, %v761
    %765 = vrot.lane.b32.xlu0 %v763, 64
    %v766 = vpop.permute.xlu0 %765
    %v768 = vadd.f32 %v757, %v766
    %s769 = scalar_lea.vmem %s1, 32
    %v770 = vld [vmem:[%s769] sm:$0xff]
    %vm771 = vcmp.gt.f32.partialorder %v770, 0.0
    %v772 = vsel %vm771, %v768, %v680
    %773 = vst.msk [vmem:[%s683] sm:$0xff] %vm386, %v772
    %774 = vst.msk [vmem:[%s681] sm:$0xff] %vm389, %v772
    %v775 = vld [vmem:[%s496] sm:$0xff]
    %v776 = vld [vmem:[%s496 + $0x8] sm:$0xff]
    %v777 = vld [vmem:[%s491] sm:$0xff]
    %v778 = vld [vmem:[%s491 + $0x8] sm:$0xff]
    %v779 = vsel %vm129, %v775, %v777
    %v780 = vsel %vm130, %v776, %v778
    %v782 = vsel %vm257, %v772, 0
    %784 = vmatpush.msra.mxu0 0.0
    %785 = vmatpush.msra.mxu0 0.0
    %786 = vmatpush.msra.mxu0 0.0
    %787 = vmatpush.msra.mxu0 0.0
    %788 = vmatpush.msra.mxu0 0.0
    %789 = vmatpush.msra.mxu0 0.0
    %790 = vmatpush.msra.mxu0 0.0
    %791 = vmatpush.msra.mxu0 0.0
    %792 = vmatpush.msra.mxu0 %v287
    %793 = vmatpush.msra.mxu0 %v285
    %794 = vmatpush.msra.mxu0 %v283
    %795 = vmatpush.msra.mxu0 %v281
    %796 = vmatpush.msra.mxu0 %v279
    %797 = vmatpush.msra.mxu0 %v277
    %798 = vmatpush.msra.mxu0 %v275
    %799 = vmatpush.msra.mxu0 %v273
    %800 = vmatmul.f32.gmra.mxu0 %v782
    %v801 = vpop.f32.mrf.mxu0
    %v802 = vadd.f32 0.0, %v801
    %803 = vdwg.mxu0
    %804 = vmatpush.msra.mxu0 0.0
    %805 = vmatpush.msra.mxu0 0.0
    %806 = vmatpush.msra.mxu0 0.0
    %807 = vmatpush.msra.mxu0 0.0
    %808 = vmatpush.msra.mxu0 0.0
    %809 = vmatpush.msra.mxu0 0.0
    %810 = vmatpush.msra.mxu0 0.0
    %811 = vmatpush.msra.mxu0 0.0
    %812 = vmatpush.msra.mxu0 %v288
    %813 = vmatpush.msra.mxu0 %v286
    %814 = vmatpush.msra.mxu0 %v284
    %815 = vmatpush.msra.mxu0 %v282
    %816 = vmatpush.msra.mxu0 %v280
    %817 = vmatpush.msra.mxu0 %v278
    %818 = vmatpush.msra.mxu0 %v276
    %819 = vmatpush.msra.mxu0 %v274
    %820 = vmatmul.f32.gmra.mxu0 %v782
    %v821 = vpop.f32.mrf.mxu0
    %v822 = vadd.f32 0.0, %v821
    %823 = vdwg.mxu0
    %v824 = vadd.f32 %v779, %v802
    %v825 = vxor.u32 %v824, 2147483648
    %v826 = vmul.f32 %v825, 1.442695
    %v827 = vpow.pop %v826
    %v828 = vadd.f32 %v827, 1.0
    %v829 = vrcp.pop %v828
    %v830 = vmul.f32 %v828, %v829
    %v831 = vsub.f32 1.0, %v830
    %v832 = vmul.f32 %v829, %v831
    %v833 = vadd.f32 %v829, %v832
    %vm834 = vweird.f32 %v828
    %vm835 = vweird.f32 %v829
    %vm836 = vmor %vm834, %vm835
    %v837 = vsel %vm836, %v829, %v833
    %v838 = vand.u32 2147483647, %v828
    %vm839 = vcmp.eq.f32.partialorder %v838, 8.507059e+37
    %v840 = vand.u32 %v828, 2147483648
    %v841 = vor.u32 1.1754944e-38, %v840
    %v842 = vsel %vm839, %v841, %v837
    %v843 = vmul.f32 1.0, %v842
    %v844 = vadd.f32 %v822, %v291
    %v845 = vmul.f32 %v843, %v844
    %v846 = vadd.f32 %v780, %v845
    %v847 = vtanh.pop %v846
    %v848 = vsub.f32 %v772, %v847
    %850 = vrot.lane.b32.xlu0 %v848, 64
    %v851 = vpop.permute.xlu0 %850
    %v853 = vmul.f32 %v843, %v851
    %855 = vrot.lane.b32.xlu0 %v853, 64
    %v856 = vpop.permute.xlu0 %855
    %v858 = vadd.f32 %v847, %v856
    %s859 = scalar_lea.vmem %s1, 40
    %v860 = vld [vmem:[%s859] sm:$0xff]
    %vm861 = vcmp.gt.f32.partialorder %v860, 0.0
    %v862 = vsel %vm861, %v858, %v772
    %863 = vst.msk [vmem:[%s585] sm:$0xff] %vm386, %v862
    %864 = vst.msk [vmem:[%s583] sm:$0xff] %vm389, %v862
    %v865 = vld [vmem:[%s398] sm:$0xff]
    %v866 = vld [vmem:[%s398 + $0x8] sm:$0xff]
    %v867 = vld [vmem:[%s393] sm:$0xff]
    %v868 = vld [vmem:[%s393 + $0x8] sm:$0xff]
    %v869 = vsel %vm129, %v865, %v867
    %v870 = vsel %vm130, %v866, %v868
    %v872 = vsel %vm257, %v862, 0
    %874 = vmatpush.msra.mxu0 0.0
    %875 = vmatpush.msra.mxu0 0.0
    %876 = vmatpush.msra.mxu0 0.0
    %877 = vmatpush.msra.mxu0 0.0
    %878 = vmatpush.msra.mxu0 0.0
    %879 = vmatpush.msra.mxu0 0.0
    %880 = vmatpush.msra.mxu0 0.0
    %881 = vmatpush.msra.mxu0 0.0
    %882 = vmatpush.msra.mxu0 %v287
    %883 = vmatpush.msra.mxu0 %v285
    %884 = vmatpush.msra.mxu0 %v283
    %885 = vmatpush.msra.mxu0 %v281
    %886 = vmatpush.msra.mxu0 %v279
    %887 = vmatpush.msra.mxu0 %v277
    %888 = vmatpush.msra.mxu0 %v275
    %889 = vmatpush.msra.mxu0 %v273
    %890 = vmatmul.f32.gmra.mxu0 %v872
    %v891 = vpop.f32.mrf.mxu0
    %v892 = vadd.f32 0.0, %v891
    %893 = vdwg.mxu0
    %894 = vmatpush.msra.mxu0 0.0
    %895 = vmatpush.msra.mxu0 0.0
    %896 = vmatpush.msra.mxu0 0.0
    %897 = vmatpush.msra.mxu0 0.0
    %898 = vmatpush.msra.mxu0 0.0
    %899 = vmatpush.msra.mxu0 0.0
    %900 = vmatpush.msra.mxu0 0.0
    %901 = vmatpush.msra.mxu0 0.0
    %902 = vmatpush.msra.mxu0 %v288
    %903 = vmatpush.msra.mxu0 %v286
    %904 = vmatpush.msra.mxu0 %v284
    %905 = vmatpush.msra.mxu0 %v282
    %906 = vmatpush.msra.mxu0 %v280
    %907 = vmatpush.msra.mxu0 %v278
    %908 = vmatpush.msra.mxu0 %v276
    %909 = vmatpush.msra.mxu0 %v274
    %910 = vmatmul.f32.gmra.mxu0 %v872
    %v911 = vpop.f32.mrf.mxu0
    %v912 = vadd.f32 0.0, %v911
    %913 = vdwg.mxu0
    %v914 = vadd.f32 %v869, %v892
    %v915 = vxor.u32 %v914, 2147483648
    %v916 = vmul.f32 %v915, 1.442695
    %v917 = vpow.pop %v916
    %v918 = vadd.f32 %v917, 1.0
    %v919 = vrcp.pop %v918
    %v920 = vmul.f32 %v918, %v919
    %v921 = vsub.f32 1.0, %v920
    %v922 = vmul.f32 %v919, %v921
    %v923 = vadd.f32 %v919, %v922
    %vm924 = vweird.f32 %v918
    %vm925 = vweird.f32 %v919
    %vm926 = vmor %vm924, %vm925
    %v927 = vsel %vm926, %v919, %v923
    %v928 = vand.u32 2147483647, %v918
    %vm929 = vcmp.eq.f32.partialorder %v928, 8.507059e+37
    %v930 = vand.u32 %v918, 2147483648
    %v931 = vor.u32 1.1754944e-38, %v930
    %v932 = vsel %vm929, %v931, %v927
    %v933 = vmul.f32 1.0, %v932
    %v934 = vadd.f32 %v912, %v291
    %v935 = vmul.f32 %v933, %v934
    %v936 = vadd.f32 %v870, %v935
    %v937 = vtanh.pop %v936
    %v938 = vsub.f32 %v862, %v937
    %940 = vrot.lane.b32.xlu0 %v938, 64
    %v941 = vpop.permute.xlu0 %940
    %v943 = vmul.f32 %v933, %v941
    %945 = vrot.lane.b32.xlu0 %v943, 64
    %v946 = vpop.permute.xlu0 %945
    %v948 = vadd.f32 %v937, %v946
    %s949 = scalar_lea.vmem %s1, 48
    %v950 = vld [vmem:[%s949] sm:$0xff]
    %vm951 = vcmp.gt.f32.partialorder %v950, 0.0
    %v952 = vsel %vm951, %v948, %v862
    %953 = vst.msk [vmem:[%s487] sm:$0xff] %vm386, %v952
    %954 = vst.msk [vmem:[%s485] sm:$0xff] %vm389, %v952
    %v955 = vld [vmem:[%s300] sm:$0xff]
    %v956 = vld [vmem:[%s300 + $0x8] sm:$0xff]
    %v957 = vld [vmem:[%s295] sm:$0xff]
    %v958 = vld [vmem:[%s295 + $0x8] sm:$0xff]
    %v959 = vsel %vm129, %v955, %v957
    %v960 = vsel %vm130, %v956, %v958
    %v962 = vsel %vm257, %v952, 0
    %964 = vmatpush.msra.mxu0 0.0
    %965 = vmatpush.msra.mxu0 0.0
    %966 = vmatpush.msra.mxu0 0.0
    %967 = vmatpush.msra.mxu0 0.0
    %968 = vmatpush.msra.mxu0 0.0
    %969 = vmatpush.msra.mxu0 0.0
    %970 = vmatpush.msra.mxu0 0.0
    %971 = vmatpush.msra.mxu0 0.0
    %972 = vmatpush.msra.mxu0 %v287
    %973 = vmatpush.msra.mxu0 %v285
    %974 = vmatpush.msra.mxu0 %v283
    %975 = vmatpush.msra.mxu0 %v281
    %976 = vmatpush.msra.mxu0 %v279
    %977 = vmatpush.msra.mxu0 %v277
    %978 = vmatpush.msra.mxu0 %v275
    %979 = vmatpush.msra.mxu0 %v273
    %980 = vmatmul.f32.gmra.mxu0 %v962
    %v981 = vpop.f32.mrf.mxu0
    %v982 = vadd.f32 0.0, %v981
    %983 = vdwg.mxu0
    %984 = vmatpush.msra.mxu0 0.0
    %985 = vmatpush.msra.mxu0 0.0
    %986 = vmatpush.msra.mxu0 0.0
    %987 = vmatpush.msra.mxu0 0.0
    %988 = vmatpush.msra.mxu0 0.0
    %989 = vmatpush.msra.mxu0 0.0
    %990 = vmatpush.msra.mxu0 0.0
    %991 = vmatpush.msra.mxu0 0.0
    %992 = vmatpush.msra.mxu0 %v288
    %993 = vmatpush.msra.mxu0 %v286
    %994 = vmatpush.msra.mxu0 %v284
    %995 = vmatpush.msra.mxu0 %v282
    %996 = vmatpush.msra.mxu0 %v280
    %997 = vmatpush.msra.mxu0 %v278
    %998 = vmatpush.msra.mxu0 %v276
    %999 = vmatpush.msra.mxu0 %v274
    %1000 = vmatmul.f32.gmra.mxu0 %v962
    %v1001 = vpop.f32.mrf.mxu0
    %v1002 = vadd.f32 0.0, %v1001
    %1003 = vdwg.mxu0
    %v1004 = vadd.f32 %v959, %v982
    %v1005 = vxor.u32 %v1004, 2147483648
    %v1006 = vmul.f32 %v1005, 1.442695
    %v1007 = vpow.pop %v1006
    %v1008 = vadd.f32 %v1007, 1.0
    %v1009 = vrcp.pop %v1008
    %v1010 = vmul.f32 %v1008, %v1009
    %v1011 = vsub.f32 1.0, %v1010
    %v1012 = vmul.f32 %v1009, %v1011
    %v1013 = vadd.f32 %v1009, %v1012
    %vm1014 = vweird.f32 %v1008
    %vm1015 = vweird.f32 %v1009
    %vm1016 = vmor %vm1014, %vm1015
    %v1017 = vsel %vm1016, %v1009, %v1013
    %v1018 = vand.u32 2147483647, %v1008
    %vm1019 = vcmp.eq.f32.partialorder %v1018, 8.507059e+37
    %v1020 = vand.u32 %v1008, 2147483648
    %v1021 = vor.u32 1.1754944e-38, %v1020
    %v1022 = vsel %vm1019, %v1021, %v1017
    %v1023 = vmul.f32 1.0, %v1022
    %v1024 = vadd.f32 %v1002, %v291
    %v1025 = vmul.f32 %v1023, %v1024
    %v1026 = vadd.f32 %v960, %v1025
    %v1027 = vtanh.pop %v1026
    %v1028 = vsub.f32 %v952, %v1027
    %1030 = vrot.lane.b32.xlu0 %v1028, 64
    %v1031 = vpop.permute.xlu0 %1030
    %v1033 = vmul.f32 %v1023, %v1031
    %1035 = vrot.lane.b32.xlu0 %v1033, 64
    %v1036 = vpop.permute.xlu0 %1035
    %v1038 = vadd.f32 %v1027, %v1036
    %s1039 = scalar_lea.vmem %s1, 56
    %v1040 = vld [vmem:[%s1039] sm:$0xff]
    %vm1041 = vcmp.gt.f32.partialorder %v1040, 0.0
    %v1042 = vsel %vm1041, %v1038, %v952
    %1043 = vst.msk [vmem:[%s388] sm:$0xff] %vm386, %v1042
    %1044 = vst.msk [vmem:[#allocation3] sm:$0xff] %vm389, %v1042
    %v1045 = vld [vmem:[#allocation3] sm:$0xff]
    %v1046 = vld [vmem:[#allocation3 + $0x8] sm:$0xff]
    %v1047 = vld [vmem:[#allocation3 + $0x10] sm:$0xff]
    %v1048 = vld [vmem:[#allocation3 + $0x18] sm:$0xff]
    %v1049 = vld [vmem:[#allocation3 + $0x20] sm:$0xff]
    %v1050 = vld [vmem:[#allocation3 + $0x28] sm:$0xff]
    %v1051 = vld [vmem:[#allocation3 + $0x30] sm:$0xff]
    %v1052 = vld [vmem:[#allocation3 + $0x38] sm:$0xff]
    %v1053 = vld [vmem:[#allocation8] sm:$0xff]
    %v1054 = vld [vmem:[#allocation8 + $0x8] sm:$0xff]
    %v1055 = vld [vmem:[#allocation8 + $0x10] sm:$0xff]
    %v1056 = vld [vmem:[#allocation8 + $0x18] sm:$0xff]
    %v1057 = vld [vmem:[#allocation8 + $0x20] sm:$0xff]
    %v1058 = vld [vmem:[#allocation8 + $0x28] sm:$0xff]
    %v1059 = vld [vmem:[#allocation8 + $0x30] sm:$0xff]
    %v1060 = vld [vmem:[#allocation8 + $0x38] sm:$0xff]
    %v1061 = vld [vmem:[#allocation8 + $0x40] sm:$0xff]
    %v1062 = vld [vmem:[#allocation8 + $0x48] sm:$0xff]
    %v1063 = vld [vmem:[#allocation8 + $0x50] sm:$0xff]
    %v1064 = vld [vmem:[#allocation8 + $0x58] sm:$0xff]
    %v1065 = vld [vmem:[#allocation8 + $0x60] sm:$0xff]
    %v1066 = vld [vmem:[#allocation8 + $0x68] sm:$0xff]
    %v1067 = vld [vmem:[#allocation8 + $0x70] sm:$0xff]
    %v1068 = vld [vmem:[#allocation8 + $0x78] sm:$0xff]
    %s1069 = scalar_lea.vmem %s5, 2
    %v1070 = vld [vmem:[%s1069] sm:$0x3]
    %v1072 = vperm.slane %v1070, 0
    %v1073 = vperm.slane %v1070, 1
    %v1077 = vsel %vm257, %v1045, 0
    %v1080 = vsel %vm257, %v1046, 0
    %v1083 = vsel %vm257, %v1047, 0
    %v1086 = vsel %vm257, %v1048, 0
    %v1089 = vsel %vm257, %v1049, 0
    %v1092 = vsel %vm257, %v1050, 0
    %v1095 = vsel %vm257, %v1051, 0
    %v1098 = vsel %vm257, %v1052, 0
    %1100 = vmatpush.msra.mxu0 0.0
    %1101 = vmatpush.msra.mxu0 0.0
    %1102 = vmatpush.msra.mxu0 0.0
    %1103 = vmatpush.msra.mxu0 0.0
    %1104 = vmatpush.msra.mxu0 0.0
    %1105 = vmatpush.msra.mxu0 0.0
    %1106 = vmatpush.msra.mxu0 0.0
    %1107 = vmatpush.msra.mxu0 0.0
    %1108 = vmatpush.msra.mxu0 %v1067
    %1109 = vmatpush.msra.mxu0 %v1065
    %1110 = vmatpush.msra.mxu0 %v1063
    %1111 = vmatpush.msra.mxu0 %v1061
    %1112 = vmatpush.msra.mxu0 %v1059
    %1113 = vmatpush.msra.mxu0 %v1057
    %1114 = vmatpush.msra.mxu0 %v1055
    %1115 = vmatpush.msra.mxu0 %v1053
    %1116 = vmatmul.f32.gmra.mxu0 %v1077
    %v1117 = vpop.f32.mrf.mxu0
    %v1118 = vadd.f32 %v1072, %v1117
    %1119 = vmatmul.f32.gmra.mxu0 %v1080
    %v1120 = vpop.f32.mrf.mxu0
    %v1121 = vadd.f32 %v1072, %v1120
    %1122 = vmatmul.f32.gmra.mxu0 %v1083
    %v1123 = vpop.f32.mrf.mxu0
    %v1124 = vadd.f32 %v1072, %v1123
    %1125 = vmatmul.f32.gmra.mxu0 %v1086
    %v1126 = vpop.f32.mrf.mxu0
    %v1127 = vadd.f32 %v1072, %v1126
    %1128 = vmatmul.f32.gmra.mxu0 %v1089
    %v1129 = vpop.f32.mrf.mxu0
    %v1130 = vadd.f32 %v1072, %v1129
    %1131 = vmatmul.f32.gmra.mxu0 %v1092
    %v1132 = vpop.f32.mrf.mxu0
    %v1133 = vadd.f32 %v1072, %v1132
    %1134 = vmatmul.f32.gmra.mxu0 %v1095
    %v1135 = vpop.f32.mrf.mxu0
    %v1136 = vadd.f32 %v1072, %v1135
    %1137 = vmatmul.f32.gmra.mxu0 %v1098
    %v1138 = vpop.f32.mrf.mxu0
    %v1139 = vadd.f32 %v1072, %v1138
    %1140 = vdwg.mxu0
    %1141 = vmatpush.msra.mxu0 0.0
    %1142 = vmatpush.msra.mxu0 0.0
    %1143 = vmatpush.msra.mxu0 0.0
    %1144 = vmatpush.msra.mxu0 0.0
    %1145 = vmatpush.msra.mxu0 0.0
    %1146 = vmatpush.msra.mxu0 0.0
    %1147 = vmatpush.msra.mxu0 0.0
    %1148 = vmatpush.msra.mxu0 0.0
    %1149 = vmatpush.msra.mxu0 %v1068
    %1150 = vmatpush.msra.mxu0 %v1066
    %1151 = vmatpush.msra.mxu0 %v1064
    %1152 = vmatpush.msra.mxu0 %v1062
    %1153 = vmatpush.msra.mxu0 %v1060
    %1154 = vmatpush.msra.mxu0 %v1058
    %1155 = vmatpush.msra.mxu0 %v1056
    %1156 = vmatpush.msra.mxu0 %v1054
    %1157 = vmatmul.f32.gmra.mxu0 %v1077
    %v1158 = vpop.f32.mrf.mxu0
    %v1159 = vadd.f32 %v1073, %v1158
    %1160 = vmatmul.f32.gmra.mxu0 %v1080
    %v1161 = vpop.f32.mrf.mxu0
    %v1162 = vadd.f32 %v1073, %v1161
    %1163 = vmatmul.f32.gmra.mxu0 %v1083
    %v1164 = vpop.f32.mrf.mxu0
    %v1165 = vadd.f32 %v1073, %v1164
    %1166 = vmatmul.f32.gmra.mxu0 %v1086
    %v1167 = vpop.f32.mrf.mxu0
    %v1168 = vadd.f32 %v1073, %v1167
    %1169 = vmatmul.f32.gmra.mxu0 %v1089
    %v1170 = vpop.f32.mrf.mxu0
    %v1171 = vadd.f32 %v1073, %v1170
    %1172 = vmatmul.f32.gmra.mxu0 %v1092
    %v1173 = vpop.f32.mrf.mxu0
    %v1174 = vadd.f32 %v1073, %v1173
    %1175 = vmatmul.f32.gmra.mxu0 %v1095
    %v1176 = vpop.f32.mrf.mxu0
    %v1177 = vadd.f32 %v1073, %v1176
    %1178 = vmatmul.f32.gmra.mxu0 %v1098
    %v1179 = vpop.f32.mrf.mxu0
    %v1180 = vadd.f32 %v1073, %v1179
    %1181 = vdwg.mxu0
    %1182 = vst [vmem:[#allocation2] sm:$0xff] %v1118
    %1183 = vst.msk [vmem:[#allocation2 + $0x8] sm:$0xff] %vm257, %v1159
    %1184 = vst [vmem:[#allocation2 + $0x10] sm:$0xff] %v1121
    %1185 = vst.msk [vmem:[#allocation2 + $0x18] sm:$0xff] %vm257, %v1162
    %1186 = vst [vmem:[#allocation2 + $0x20] sm:$0xff] %v1124
    %1187 = vst.msk [vmem:[#allocation2 + $0x28] sm:$0xff] %vm257, %v1165
    %1188 = vst [vmem:[#allocation2 + $0x30] sm:$0xff] %v1127
    %1189 = vst.msk [vmem:[#allocation2 + $0x38] sm:$0xff] %vm257, %v1168
    %1190 = vst [vmem:[#allocation2 + $0x40] sm:$0xff] %v1130
    %1191 = vst.msk [vmem:[#allocation2 + $0x48] sm:$0xff] %vm257, %v1171
    %1192 = vst [vmem:[#allocation2 + $0x50] sm:$0xff] %v1133
    %1193 = vst.msk [vmem:[#allocation2 + $0x58] sm:$0xff] %vm257, %v1174
    %1194 = vst [vmem:[#allocation2 + $0x60] sm:$0xff] %v1136
    %1195 = vst.msk [vmem:[#allocation2 + $0x68] sm:$0xff] %vm257, %v1177
    %1196 = vst [vmem:[#allocation2 + $0x70] sm:$0xff] %v1139
    %1197 = vst.msk [vmem:[#allocation2 + $0x78] sm:$0xff] %vm257, %v1180
    %s1198 = scalar_lea.vmem [#allocation10], 128
    %v1199 = vld [vmem:[%s1198] sm:$0xff]
    %v1200 = vld [vmem:[%s1198 + $0x8] sm:$0xff]
    %v1201 = vld [vmem:[%s1198 + $0x10] sm:$0xff]
    %v1202 = vld [vmem:[%s1198 + $0x18] sm:$0xff]
    %v1203 = vld [vmem:[%s1198 + $0x20] sm:$0xff]
    %v1204 = vld [vmem:[%s1198 + $0x28] sm:$0xff]
    %v1205 = vld [vmem:[%s1198 + $0x30] sm:$0xff]
    %v1206 = vld [vmem:[%s1198 + $0x38] sm:$0xff]
    %v1207 = vld [vmem:[%s1198 + $0x40] sm:$0xff]
    %v1208 = vld [vmem:[%s1198 + $0x48] sm:$0xff]
    %v1209 = vld [vmem:[%s1198 + $0x50] sm:$0xff]
    %v1210 = vld [vmem:[%s1198 + $0x58] sm:$0xff]
    %v1211 = vld [vmem:[%s1198 + $0x60] sm:$0xff]
    %v1212 = vld [vmem:[%s1198 + $0x68] sm:$0xff]
    %v1213 = vld [vmem:[%s1198 + $0x70] sm:$0xff]
    %v1214 = vld [vmem:[%s1198 + $0x78] sm:$0xff]
    %s1215 = scalar_lea.vmem %s6, 1
    %v1216 = vld [vmem:[%s1215] sm:$0x1]
    %v1218 = vperm.slane %v1216, 0
    %v1220 = vld [vmem:[%s295] sm:$0xff]
    %v1221 = vld [vmem:[%s295 + $0x8] sm:$0xff]
    %v1222 = vld [vmem:[%s300] sm:$0xff]
    %v1223 = vld [vmem:[%s300 + $0x8] sm:$0xff]
    %v1224 = vsel %vm129, %v1220, %v1222
    %v1225 = vsel %vm130, %v1221, %v1223
    %1226 = vmatpush.msra.mxu0 0.0
    %1227 = vmatpush.msra.mxu0 0.0
    %1228 = vmatpush.msra.mxu0 0.0
    %1229 = vmatpush.msra.mxu0 0.0
    %1230 = vmatpush.msra.mxu0 0.0
    %1231 = vmatpush.msra.mxu0 0.0
    %1232 = vmatpush.msra.mxu0 0.0
    %1233 = vmatpush.msra.mxu0 0.0
    %1234 = vmatpush.msra.mxu0 %v1213
    %1235 = vmatpush.msra.mxu0 %v1211
    %1236 = vmatpush.msra.mxu0 %v1209
    %1237 = vmatpush.msra.mxu0 %v1207
    %1238 = vmatpush.msra.mxu0 %v1205
    %1239 = vmatpush.msra.mxu0 %v1203
    %1240 = vmatpush.msra.mxu0 %v1201
    %1241 = vmatpush.msra.mxu0 %v1199
    %1242 = vmatmul.f32.gmra.mxu0 %v306
    %v1243 = vpop.f32.mrf.mxu0
    %v1244 = vadd.f32 0.0, %v1243
    %1245 = vdwg.mxu0
    %1246 = vmatpush.msra.mxu0 0.0
    %1247 = vmatpush.msra.mxu0 0.0
    %1248 = vmatpush.msra.mxu0 0.0
    %1249 = vmatpush.msra.mxu0 0.0
    %1250 = vmatpush.msra.mxu0 0.0
    %1251 = vmatpush.msra.mxu0 0.0
    %1252 = vmatpush.msra.mxu0 0.0
    %1253 = vmatpush.msra.mxu0 0.0
    %1254 = vmatpush.msra.mxu0 %v1214
    %1255 = vmatpush.msra.mxu0 %v1212
    %1256 = vmatpush.msra.mxu0 %v1210
    %1257 = vmatpush.msra.mxu0 %v1208
    %1258 = vmatpush.msra.mxu0 %v1206
    %1259 = vmatpush.msra.mxu0 %v1204
    %1260 = vmatpush.msra.mxu0 %v1202
    %1261 = vmatpush.msra.mxu0 %v1200
    %1262 = vmatmul.f32.gmra.mxu0 %v306
    %v1263 = vpop.f32.mrf.mxu0
    %v1264 = vadd.f32 0.0, %v1263
    %1265 = vdwg.mxu0
    %v1266 = vadd.f32 %v1224, %v1244
    %v1267 = vxor.u32 %v1266, 2147483648
    %v1268 = vmul.f32 %v1267, 1.442695
    %v1269 = vpow.pop %v1268
    %v1270 = vadd.f32 %v1269, 1.0
    %v1271 = vrcp.pop %v1270
    %v1272 = vmul.f32 %v1270, %v1271
    %v1273 = vsub.f32 1.0, %v1272
    %v1274 = vmul.f32 %v1271, %v1273
    %v1275 = vadd.f32 %v1271, %v1274
    %vm1276 = vweird.f32 %v1270
    %vm1277 = vweird.f32 %v1271
    %vm1278 = vmor %vm1276, %vm1277
    %v1279 = vsel %vm1278, %v1271, %v1275
    %v1280 = vand.u32 2147483647, %v1270
    %vm1281 = vcmp.eq.f32.partialorder %v1280, 8.507059e+37
    %v1282 = vand.u32 %v1270, 2147483648
    %v1283 = vor.u32 1.1754944e-38, %v1282
    %v1284 = vsel %vm1281, %v1283, %v1279
    %v1285 = vmul.f32 1.0, %v1284
    %v1286 = vadd.f32 %v1264, %v1218
    %v1287 = vmul.f32 %v1285, %v1286
    %v1288 = vadd.f32 %v1225, %v1287
    %v1289 = vtanh.pop %v1288
    %v1290 = vsub.f32 0.0, %v1289
    %1292 = vrot.lane.b32.xlu0 %v1290, 64
    %v1293 = vpop.permute.xlu0 %1292
    %v1295 = vmul.f32 %v1285, %v1293
    %1297 = vrot.lane.b32.xlu0 %v1295, 64
    %v1298 = vpop.permute.xlu0 %1297
    %v1300 = vadd.f32 %v1289, %v1298
    %v1301 = vld [vmem:[%s1] sm:$0xff]
    %vm1302 = vcmp.gt.f32.partialorder %v1301, 0.0
    %v1303 = vsel %vm1302, %v1300, 0.0
    %1304 = vst.msk [vmem:[#allocation3] sm:$0xff] %vm386, %v1303
    %1305 = vst.msk [vmem:[%s388] sm:$0xff] %vm389, %v1303
    %v1306 = vld [vmem:[%s393] sm:$0xff]
    %v1307 = vld [vmem:[%s393 + $0x8] sm:$0xff]
    %v1308 = vld [vmem:[%s398] sm:$0xff]
    %v1309 = vld [vmem:[%s398 + $0x8] sm:$0xff]
    %v1310 = vsel %vm129, %v1306, %v1308
    %v1311 = vsel %vm130, %v1307, %v1309
    %v1313 = vsel %vm257, %v1303, 0
    %1315 = vmatpush.msra.mxu0 0.0
    %1316 = vmatpush.msra.mxu0 0.0
    %1317 = vmatpush.msra.mxu0 0.0
    %1318 = vmatpush.msra.mxu0 0.0
    %1319 = vmatpush.msra.mxu0 0.0
    %1320 = vmatpush.msra.mxu0 0.0
    %1321 = vmatpush.msra.mxu0 0.0
    %1322 = vmatpush.msra.mxu0 0.0
    %1323 = vmatpush.msra.mxu0 %v1213
    %1324 = vmatpush.msra.mxu0 %v1211
    %1325 = vmatpush.msra.mxu0 %v1209
    %1326 = vmatpush.msra.mxu0 %v1207
    %1327 = vmatpush.msra.mxu0 %v1205
    %1328 = vmatpush.msra.mxu0 %v1203
    %1329 = vmatpush.msra.mxu0 %v1201
    %1330 = vmatpush.msra.mxu0 %v1199
    %1331 = vmatmul.f32.gmra.mxu0 %v1313
    %v1332 = vpop.f32.mrf.mxu0
    %v1333 = vadd.f32 0.0, %v1332
    %1334 = vdwg.mxu0
    %1335 = vmatpush.msra.mxu0 0.0
    %1336 = vmatpush.msra.mxu0 0.0
    %1337 = vmatpush.msra.mxu0 0.0
    %1338 = vmatpush.msra.mxu0 0.0
    %1339 = vmatpush.msra.mxu0 0.0
    %1340 = vmatpush.msra.mxu0 0.0
    %1341 = vmatpush.msra.mxu0 0.0
    %1342 = vmatpush.msra.mxu0 0.0
    %1343 = vmatpush.msra.mxu0 %v1214
    %1344 = vmatpush.msra.mxu0 %v1212
    %1345 = vmatpush.msra.mxu0 %v1210
    %1346 = vmatpush.msra.mxu0 %v1208
    %1347 = vmatpush.msra.mxu0 %v1206
    %1348 = vmatpush.msra.mxu0 %v1204
    %1349 = vmatpush.msra.mxu0 %v1202
    %1350 = vmatpush.msra.mxu0 %v1200
    %1351 = vmatmul.f32.gmra.mxu0 %v1313
    %v1352 = vpop.f32.mrf.mxu0
    %v1353 = vadd.f32 0.0, %v1352
    %1354 = vdwg.mxu0
    %v1355 = vadd.f32 %v1310, %v1333
    %v1356 = vxor.u32 %v1355, 2147483648
    %v1357 = vmul.f32 %v1356, 1.442695
    %v1358 = vpow.pop %v1357
    %v1359 = vadd.f32 %v1358, 1.0
    %v1360 = vrcp.pop %v1359
    %v1361 = vmul.f32 %v1359, %v1360
    %v1362 = vsub.f32 1.0, %v1361
    %v1363 = vmul.f32 %v1360, %v1362
    %v1364 = vadd.f32 %v1360, %v1363
    %vm1365 = vweird.f32 %v1359
    %vm1366 = vweird.f32 %v1360
    %vm1367 = vmor %vm1365, %vm1366
    %v1368 = vsel %vm1367, %v1360, %v1364
    %v1369 = vand.u32 2147483647, %v1359
    %vm1370 = vcmp.eq.f32.partialorder %v1369, 8.507059e+37
    %v1371 = vand.u32 %v1359, 2147483648
    %v1372 = vor.u32 1.1754944e-38, %v1371
    %v1373 = vsel %vm1370, %v1372, %v1368
    %v1374 = vmul.f32 1.0, %v1373
    %v1375 = vadd.f32 %v1353, %v1218
    %v1376 = vmul.f32 %v1374, %v1375
    %v1377 = vadd.f32 %v1311, %v1376
    %v1378 = vtanh.pop %v1377
    %v1379 = vsub.f32 %v1303, %v1378
    %1381 = vrot.lane.b32.xlu0 %v1379, 64
    %v1382 = vpop.permute.xlu0 %1381
    %v1384 = vmul.f32 %v1374, %v1382
    %1386 = vrot.lane.b32.xlu0 %v1384, 64
    %v1387 = vpop.permute.xlu0 %1386
    %v1389 = vadd.f32 %v1378, %v1387
    %v1390 = vld [vmem:[%s481] sm:$0xff]
    %vm1391 = vcmp.gt.f32.partialorder %v1390, 0.0
    %v1392 = vsel %vm1391, %v1389, %v1303
    %1393 = vst.msk [vmem:[%s485] sm:$0xff] %vm386, %v1392
    %1394 = vst.msk [vmem:[%s487] sm:$0xff] %vm389, %v1392
    %v1395 = vld [vmem:[%s491] sm:$0xff]
    %v1396 = vld [vmem:[%s491 + $0x8] sm:$0xff]
    %v1397 = vld [vmem:[%s496] sm:$0xff]
    %v1398 = vld [vmem:[%s496 + $0x8] sm:$0xff]
    %v1399 = vsel %vm129, %v1395, %v1397
    %v1400 = vsel %vm130, %v1396, %v1398
    %v1402 = vsel %vm257, %v1392, 0
    %1404 = vmatpush.msra.mxu0 0.0
    %1405 = vmatpush.msra.mxu0 0.0
    %1406 = vmatpush.msra.mxu0 0.0
    %1407 = vmatpush.msra.mxu0 0.0
    %1408 = vmatpush.msra.mxu0 0.0
    %1409 = vmatpush.msra.mxu0 0.0
    %1410 = vmatpush.msra.mxu0 0.0
    %1411 = vmatpush.msra.mxu0 0.0
    %1412 = vmatpush.msra.mxu0 %v1213
    %1413 = vmatpush.msra.mxu0 %v1211
    %1414 = vmatpush.msra.mxu0 %v1209
    %1415 = vmatpush.msra.mxu0 %v1207
    %1416 = vmatpush.msra.mxu0 %v1205
    %1417 = vmatpush.msra.mxu0 %v1203
    %1418 = vmatpush.msra.mxu0 %v1201
    %1419 = vmatpush.msra.mxu0 %v1199
    %1420 = vmatmul.f32.gmra.mxu0 %v1402
    %v1421 = vpop.f32.mrf.mxu0
    %v1422 = vadd.f32 0.0, %v1421
    %1423 = vdwg.mxu0
    %1424 = vmatpush.msra.mxu0 0.0
    %1425 = vmatpush.msra.mxu0 0.0
    %1426 = vmatpush.msra.mxu0 0.0
    %1427 = vmatpush.msra.mxu0 0.0
    %1428 = vmatpush.msra.mxu0 0.0
    %1429 = vmatpush.msra.mxu0 0.0
    %1430 = vmatpush.msra.mxu0 0.0
    %1431 = vmatpush.msra.mxu0 0.0
    %1432 = vmatpush.msra.mxu0 %v1214
    %1433 = vmatpush.msra.mxu0 %v1212
    %1434 = vmatpush.msra.mxu0 %v1210
    %1435 = vmatpush.msra.mxu0 %v1208
    %1436 = vmatpush.msra.mxu0 %v1206
    %1437 = vmatpush.msra.mxu0 %v1204
    %1438 = vmatpush.msra.mxu0 %v1202
    %1439 = vmatpush.msra.mxu0 %v1200
    %1440 = vmatmul.f32.gmra.mxu0 %v1402
    %v1441 = vpop.f32.mrf.mxu0
    %v1442 = vadd.f32 0.0, %v1441
    %1443 = vdwg.mxu0
    %v1444 = vadd.f32 %v1399, %v1422
    %v1445 = vxor.u32 %v1444, 2147483648
    %v1446 = vmul.f32 %v1445, 1.442695
    %v1447 = vpow.pop %v1446
    %v1448 = vadd.f32 %v1447, 1.0
    %v1449 = vrcp.pop %v1448
    %v1450 = vmul.f32 %v1448, %v1449
    %v1451 = vsub.f32 1.0, %v1450
    %v1452 = vmul.f32 %v1449, %v1451
    %v1453 = vadd.f32 %v1449, %v1452
    %vm1454 = vweird.f32 %v1448
    %vm1455 = vweird.f32 %v1449
    %vm1456 = vmor %vm1454, %vm1455
    %v1457 = vsel %vm1456, %v1449, %v1453
    %v1458 = vand.u32 2147483647, %v1448
    %vm1459 = vcmp.eq.f32.partialorder %v1458, 8.507059e+37
    %v1460 = vand.u32 %v1448, 2147483648
    %v1461 = vor.u32 1.1754944e-38, %v1460
    %v1462 = vsel %vm1459, %v1461, %v1457
    %v1463 = vmul.f32 1.0, %v1462
    %v1464 = vadd.f32 %v1442, %v1218
    %v1465 = vmul.f32 %v1463, %v1464
    %v1466 = vadd.f32 %v1400, %v1465
    %v1467 = vtanh.pop %v1466
    %v1468 = vsub.f32 %v1392, %v1467
    %1470 = vrot.lane.b32.xlu0 %v1468, 64
    %v1471 = vpop.permute.xlu0 %1470
    %v1473 = vmul.f32 %v1463, %v1471
    %1475 = vrot.lane.b32.xlu0 %v1473, 64
    %v1476 = vpop.permute.xlu0 %1475
    %v1478 = vadd.f32 %v1467, %v1476
    %v1479 = vld [vmem:[%s579] sm:$0xff]
    %vm1480 = vcmp.gt.f32.partialorder %v1479, 0.0
    %v1481 = vsel %vm1480, %v1478, %v1392
    %1482 = vst.msk [vmem:[%s583] sm:$0xff] %vm386, %v1481
    %1483 = vst.msk [vmem:[%s585] sm:$0xff] %vm389, %v1481
    %v1484 = vld [vmem:[%s589] sm:$0xff]
    %v1485 = vld [vmem:[%s589 + $0x8] sm:$0xff]
    %v1486 = vld [vmem:[%s594] sm:$0xff]
    %v1487 = vld [vmem:[%s594 + $0x8] sm:$0xff]
    %v1488 = vsel %vm129, %v1484, %v1486
    %v1489 = vsel %vm130, %v1485, %v1487
    %v1491 = vsel %vm257, %v1481, 0
    %1493 = vmatpush.msra.mxu0 0.0
    %1494 = vmatpush.msra.mxu0 0.0
    %1495 = vmatpush.msra.mxu0 0.0
    %1496 = vmatpush.msra.mxu0 0.0
    %1497 = vmatpush.msra.mxu0 0.0
    %1498 = vmatpush.msra.mxu0 0.0
    %1499 = vmatpush.msra.mxu0 0.0
    %1500 = vmatpush.msra.mxu0 0.0
    %1501 = vmatpush.msra.mxu0 %v1213
    %1502 = vmatpush.msra.mxu0 %v1211
    %1503 = vmatpush.msra.mxu0 %v1209
    %1504 = vmatpush.msra.mxu0 %v1207
    %1505 = vmatpush.msra.mxu0 %v1205
    %1506 = vmatpush.msra.mxu0 %v1203
    %1507 = vmatpush.msra.mxu0 %v1201
    %1508 = vmatpush.msra.mxu0 %v1199
    %1509 = vmatmul.f32.gmra.mxu0 %v1491
    %v1510 = vpop.f32.mrf.mxu0
    %v1511 = vadd.f32 0.0, %v1510
    %1512 = vdwg.mxu0
    %1513 = vmatpush.msra.mxu0 0.0
    %1514 = vmatpush.msra.mxu0 0.0
    %1515 = vmatpush.msra.mxu0 0.0
    %1516 = vmatpush.msra.mxu0 0.0
    %1517 = vmatpush.msra.mxu0 0.0
    %1518 = vmatpush.msra.mxu0 0.0
    %1519 = vmatpush.msra.mxu0 0.0
    %1520 = vmatpush.msra.mxu0 0.0
    %1521 = vmatpush.msra.mxu0 %v1214
    %1522 = vmatpush.msra.mxu0 %v1212
    %1523 = vmatpush.msra.mxu0 %v1210
    %1524 = vmatpush.msra.mxu0 %v1208
    %1525 = vmatpush.msra.mxu0 %v1206
    %1526 = vmatpush.msra.mxu0 %v1204
    %1527 = vmatpush.msra.mxu0 %v1202
    %1528 = vmatpush.msra.mxu0 %v1200
    %1529 = vmatmul.f32.gmra.mxu0 %v1491
    %v1530 = vpop.f32.mrf.mxu0
    %v1531 = vadd.f32 0.0, %v1530
    %1532 = vdwg.mxu0
    %v1533 = vadd.f32 %v1488, %v1511
    %v1534 = vxor.u32 %v1533, 2147483648
    %v1535 = vmul.f32 %v1534, 1.442695
    %v1536 = vpow.pop %v1535
    %v1537 = vadd.f32 %v1536, 1.0
    %v1538 = vrcp.pop %v1537
    %v1539 = vmul.f32 %v1537, %v1538
    %v1540 = vsub.f32 1.0, %v1539
    %v1541 = vmul.f32 %v1538, %v1540
    %v1542 = vadd.f32 %v1538, %v1541
    %vm1543 = vweird.f32 %v1537
    %vm1544 = vweird.f32 %v1538
    %vm1545 = vmor %vm1543, %vm1544
    %v1546 = vsel %vm1545, %v1538, %v1542
    %v1547 = vand.u32 2147483647, %v1537
    %vm1548 = vcmp.eq.f32.partialorder %v1547, 8.507059e+37
    %v1549 = vand.u32 %v1537, 2147483648
    %v1550 = vor.u32 1.1754944e-38, %v1549
    %v1551 = vsel %vm1548, %v1550, %v1546
    %v1552 = vmul.f32 1.0, %v1551
    %v1553 = vadd.f32 %v1531, %v1218
    %v1554 = vmul.f32 %v1552, %v1553
    %v1555 = vadd.f32 %v1489, %v1554
    %v1556 = vtanh.pop %v1555
    %v1557 = vsub.f32 %v1481, %v1556
    %1559 = vrot.lane.b32.xlu0 %v1557, 64
    %v1560 = vpop.permute.xlu0 %1559
    %v1562 = vmul.f32 %v1552, %v1560
    %1564 = vrot.lane.b32.xlu0 %v1562, 64
    %v1565 = vpop.permute.xlu0 %1564
    %v1567 = vadd.f32 %v1556, %v1565
    %v1568 = vld [vmem:[%s677] sm:$0xff]
    %vm1569 = vcmp.gt.f32.partialorder %v1568, 0.0
    %v1570 = vsel %vm1569, %v1567, %v1481
    %1571 = vst.msk [vmem:[%s681] sm:$0xff] %vm386, %v1570
    %1572 = vst.msk [vmem:[%s683] sm:$0xff] %vm389, %v1570
    %v1573 = vld [vmem:[%s594] sm:$0xff]
    %v1574 = vld [vmem:[%s594 + $0x8] sm:$0xff]
    %v1575 = vld [vmem:[%s589] sm:$0xff]
    %v1576 = vld [vmem:[%s589 + $0x8] sm:$0xff]
    %v1577 = vsel %vm129, %v1573, %v1575
    %v1578 = vsel %vm130, %v1574, %v1576
    %v1580 = vsel %vm257, %v1570, 0
    %1582 = vmatpush.msra.mxu0 0.0
    %1583 = vmatpush.msra.mxu0 0.0
    %1584 = vmatpush.msra.mxu0 0.0
    %1585 = vmatpush.msra.mxu0 0.0
    %1586 = vmatpush.msra.mxu0 0.0
    %1587 = vmatpush.msra.mxu0 0.0
    %1588 = vmatpush.msra.mxu0 0.0
    %1589 = vmatpush.msra.mxu0 0.0
    %1590 = vmatpush.msra.mxu0 %v1213
    %1591 = vmatpush.msra.mxu0 %v1211
    %1592 = vmatpush.msra.mxu0 %v1209
    %1593 = vmatpush.msra.mxu0 %v1207
    %1594 = vmatpush.msra.mxu0 %v1205
    %1595 = vmatpush.msra.mxu0 %v1203
    %1596 = vmatpush.msra.mxu0 %v1201
    %1597 = vmatpush.msra.mxu0 %v1199
    %1598 = vmatmul.f32.gmra.mxu0 %v1580
    %v1599 = vpop.f32.mrf.mxu0
    %v1600 = vadd.f32 0.0, %v1599
    %1601 = vdwg.mxu0
    %1602 = vmatpush.msra.mxu0 0.0
    %1603 = vmatpush.msra.mxu0 0.0
    %1604 = vmatpush.msra.mxu0 0.0
    %1605 = vmatpush.msra.mxu0 0.0
    %1606 = vmatpush.msra.mxu0 0.0
    %1607 = vmatpush.msra.mxu0 0.0
    %1608 = vmatpush.msra.mxu0 0.0
    %1609 = vmatpush.msra.mxu0 0.0
    %1610 = vmatpush.msra.mxu0 %v1214
    %1611 = vmatpush.msra.mxu0 %v1212
    %1612 = vmatpush.msra.mxu0 %v1210
    %1613 = vmatpush.msra.mxu0 %v1208
    %1614 = vmatpush.msra.mxu0 %v1206
    %1615 = vmatpush.msra.mxu0 %v1204
    %1616 = vmatpush.msra.mxu0 %v1202
    %1617 = vmatpush.msra.mxu0 %v1200
    %1618 = vmatmul.f32.gmra.mxu0 %v1580
    %v1619 = vpop.f32.mrf.mxu0
    %v1620 = vadd.f32 0.0, %v1619
    %1621 = vdwg.mxu0
    %v1622 = vadd.f32 %v1577, %v1600
    %v1623 = vxor.u32 %v1622, 2147483648
    %v1624 = vmul.f32 %v1623, 1.442695
    %v1625 = vpow.pop %v1624
    %v1626 = vadd.f32 %v1625, 1.0
    %v1627 = vrcp.pop %v1626
    %v1628 = vmul.f32 %v1626, %v1627
    %v1629 = vsub.f32 1.0, %v1628
    %v1630 = vmul.f32 %v1627, %v1629
    %v1631 = vadd.f32 %v1627, %v1630
    %vm1632 = vweird.f32 %v1626
    %vm1633 = vweird.f32 %v1627
    %vm1634 = vmor %vm1632, %vm1633
    %v1635 = vsel %vm1634, %v1627, %v1631
    %v1636 = vand.u32 2147483647, %v1626
    %vm1637 = vcmp.eq.f32.partialorder %v1636, 8.507059e+37
    %v1638 = vand.u32 %v1626, 2147483648
    %v1639 = vor.u32 1.1754944e-38, %v1638
    %v1640 = vsel %vm1637, %v1639, %v1635
    %v1641 = vmul.f32 1.0, %v1640
    %v1642 = vadd.f32 %v1620, %v1218
    %v1643 = vmul.f32 %v1641, %v1642
    %v1644 = vadd.f32 %v1578, %v1643
    %v1645 = vtanh.pop %v1644
    %v1646 = vsub.f32 %v1570, %v1645
    %1648 = vrot.lane.b32.xlu0 %v1646, 64
    %v1649 = vpop.permute.xlu0 %1648
    %v1651 = vmul.f32 %v1641, %v1649
    %1653 = vrot.lane.b32.xlu0 %v1651, 64
    %v1654 = vpop.permute.xlu0 %1653
    %v1656 = vadd.f32 %v1645, %v1654
    %v1657 = vld [vmem:[%s769] sm:$0xff]
    %vm1658 = vcmp.gt.f32.partialorder %v1657, 0.0
    %v1659 = vsel %vm1658, %v1656, %v1570
    %1660 = vst.msk [vmem:[%s683] sm:$0xff] %vm386, %v1659
    %1661 = vst.msk [vmem:[%s681] sm:$0xff] %vm389, %v1659
    %v1662 = vld [vmem:[%s496] sm:$0xff]
    %v1663 = vld [vmem:[%s496 + $0x8] sm:$0xff]
    %v1664 = vld [vmem:[%s491] sm:$0xff]
    %v1665 = vld [vmem:[%s491 + $0x8] sm:$0xff]
    %v1666 = vsel %vm129, %v1662, %v1664
    %v1667 = vsel %vm130, %v1663, %v1665
    %v1669 = vsel %vm257, %v1659, 0
    %1671 = vmatpush.msra.mxu0 0.0
    %1672 = vmatpush.msra.mxu0 0.0
    %1673 = vmatpush.msra.mxu0 0.0
    %1674 = vmatpush.msra.mxu0 0.0
    %1675 = vmatpush.msra.mxu0 0.0
    %1676 = vmatpush.msra.mxu0 0.0
    %1677 = vmatpush.msra.mxu0 0.0
    %1678 = vmatpush.msra.mxu0 0.0
    %1679 = vmatpush.msra.mxu0 %v1213
    %1680 = vmatpush.msra.mxu0 %v1211
    %1681 = vmatpush.msra.mxu0 %v1209
    %1682 = vmatpush.msra.mxu0 %v1207
    %1683 = vmatpush.msra.mxu0 %v1205
    %1684 = vmatpush.msra.mxu0 %v1203
    %1685 = vmatpush.msra.mxu0 %v1201
    %1686 = vmatpush.msra.mxu0 %v1199
    %1687 = vmatmul.f32.gmra.mxu0 %v1669
    %v1688 = vpop.f32.mrf.mxu0
    %v1689 = vadd.f32 0.0, %v1688
    %1690 = vdwg.mxu0
    %1691 = vmatpush.msra.mxu0 0.0
    %1692 = vmatpush.msra.mxu0 0.0
    %1693 = vmatpush.msra.mxu0 0.0
    %1694 = vmatpush.msra.mxu0 0.0
    %1695 = vmatpush.msra.mxu0 0.0
    %1696 = vmatpush.msra.mxu0 0.0
    %1697 = vmatpush.msra.mxu0 0.0
    %1698 = vmatpush.msra.mxu0 0.0
    %1699 = vmatpush.msra.mxu0 %v1214
    %1700 = vmatpush.msra.mxu0 %v1212
    %1701 = vmatpush.msra.mxu0 %v1210
    %1702 = vmatpush.msra.mxu0 %v1208
    %1703 = vmatpush.msra.mxu0 %v1206
    %1704 = vmatpush.msra.mxu0 %v1204
    %1705 = vmatpush.msra.mxu0 %v1202
    %1706 = vmatpush.msra.mxu0 %v1200
    %1707 = vmatmul.f32.gmra.mxu0 %v1669
    %v1708 = vpop.f32.mrf.mxu0
    %v1709 = vadd.f32 0.0, %v1708
    %1710 = vdwg.mxu0
    %v1711 = vadd.f32 %v1666, %v1689
    %v1712 = vxor.u32 %v1711, 2147483648
    %v1713 = vmul.f32 %v1712, 1.442695
    %v1714 = vpow.pop %v1713
    %v1715 = vadd.f32 %v1714, 1.0
    %v1716 = vrcp.pop %v1715
    %v1717 = vmul.f32 %v1715, %v1716
    %v1718 = vsub.f32 1.0, %v1717
    %v1719 = vmul.f32 %v1716, %v1718
    %v1720 = vadd.f32 %v1716, %v1719
    %vm1721 = vweird.f32 %v1715
    %vm1722 = vweird.f32 %v1716
    %vm1723 = vmor %vm1721, %vm1722
    %v1724 = vsel %vm1723, %v1716, %v1720
    %v1725 = vand.u32 2147483647, %v1715
    %vm1726 = vcmp.eq.f32.partialorder %v1725, 8.507059e+37
    %v1727 = vand.u32 %v1715, 2147483648
    %v1728 = vor.u32 1.1754944e-38, %v1727
    %v1729 = vsel %vm1726, %v1728, %v1724
    %v1730 = vmul.f32 1.0, %v1729
    %v1731 = vadd.f32 %v1709, %v1218
    %v1732 = vmul.f32 %v1730, %v1731
    %v1733 = vadd.f32 %v1667, %v1732
    %v1734 = vtanh.pop %v1733
    %v1735 = vsub.f32 %v1659, %v1734
    %1737 = vrot.lane.b32.xlu0 %v1735, 64
    %v1738 = vpop.permute.xlu0 %1737
    %v1740 = vmul.f32 %v1730, %v1738
    %1742 = vrot.lane.b32.xlu0 %v1740, 64
    %v1743 = vpop.permute.xlu0 %1742
    %v1745 = vadd.f32 %v1734, %v1743
    %v1746 = vld [vmem:[%s859] sm:$0xff]
    %vm1747 = vcmp.gt.f32.partialorder %v1746, 0.0
    %v1748 = vsel %vm1747, %v1745, %v1659
    %1749 = vst.msk [vmem:[%s585] sm:$0xff] %vm386, %v1748
    %1750 = vst.msk [vmem:[%s583] sm:$0xff] %vm389, %v1748
    %v1751 = vld [vmem:[%s398] sm:$0xff]
    %v1752 = vld [vmem:[%s398 + $0x8] sm:$0xff]
    %v1753 = vld [vmem:[%s393] sm:$0xff]
    %v1754 = vld [vmem:[%s393 + $0x8] sm:$0xff]
    %v1755 = vsel %vm129, %v1751, %v1753
    %v1756 = vsel %vm130, %v1752, %v1754
    %v1758 = vsel %vm257, %v1748, 0
    %1760 = vmatpush.msra.mxu0 0.0
    %1761 = vmatpush.msra.mxu0 0.0
    %1762 = vmatpush.msra.mxu0 0.0
    %1763 = vmatpush.msra.mxu0 0.0
    %1764 = vmatpush.msra.mxu0 0.0
    %1765 = vmatpush.msra.mxu0 0.0
    %1766 = vmatpush.msra.mxu0 0.0
    %1767 = vmatpush.msra.mxu0 0.0
    %1768 = vmatpush.msra.mxu0 %v1213
    %1769 = vmatpush.msra.mxu0 %v1211
    %1770 = vmatpush.msra.mxu0 %v1209
    %1771 = vmatpush.msra.mxu0 %v1207
    %1772 = vmatpush.msra.mxu0 %v1205
    %1773 = vmatpush.msra.mxu0 %v1203
    %1774 = vmatpush.msra.mxu0 %v1201
    %1775 = vmatpush.msra.mxu0 %v1199
    %1776 = vmatmul.f32.gmra.mxu0 %v1758
    %v1777 = vpop.f32.mrf.mxu0
    %v1778 = vadd.f32 0.0, %v1777
    %1779 = vdwg.mxu0
    %1780 = vmatpush.msra.mxu0 0.0
    %1781 = vmatpush.msra.mxu0 0.0
    %1782 = vmatpush.msra.mxu0 0.0
    %1783 = vmatpush.msra.mxu0 0.0
    %1784 = vmatpush.msra.mxu0 0.0
    %1785 = vmatpush.msra.mxu0 0.0
    %1786 = vmatpush.msra.mxu0 0.0
    %1787 = vmatpush.msra.mxu0 0.0
    %1788 = vmatpush.msra.mxu0 %v1214
    %1789 = vmatpush.msra.mxu0 %v1212
    %1790 = vmatpush.msra.mxu0 %v1210
    %1791 = vmatpush.msra.mxu0 %v1208
    %1792 = vmatpush.msra.mxu0 %v1206
    %1793 = vmatpush.msra.mxu0 %v1204
    %1794 = vmatpush.msra.mxu0 %v1202
    %1795 = vmatpush.msra.mxu0 %v1200
    %1796 = vmatmul.f32.gmra.mxu0 %v1758
    %v1797 = vpop.f32.mrf.mxu0
    %v1798 = vadd.f32 0.0, %v1797
    %1799 = vdwg.mxu0
    %v1800 = vadd.f32 %v1755, %v1778
    %v1801 = vxor.u32 %v1800, 2147483648
    %v1802 = vmul.f32 %v1801, 1.442695
    %v1803 = vpow.pop %v1802
    %v1804 = vadd.f32 %v1803, 1.0
    %v1805 = vrcp.pop %v1804
    %v1806 = vmul.f32 %v1804, %v1805
    %v1807 = vsub.f32 1.0, %v1806
    %v1808 = vmul.f32 %v1805, %v1807
    %v1809 = vadd.f32 %v1805, %v1808
    %vm1810 = vweird.f32 %v1804
    %vm1811 = vweird.f32 %v1805
    %vm1812 = vmor %vm1810, %vm1811
    %v1813 = vsel %vm1812, %v1805, %v1809
    %v1814 = vand.u32 2147483647, %v1804
    %vm1815 = vcmp.eq.f32.partialorder %v1814, 8.507059e+37
    %v1816 = vand.u32 %v1804, 2147483648
    %v1817 = vor.u32 1.1754944e-38, %v1816
    %v1818 = vsel %vm1815, %v1817, %v1813
    %v1819 = vmul.f32 1.0, %v1818
    %v1820 = vadd.f32 %v1798, %v1218
    %v1821 = vmul.f32 %v1819, %v1820
    %v1822 = vadd.f32 %v1756, %v1821
    %v1823 = vtanh.pop %v1822
    %v1824 = vsub.f32 %v1748, %v1823
    %1826 = vrot.lane.b32.xlu0 %v1824, 64
    %v1827 = vpop.permute.xlu0 %1826
    %v1829 = vmul.f32 %v1819, %v1827
    %1831 = vrot.lane.b32.xlu0 %v1829, 64
    %v1832 = vpop.permute.xlu0 %1831
    %v1834 = vadd.f32 %v1823, %v1832
    %v1835 = vld [vmem:[%s949] sm:$0xff]
    %vm1836 = vcmp.gt.f32.partialorder %v1835, 0.0
    %v1837 = vsel %vm1836, %v1834, %v1748
    %1838 = vst.msk [vmem:[%s487] sm:$0xff] %vm386, %v1837
    %1839 = vst.msk [vmem:[%s485] sm:$0xff] %vm389, %v1837
    %v1840 = vld [vmem:[%s300] sm:$0xff]
    %v1841 = vld [vmem:[%s300 + $0x8] sm:$0xff]
    %v1842 = vld [vmem:[%s295] sm:$0xff]
    %v1843 = vld [vmem:[%s295 + $0x8] sm:$0xff]
    %v1844 = vsel %vm129, %v1840, %v1842
    %v1845 = vsel %vm130, %v1841, %v1843
    %v1847 = vsel %vm257, %v1837, 0
    %1849 = vmatpush.msra.mxu0 0.0
    %1850 = vmatpush.msra.mxu0 0.0
    %1851 = vmatpush.msra.mxu0 0.0
    %1852 = vmatpush.msra.mxu0 0.0
    %1853 = vmatpush.msra.mxu0 0.0
    %1854 = vmatpush.msra.mxu0 0.0
    %1855 = vmatpush.msra.mxu0 0.0
    %1856 = vmatpush.msra.mxu0 0.0
    %1857 = vmatpush.msra.mxu0 %v1213
    %1858 = vmatpush.msra.mxu0 %v1211
    %1859 = vmatpush.msra.mxu0 %v1209
    %1860 = vmatpush.msra.mxu0 %v1207
    %1861 = vmatpush.msra.mxu0 %v1205
    %1862 = vmatpush.msra.mxu0 %v1203
    %1863 = vmatpush.msra.mxu0 %v1201
    %1864 = vmatpush.msra.mxu0 %v1199
    %1865 = vmatmul.f32.gmra.mxu0 %v1847
    %v1866 = vpop.f32.mrf.mxu0
    %v1867 = vadd.f32 0.0, %v1866
    %1868 = vdwg.mxu0
    %1869 = vmatpush.msra.mxu0 0.0
    %1870 = vmatpush.msra.mxu0 0.0
    %1871 = vmatpush.msra.mxu0 0.0
    %1872 = vmatpush.msra.mxu0 0.0
    %1873 = vmatpush.msra.mxu0 0.0
    %1874 = vmatpush.msra.mxu0 0.0
    %1875 = vmatpush.msra.mxu0 0.0
    %1876 = vmatpush.msra.mxu0 0.0
    %1877 = vmatpush.msra.mxu0 %v1214
    %1878 = vmatpush.msra.mxu0 %v1212
    %1879 = vmatpush.msra.mxu0 %v1210
    %1880 = vmatpush.msra.mxu0 %v1208
    %1881 = vmatpush.msra.mxu0 %v1206
    %1882 = vmatpush.msra.mxu0 %v1204
    %1883 = vmatpush.msra.mxu0 %v1202
    %1884 = vmatpush.msra.mxu0 %v1200
    %1885 = vmatmul.f32.gmra.mxu0 %v1847
    %v1886 = vpop.f32.mrf.mxu0
    %v1887 = vadd.f32 0.0, %v1886
    %1888 = vdwg.mxu0
    %v1889 = vadd.f32 %v1844, %v1867
    %v1890 = vxor.u32 %v1889, 2147483648
    %v1891 = vmul.f32 %v1890, 1.442695
    %v1892 = vpow.pop %v1891
    %v1893 = vadd.f32 %v1892, 1.0
    %v1894 = vrcp.pop %v1893
    %v1895 = vmul.f32 %v1893, %v1894
    %v1896 = vsub.f32 1.0, %v1895
    %v1897 = vmul.f32 %v1894, %v1896
    %v1898 = vadd.f32 %v1894, %v1897
    %vm1899 = vweird.f32 %v1893
    %vm1900 = vweird.f32 %v1894
    %vm1901 = vmor %vm1899, %vm1900
    %v1902 = vsel %vm1901, %v1894, %v1898
    %v1903 = vand.u32 2147483647, %v1893
    %vm1904 = vcmp.eq.f32.partialorder %v1903, 8.507059e+37
    %v1905 = vand.u32 %v1893, 2147483648
    %v1906 = vor.u32 1.1754944e-38, %v1905
    %v1907 = vsel %vm1904, %v1906, %v1902
    %v1908 = vmul.f32 1.0, %v1907
    %v1909 = vadd.f32 %v1887, %v1218
    %v1910 = vmul.f32 %v1908, %v1909
    %v1911 = vadd.f32 %v1845, %v1910
    %v1912 = vtanh.pop %v1911
    %v1913 = vsub.f32 %v1837, %v1912
    %1915 = vrot.lane.b32.xlu0 %v1913, 64
    %v1916 = vpop.permute.xlu0 %1915
    %v1918 = vmul.f32 %v1908, %v1916
    %1920 = vrot.lane.b32.xlu0 %v1918, 64
    %v1921 = vpop.permute.xlu0 %1920
    %v1923 = vadd.f32 %v1912, %v1921
    %v1924 = vld [vmem:[%s1039] sm:$0xff]
    %vm1925 = vcmp.gt.f32.partialorder %v1924, 0.0
    %v1926 = vsel %vm1925, %v1923, %v1837
    %1927 = vst.msk [vmem:[%s388] sm:$0xff] %vm386, %v1926
    %1928 = vst.msk [vmem:[#allocation3] sm:$0xff] %vm389, %v1926
    %v1929 = vld [vmem:[#allocation3] sm:$0xff]
    %v1930 = vld [vmem:[#allocation3 + $0x8] sm:$0xff]
    %v1931 = vld [vmem:[#allocation3 + $0x10] sm:$0xff]
    %v1932 = vld [vmem:[#allocation3 + $0x18] sm:$0xff]
    %v1933 = vld [vmem:[#allocation3 + $0x20] sm:$0xff]
    %v1934 = vld [vmem:[#allocation3 + $0x28] sm:$0xff]
    %v1935 = vld [vmem:[#allocation3 + $0x30] sm:$0xff]
    %v1936 = vld [vmem:[#allocation3 + $0x38] sm:$0xff]
    %s1937 = scalar_lea.vmem [#allocation8], 128
    %v1938 = vld [vmem:[%s1937] sm:$0xff]
    %v1939 = vld [vmem:[%s1937 + $0x8] sm:$0xff]
    %v1940 = vld [vmem:[%s1937 + $0x10] sm:$0xff]
    %v1941 = vld [vmem:[%s1937 + $0x18] sm:$0xff]
    %v1942 = vld [vmem:[%s1937 + $0x20] sm:$0xff]
    %v1943 = vld [vmem:[%s1937 + $0x28] sm:$0xff]
    %v1944 = vld [vmem:[%s1937 + $0x30] sm:$0xff]
    %v1945 = vld [vmem:[%s1937 + $0x38] sm:$0xff]
    %v1946 = vld [vmem:[%s1937 + $0x40] sm:$0xff]
    %v1947 = vld [vmem:[%s1937 + $0x48] sm:$0xff]
    %v1948 = vld [vmem:[%s1937 + $0x50] sm:$0xff]
    %v1949 = vld [vmem:[%s1937 + $0x58] sm:$0xff]
    %v1950 = vld [vmem:[%s1937 + $0x60] sm:$0xff]
    %v1951 = vld [vmem:[%s1937 + $0x68] sm:$0xff]
    %v1952 = vld [vmem:[%s1937 + $0x70] sm:$0xff]
    %v1953 = vld [vmem:[%s1937 + $0x78] sm:$0xff]
    %s1954 = scalar_lea.vmem %s5, 4
    %v1955 = vld [vmem:[%s1954] sm:$0x3]
    %v1957 = vperm.slane %v1955, 0
    %v1958 = vperm.slane %v1955, 1
    %v1962 = vsel %vm257, %v1929, 0
    %v1965 = vsel %vm257, %v1930, 0
    %v1968 = vsel %vm257, %v1931, 0
    %v1971 = vsel %vm257, %v1932, 0
    %v1974 = vsel %vm257, %v1933, 0
    %v1977 = vsel %vm257, %v1934, 0
    %v1980 = vsel %vm257, %v1935, 0
    %v1983 = vsel %vm257, %v1936, 0
    %1985 = vmatpush.msra.mxu0 0.0
    %1986 = vmatpush.msra.mxu0 0.0
    %1987 = vmatpush.msra.mxu0 0.0
    %1988 = vmatpush.msra.mxu0 0.0
    %1989 = vmatpush.msra.mxu0 0.0
    %1990 = vmatpush.msra.mxu0 0.0
    %1991 = vmatpush.msra.mxu0 0.0
    %1992 = vmatpush.msra.mxu0 0.0
    %1993 = vmatpush.msra.mxu0 %v1952
    %1994 = vmatpush.msra.mxu0 %v1950
    %1995 = vmatpush.msra.mxu0 %v1948
    %1996 = vmatpush.msra.mxu0 %v1946
    %1997 = vmatpush.msra.mxu0 %v1944
    %1998 = vmatpush.msra.mxu0 %v1942
    %1999 = vmatpush.msra.mxu0 %v1940
    %2000 = vmatpush.msra.mxu0 %v1938
    %2001 = vmatmul.f32.gmra.mxu0 %v1962
    %v2002 = vpop.f32.mrf.mxu0
    %v2003 = vadd.f32 %v1957, %v2002
    %2004 = vmatmul.f32.gmra.mxu0 %v1965
    %v2005 = vpop.f32.mrf.mxu0
    %v2006 = vadd.f32 %v1957, %v2005
    %2007 = vmatmul.f32.gmra.mxu0 %v1968
    %v2008 = vpop.f32.mrf.mxu0
    %v2009 = vadd.f32 %v1957, %v2008
    %2010 = vmatmul.f32.gmra.mxu0 %v1971
    %v2011 = vpop.f32.mrf.mxu0
    %v2012 = vadd.f32 %v1957, %v2011
    %2013 = vmatmul.f32.gmra.mxu0 %v1974
    %v2014 = vpop.f32.mrf.mxu0
    %v2015 = vadd.f32 %v1957, %v2014
    %2016 = vmatmul.f32.gmra.mxu0 %v1977
    %v2017 = vpop.f32.mrf.mxu0
    %v2018 = vadd.f32 %v1957, %v2017
    %2019 = vmatmul.f32.gmra.mxu0 %v1980
    %v2020 = vpop.f32.mrf.mxu0
    %v2021 = vadd.f32 %v1957, %v2020
    %2022 = vmatmul.f32.gmra.mxu0 %v1983
    %v2023 = vpop.f32.mrf.mxu0
    %v2024 = vadd.f32 %v1957, %v2023
    %2025 = vdwg.mxu0
    %2026 = vmatpush.msra.mxu0 0.0
    %2027 = vmatpush.msra.mxu0 0.0
    %2028 = vmatpush.msra.mxu0 0.0
    %2029 = vmatpush.msra.mxu0 0.0
    %2030 = vmatpush.msra.mxu0 0.0
    %2031 = vmatpush.msra.mxu0 0.0
    %2032 = vmatpush.msra.mxu0 0.0
    %2033 = vmatpush.msra.mxu0 0.0
    %2034 = vmatpush.msra.mxu0 %v1953
    %2035 = vmatpush.msra.mxu0 %v1951
    %2036 = vmatpush.msra.mxu0 %v1949
    %2037 = vmatpush.msra.mxu0 %v1947
    %2038 = vmatpush.msra.mxu0 %v1945
    %2039 = vmatpush.msra.mxu0 %v1943
    %2040 = vmatpush.msra.mxu0 %v1941
    %2041 = vmatpush.msra.mxu0 %v1939
    %2042 = vmatmul.f32.gmra.mxu0 %v1962
    %v2043 = vpop.f32.mrf.mxu0
    %v2044 = vadd.f32 %v1958, %v2043
    %2045 = vmatmul.f32.gmra.mxu0 %v1965
    %v2046 = vpop.f32.mrf.mxu0
    %v2047 = vadd.f32 %v1958, %v2046
    %2048 = vmatmul.f32.gmra.mxu0 %v1968
    %v2049 = vpop.f32.mrf.mxu0
    %v2050 = vadd.f32 %v1958, %v2049
    %2051 = vmatmul.f32.gmra.mxu0 %v1971
    %v2052 = vpop.f32.mrf.mxu0
    %v2053 = vadd.f32 %v1958, %v2052
    %2054 = vmatmul.f32.gmra.mxu0 %v1974
    %v2055 = vpop.f32.mrf.mxu0
    %v2056 = vadd.f32 %v1958, %v2055
    %2057 = vmatmul.f32.gmra.mxu0 %v1977
    %v2058 = vpop.f32.mrf.mxu0
    %v2059 = vadd.f32 %v1958, %v2058
    %2060 = vmatmul.f32.gmra.mxu0 %v1980
    %v2061 = vpop.f32.mrf.mxu0
    %v2062 = vadd.f32 %v1958, %v2061
    %2063 = vmatmul.f32.gmra.mxu0 %v1983
    %v2064 = vpop.f32.mrf.mxu0
    %v2065 = vadd.f32 %v1958, %v2064
    %2066 = vdwg.mxu0
    %2067 = vst [vmem:[#allocation2] sm:$0xff] %v2003
    %2068 = vst.msk [vmem:[#allocation2 + $0x8] sm:$0xff] %vm257, %v2044
    %2069 = vst [vmem:[#allocation2 + $0x10] sm:$0xff] %v2006
    %2070 = vst.msk [vmem:[#allocation2 + $0x18] sm:$0xff] %vm257, %v2047
    %2071 = vst [vmem:[#allocation2 + $0x20] sm:$0xff] %v2009
    %2072 = vst.msk [vmem:[#allocation2 + $0x28] sm:$0xff] %vm257, %v2050
    %2073 = vst [vmem:[#allocation2 + $0x30] sm:$0xff] %v2012
    %2074 = vst.msk [vmem:[#allocation2 + $0x38] sm:$0xff] %vm257, %v2053
    %2075 = vst [vmem:[#allocation2 + $0x40] sm:$0xff] %v2015
    %2076 = vst.msk [vmem:[#allocation2 + $0x48] sm:$0xff] %vm257, %v2056
    %2077 = vst [vmem:[#allocation2 + $0x50] sm:$0xff] %v2018
    %2078 = vst.msk [vmem:[#allocation2 + $0x58] sm:$0xff] %vm257, %v2059
    %2079 = vst [vmem:[#allocation2 + $0x60] sm:$0xff] %v2021
    %2080 = vst.msk [vmem:[#allocation2 + $0x68] sm:$0xff] %vm257, %v2062
    %2081 = vst [vmem:[#allocation2 + $0x70] sm:$0xff] %v2024
    %2082 = vst.msk [vmem:[#allocation2 + $0x78] sm:$0xff] %vm257, %v2065
    %s2083 = scalar_lea.vmem [#allocation10], 256
    %v2084 = vld [vmem:[%s2083] sm:$0xff]
    %v2085 = vld [vmem:[%s2083 + $0x8] sm:$0xff]
    %v2086 = vld [vmem:[%s2083 + $0x10] sm:$0xff]
    %v2087 = vld [vmem:[%s2083 + $0x18] sm:$0xff]
    %v2088 = vld [vmem:[%s2083 + $0x20] sm:$0xff]
    %v2089 = vld [vmem:[%s2083 + $0x28] sm:$0xff]
    %v2090 = vld [vmem:[%s2083 + $0x30] sm:$0xff]
    %v2091 = vld [vmem:[%s2083 + $0x38] sm:$0xff]
    %v2092 = vld [vmem:[%s2083 + $0x40] sm:$0xff]
    %v2093 = vld [vmem:[%s2083 + $0x48] sm:$0xff]
    %v2094 = vld [vmem:[%s2083 + $0x50] sm:$0xff]
    %v2095 = vld [vmem:[%s2083 + $0x58] sm:$0xff]
    %v2096 = vld [vmem:[%s2083 + $0x60] sm:$0xff]
    %v2097 = vld [vmem:[%s2083 + $0x68] sm:$0xff]
    %v2098 = vld [vmem:[%s2083 + $0x70] sm:$0xff]
    %v2099 = vld [vmem:[%s2083 + $0x78] sm:$0xff]
    %s2100 = scalar_lea.vmem %s6, 2
    %v2101 = vld [vmem:[%s2100] sm:$0x1]
    %v2103 = vperm.slane %v2101, 0
    %v2105 = vld [vmem:[%s295] sm:$0xff]
    %v2106 = vld [vmem:[%s295 + $0x8] sm:$0xff]
    %v2107 = vld [vmem:[%s300] sm:$0xff]
    %v2108 = vld [vmem:[%s300 + $0x8] sm:$0xff]
    %v2109 = vsel %vm129, %v2105, %v2107
    %v2110 = vsel %vm130, %v2106, %v2108
    %2111 = vmatpush.msra.mxu0 0.0
    %2112 = vmatpush.msra.mxu0 0.0
    %2113 = vmatpush.msra.mxu0 0.0
    %2114 = vmatpush.msra.mxu0 0.0
    %2115 = vmatpush.msra.mxu0 0.0
    %2116 = vmatpush.msra.mxu0 0.0
    %2117 = vmatpush.msra.mxu0 0.0
    %2118 = vmatpush.msra.mxu0 0.0
    %2119 = vmatpush.msra.mxu0 %v2098
    %2120 = vmatpush.msra.mxu0 %v2096
    %2121 = vmatpush.msra.mxu0 %v2094
    %2122 = vmatpush.msra.mxu0 %v2092
    %2123 = vmatpush.msra.mxu0 %v2090
    %2124 = vmatpush.msra.mxu0 %v2088
    %2125 = vmatpush.msra.mxu0 %v2086
    %2126 = vmatpush.msra.mxu0 %v2084
    %2127 = vmatmul.f32.gmra.mxu0 %v306
    %v2128 = vpop.f32.mrf.mxu0
    %v2129 = vadd.f32 0.0, %v2128
    %2130 = vdwg.mxu0
    %2131 = vmatpush.msra.mxu0 0.0
    %2132 = vmatpush.msra.mxu0 0.0
    %2133 = vmatpush.msra.mxu0 0.0
    %2134 = vmatpush.msra.mxu0 0.0
    %2135 = vmatpush.msra.mxu0 0.0
    %2136 = vmatpush.msra.mxu0 0.0
    %2137 = vmatpush.msra.mxu0 0.0
    %2138 = vmatpush.msra.mxu0 0.0
    %2139 = vmatpush.msra.mxu0 %v2099
    %2140 = vmatpush.msra.mxu0 %v2097
    %2141 = vmatpush.msra.mxu0 %v2095
    %2142 = vmatpush.msra.mxu0 %v2093
    %2143 = vmatpush.msra.mxu0 %v2091
    %2144 = vmatpush.msra.mxu0 %v2089
    %2145 = vmatpush.msra.mxu0 %v2087
    %2146 = vmatpush.msra.mxu0 %v2085
    %2147 = vmatmul.f32.gmra.mxu0 %v306
    %v2148 = vpop.f32.mrf.mxu0
    %v2149 = vadd.f32 0.0, %v2148
    %2150 = vdwg.mxu0
    %v2151 = vadd.f32 %v2109, %v2129
    %v2152 = vxor.u32 %v2151, 2147483648
    %v2153 = vmul.f32 %v2152, 1.442695
    %v2154 = vpow.pop %v2153
    %v2155 = vadd.f32 %v2154, 1.0
    %v2156 = vrcp.pop %v2155
    %v2157 = vmul.f32 %v2155, %v2156
    %v2158 = vsub.f32 1.0, %v2157
    %v2159 = vmul.f32 %v2156, %v2158
    %v2160 = vadd.f32 %v2156, %v2159
    %vm2161 = vweird.f32 %v2155
    %vm2162 = vweird.f32 %v2156
    %vm2163 = vmor %vm2161, %vm2162
    %v2164 = vsel %vm2163, %v2156, %v2160
    %v2165 = vand.u32 2147483647, %v2155
    %vm2166 = vcmp.eq.f32.partialorder %v2165, 8.507059e+37
    %v2167 = vand.u32 %v2155, 2147483648
    %v2168 = vor.u32 1.1754944e-38, %v2167
    %v2169 = vsel %vm2166, %v2168, %v2164
    %v2170 = vmul.f32 1.0, %v2169
    %v2171 = vadd.f32 %v2149, %v2103
    %v2172 = vmul.f32 %v2170, %v2171
    %v2173 = vadd.f32 %v2110, %v2172
    %v2174 = vtanh.pop %v2173
    %v2175 = vsub.f32 0.0, %v2174
    %2177 = vrot.lane.b32.xlu0 %v2175, 64
    %v2178 = vpop.permute.xlu0 %2177
    %v2180 = vmul.f32 %v2170, %v2178
    %2182 = vrot.lane.b32.xlu0 %v2180, 64
    %v2183 = vpop.permute.xlu0 %2182
    %v2185 = vadd.f32 %v2174, %v2183
    %v2186 = vld [vmem:[%s1] sm:$0xff]
    %vm2187 = vcmp.gt.f32.partialorder %v2186, 0.0
    %v2188 = vsel %vm2187, %v2185, 0.0
    %v2189 = vld [vmem:[%s393] sm:$0xff]
    %v2190 = vld [vmem:[%s393 + $0x8] sm:$0xff]
    %v2191 = vld [vmem:[%s398] sm:$0xff]
    %v2192 = vld [vmem:[%s398 + $0x8] sm:$0xff]
    %v2193 = vsel %vm129, %v2189, %v2191
    %v2194 = vsel %vm130, %v2190, %v2192
    %v2196 = vsel %vm257, %v2188, 0
    %2198 = vmatpush.msra.mxu0 0.0
    %2199 = vmatpush.msra.mxu0 0.0
    %2200 = vmatpush.msra.mxu0 0.0
    %2201 = vmatpush.msra.mxu0 0.0
    %2202 = vmatpush.msra.mxu0 0.0
    %2203 = vmatpush.msra.mxu0 0.0
    %2204 = vmatpush.msra.mxu0 0.0
    %2205 = vmatpush.msra.mxu0 0.0
    %2206 = vmatpush.msra.mxu0 %v2098
    %2207 = vmatpush.msra.mxu0 %v2096
    %2208 = vmatpush.msra.mxu0 %v2094
    %2209 = vmatpush.msra.mxu0 %v2092
    %2210 = vmatpush.msra.mxu0 %v2090
    %2211 = vmatpush.msra.mxu0 %v2088
    %2212 = vmatpush.msra.mxu0 %v2086
    %2213 = vmatpush.msra.mxu0 %v2084
    %2214 = vmatmul.f32.gmra.mxu0 %v2196
    %v2215 = vpop.f32.mrf.mxu0
    %v2216 = vadd.f32 0.0, %v2215
    %2217 = vdwg.mxu0
    %2218 = vmatpush.msra.mxu0 0.0
    %2219 = vmatpush.msra.mxu0 0.0
    %2220 = vmatpush.msra.mxu0 0.0
    %2221 = vmatpush.msra.mxu0 0.0
    %2222 = vmatpush.msra.mxu0 0.0
    %2223 = vmatpush.msra.mxu0 0.0
    %2224 = vmatpush.msra.mxu0 0.0
    %2225 = vmatpush.msra.mxu0 0.0
    %2226 = vmatpush.msra.mxu0 %v2099
    %2227 = vmatpush.msra.mxu0 %v2097
    %2228 = vmatpush.msra.mxu0 %v2095
    %2229 = vmatpush.msra.mxu0 %v2093
    %2230 = vmatpush.msra.mxu0 %v2091
    %2231 = vmatpush.msra.mxu0 %v2089
    %2232 = vmatpush.msra.mxu0 %v2087
    %2233 = vmatpush.msra.mxu0 %v2085
    %2234 = vmatmul.f32.gmra.mxu0 %v2196
    %v2235 = vpop.f32.mrf.mxu0
    %v2236 = vadd.f32 0.0, %v2235
    %2237 = vdwg.mxu0
    %v2238 = vadd.f32 %v2193, %v2216
    %v2239 = vxor.u32 %v2238, 2147483648
    %v2240 = vmul.f32 %v2239, 1.442695
    %v2241 = vpow.pop %v2240
    %v2242 = vadd.f32 %v2241, 1.0
    %v2243 = vrcp.pop %v2242
    %v2244 = vmul.f32 %v2242, %v2243
    %v2245 = vsub.f32 1.0, %v2244
    %v2246 = vmul.f32 %v2243, %v2245
    %v2247 = vadd.f32 %v2243, %v2246
    %vm2248 = vweird.f32 %v2242
    %vm2249 = vweird.f32 %v2243
    %vm2250 = vmor %vm2248, %vm2249
    %v2251 = vsel %vm2250, %v2243, %v2247
    %v2252 = vand.u32 2147483647, %v2242
    %vm2253 = vcmp.eq.f32.partialorder %v2252, 8.507059e+37
    %v2254 = vand.u32 %v2242, 2147483648
    %v2255 = vor.u32 1.1754944e-38, %v2254
    %v2256 = vsel %vm2253, %v2255, %v2251
    %v2257 = vmul.f32 1.0, %v2256
    %v2258 = vadd.f32 %v2236, %v2103
    %v2259 = vmul.f32 %v2257, %v2258
    %v2260 = vadd.f32 %v2194, %v2259
    %v2261 = vtanh.pop %v2260
    %v2262 = vsub.f32 %v2188, %v2261
    %2264 = vrot.lane.b32.xlu0 %v2262, 64
    %v2265 = vpop.permute.xlu0 %2264
    %v2267 = vmul.f32 %v2257, %v2265
    %2269 = vrot.lane.b32.xlu0 %v2267, 64
    %v2270 = vpop.permute.xlu0 %2269
    %v2272 = vadd.f32 %v2261, %v2270
    %v2273 = vld [vmem:[%s481] sm:$0xff]
    %vm2274 = vcmp.gt.f32.partialorder %v2273, 0.0
    %v2275 = vsel %vm2274, %v2272, %v2188
    %v2276 = vld [vmem:[%s491] sm:$0xff]
    %v2277 = vld [vmem:[%s491 + $0x8] sm:$0xff]
    %v2278 = vld [vmem:[%s496] sm:$0xff]
    %v2279 = vld [vmem:[%s496 + $0x8] sm:$0xff]
    %v2280 = vsel %vm129, %v2276, %v2278
    %v2281 = vsel %vm130, %v2277, %v2279
    %v2283 = vsel %vm257, %v2275, 0
    %2285 = vmatpush.msra.mxu0 0.0
    %2286 = vmatpush.msra.mxu0 0.0
    %2287 = vmatpush.msra.mxu0 0.0
    %2288 = vmatpush.msra.mxu0 0.0
    %2289 = vmatpush.msra.mxu0 0.0
    %2290 = vmatpush.msra.mxu0 0.0
    %2291 = vmatpush.msra.mxu0 0.0
    %2292 = vmatpush.msra.mxu0 0.0
    %2293 = vmatpush.msra.mxu0 %v2098
    %2294 = vmatpush.msra.mxu0 %v2096
    %2295 = vmatpush.msra.mxu0 %v2094
    %2296 = vmatpush.msra.mxu0 %v2092
    %2297 = vmatpush.msra.mxu0 %v2090
    %2298 = vmatpush.msra.mxu0 %v2088
    %2299 = vmatpush.msra.mxu0 %v2086
    %2300 = vmatpush.msra.mxu0 %v2084
    %2301 = vmatmul.f32.gmra.mxu0 %v2283
    %v2302 = vpop.f32.mrf.mxu0
    %v2303 = vadd.f32 0.0, %v2302
    %2304 = vdwg.mxu0
    %2305 = vmatpush.msra.mxu0 0.0
    %2306 = vmatpush.msra.mxu0 0.0
    %2307 = vmatpush.msra.mxu0 0.0
    %2308 = vmatpush.msra.mxu0 0.0
    %2309 = vmatpush.msra.mxu0 0.0
    %2310 = vmatpush.msra.mxu0 0.0
    %2311 = vmatpush.msra.mxu0 0.0
    %2312 = vmatpush.msra.mxu0 0.0
    %2313 = vmatpush.msra.mxu0 %v2099
    %2314 = vmatpush.msra.mxu0 %v2097
    %2315 = vmatpush.msra.mxu0 %v2095
    %2316 = vmatpush.msra.mxu0 %v2093
    %2317 = vmatpush.msra.mxu0 %v2091
    %2318 = vmatpush.msra.mxu0 %v2089
    %2319 = vmatpush.msra.mxu0 %v2087
    %2320 = vmatpush.msra.mxu0 %v2085
    %2321 = vmatmul.f32.gmra.mxu0 %v2283
    %v2322 = vpop.f32.mrf.mxu0
    %v2323 = vadd.f32 0.0, %v2322
    %2324 = vdwg.mxu0
    %v2325 = vadd.f32 %v2280, %v2303
    %v2326 = vxor.u32 %v2325, 2147483648
    %v2327 = vmul.f32 %v2326, 1.442695
    %v2328 = vpow.pop %v2327
    %v2329 = vadd.f32 %v2328, 1.0
    %v2330 = vrcp.pop %v2329
    %v2331 = vmul.f32 %v2329, %v2330
    %v2332 = vsub.f32 1.0, %v2331
    %v2333 = vmul.f32 %v2330, %v2332
    %v2334 = vadd.f32 %v2330, %v2333
    %vm2335 = vweird.f32 %v2329
    %vm2336 = vweird.f32 %v2330
    %vm2337 = vmor %vm2335, %vm2336
    %v2338 = vsel %vm2337, %v2330, %v2334
    %v2339 = vand.u32 2147483647, %v2329
    %vm2340 = vcmp.eq.f32.partialorder %v2339, 8.507059e+37
    %v2341 = vand.u32 %v2329, 2147483648
    %v2342 = vor.u32 1.1754944e-38, %v2341
    %v2343 = vsel %vm2340, %v2342, %v2338
    %v2344 = vmul.f32 1.0, %v2343
    %v2345 = vadd.f32 %v2323, %v2103
    %v2346 = vmul.f32 %v2344, %v2345
    %v2347 = vadd.f32 %v2281, %v2346
    %v2348 = vtanh.pop %v2347
    %v2349 = vsub.f32 %v2275, %v2348
    %2351 = vrot.lane.b32.xlu0 %v2349, 64
    %v2352 = vpop.permute.xlu0 %2351
    %v2354 = vmul.f32 %v2344, %v2352
    %2356 = vrot.lane.b32.xlu0 %v2354, 64
    %v2357 = vpop.permute.xlu0 %2356
    %v2359 = vadd.f32 %v2348, %v2357
    %v2360 = vld [vmem:[%s579] sm:$0xff]
    %vm2361 = vcmp.gt.f32.partialorder %v2360, 0.0
    %v2362 = vsel %vm2361, %v2359, %v2275
    %v2363 = vld [vmem:[%s589] sm:$0xff]
    %v2364 = vld [vmem:[%s589 + $0x8] sm:$0xff]
    %v2365 = vld [vmem:[%s594] sm:$0xff]
    %v2366 = vld [vmem:[%s594 + $0x8] sm:$0xff]
    %v2367 = vsel %vm129, %v2363, %v2365
    %v2368 = vsel %vm130, %v2364, %v2366
    %v2370 = vsel %vm257, %v2362, 0
    %2372 = vmatpush.msra.mxu0 0.0
    %2373 = vmatpush.msra.mxu0 0.0
    %2374 = vmatpush.msra.mxu0 0.0
    %2375 = vmatpush.msra.mxu0 0.0
    %2376 = vmatpush.msra.mxu0 0.0
    %2377 = vmatpush.msra.mxu0 0.0
    %2378 = vmatpush.msra.mxu0 0.0
    %2379 = vmatpush.msra.mxu0 0.0
    %2380 = vmatpush.msra.mxu0 %v2098
    %2381 = vmatpush.msra.mxu0 %v2096
    %2382 = vmatpush.msra.mxu0 %v2094
    %2383 = vmatpush.msra.mxu0 %v2092
    %2384 = vmatpush.msra.mxu0 %v2090
    %2385 = vmatpush.msra.mxu0 %v2088
    %2386 = vmatpush.msra.mxu0 %v2086
    %2387 = vmatpush.msra.mxu0 %v2084
    %2388 = vmatmul.f32.gmra.mxu0 %v2370
    %v2389 = vpop.f32.mrf.mxu0
    %v2390 = vadd.f32 0.0, %v2389
    %2391 = vdwg.mxu0
    %2392 = vmatpush.msra.mxu0 0.0
    %2393 = vmatpush.msra.mxu0 0.0
    %2394 = vmatpush.msra.mxu0 0.0
    %2395 = vmatpush.msra.mxu0 0.0
    %2396 = vmatpush.msra.mxu0 0.0
    %2397 = vmatpush.msra.mxu0 0.0
    %2398 = vmatpush.msra.mxu0 0.0
    %2399 = vmatpush.msra.mxu0 0.0
    %2400 = vmatpush.msra.mxu0 %v2099
    %2401 = vmatpush.msra.mxu0 %v2097
    %2402 = vmatpush.msra.mxu0 %v2095
    %2403 = vmatpush.msra.mxu0 %v2093
    %2404 = vmatpush.msra.mxu0 %v2091
    %2405 = vmatpush.msra.mxu0 %v2089
    %2406 = vmatpush.msra.mxu0 %v2087
    %2407 = vmatpush.msra.mxu0 %v2085
    %2408 = vmatmul.f32.gmra.mxu0 %v2370
    %v2409 = vpop.f32.mrf.mxu0
    %v2410 = vadd.f32 0.0, %v2409
    %2411 = vdwg.mxu0
    %v2412 = vadd.f32 %v2367, %v2390
    %v2413 = vxor.u32 %v2412, 2147483648
    %v2414 = vmul.f32 %v2413, 1.442695
    %v2415 = vpow.pop %v2414
    %v2416 = vadd.f32 %v2415, 1.0
    %v2417 = vrcp.pop %v2416
    %v2418 = vmul.f32 %v2416, %v2417
    %v2419 = vsub.f32 1.0, %v2418
    %v2420 = vmul.f32 %v2417, %v2419
    %v2421 = vadd.f32 %v2417, %v2420
    %vm2422 = vweird.f32 %v2416
    %vm2423 = vweird.f32 %v2417
    %vm2424 = vmor %vm2422, %vm2423
    %v2425 = vsel %vm2424, %v2417, %v2421
    %v2426 = vand.u32 2147483647, %v2416
    %vm2427 = vcmp.eq.f32.partialorder %v2426, 8.507059e+37
    %v2428 = vand.u32 %v2416, 2147483648
    %v2429 = vor.u32 1.1754944e-38, %v2428
    %v2430 = vsel %vm2427, %v2429, %v2425
    %v2431 = vmul.f32 1.0, %v2430
    %v2432 = vadd.f32 %v2410, %v2103
    %v2433 = vmul.f32 %v2431, %v2432
    %v2434 = vadd.f32 %v2368, %v2433
    %v2435 = vtanh.pop %v2434
    %v2436 = vsub.f32 %v2362, %v2435
    %2438 = vrot.lane.b32.xlu0 %v2436, 64
    %v2439 = vpop.permute.xlu0 %2438
    %v2441 = vmul.f32 %v2431, %v2439
    %2443 = vrot.lane.b32.xlu0 %v2441, 64
    %v2444 = vpop.permute.xlu0 %2443
    %v2446 = vadd.f32 %v2435, %v2444
    %v2447 = vld [vmem:[%s677] sm:$0xff]
    %vm2448 = vcmp.gt.f32.partialorder %v2447, 0.0
    %v2449 = vsel %vm2448, %v2446, %v2362
    %v2450 = vsel %vm129, %v2365, %v2363
    %v2451 = vsel %vm130, %v2366, %v2364
    %v2453 = vsel %vm257, %v2449, 0
    %2455 = vmatpush.msra.mxu0 0.0
    %2456 = vmatpush.msra.mxu0 0.0
    %2457 = vmatpush.msra.mxu0 0.0
    %2458 = vmatpush.msra.mxu0 0.0
    %2459 = vmatpush.msra.mxu0 0.0
    %2460 = vmatpush.msra.mxu0 0.0
    %2461 = vmatpush.msra.mxu0 0.0
    %2462 = vmatpush.msra.mxu0 0.0
    %2463 = vmatpush.msra.mxu0 %v2098
    %2464 = vmatpush.msra.mxu0 %v2096
    %2465 = vmatpush.msra.mxu0 %v2094
    %2466 = vmatpush.msra.mxu0 %v2092
    %2467 = vmatpush.msra.mxu0 %v2090
    %2468 = vmatpush.msra.mxu0 %v2088
    %2469 = vmatpush.msra.mxu0 %v2086
    %2470 = vmatpush.msra.mxu0 %v2084
    %2471 = vmatmul.f32.gmra.mxu0 %v2453
    %v2472 = vpop.f32.mrf.mxu0
    %v2473 = vadd.f32 0.0, %v2472
    %2474 = vdwg.mxu0
    %2475 = vmatpush.msra.mxu0 0.0
    %2476 = vmatpush.msra.mxu0 0.0
    %2477 = vmatpush.msra.mxu0 0.0
    %2478 = vmatpush.msra.mxu0 0.0
    %2479 = vmatpush.msra.mxu0 0.0
    %2480 = vmatpush.msra.mxu0 0.0
    %2481 = vmatpush.msra.mxu0 0.0
    %2482 = vmatpush.msra.mxu0 0.0
    %2483 = vmatpush.msra.mxu0 %v2099
    %2484 = vmatpush.msra.mxu0 %v2097
    %2485 = vmatpush.msra.mxu0 %v2095
    %2486 = vmatpush.msra.mxu0 %v2093
    %2487 = vmatpush.msra.mxu0 %v2091
    %2488 = vmatpush.msra.mxu0 %v2089
    %2489 = vmatpush.msra.mxu0 %v2087
    %2490 = vmatpush.msra.mxu0 %v2085
    %2491 = vmatmul.f32.gmra.mxu0 %v2453
    %v2492 = vpop.f32.mrf.mxu0
    %v2493 = vadd.f32 0.0, %v2492
    %2494 = vdwg.mxu0
    %v2495 = vadd.f32 %v2450, %v2473
    %v2496 = vxor.u32 %v2495, 2147483648
    %v2497 = vmul.f32 %v2496, 1.442695
    %v2498 = vpow.pop %v2497
    %v2499 = vadd.f32 %v2498, 1.0
    %v2500 = vrcp.pop %v2499
    %v2501 = vmul.f32 %v2499, %v2500
    %v2502 = vsub.f32 1.0, %v2501
    %v2503 = vmul.f32 %v2500, %v2502
    %v2504 = vadd.f32 %v2500, %v2503
    %vm2505 = vweird.f32 %v2499
    %vm2506 = vweird.f32 %v2500
    %vm2507 = vmor %vm2505, %vm2506
    %v2508 = vsel %vm2507, %v2500, %v2504
    %v2509 = vand.u32 2147483647, %v2499
    %vm2510 = vcmp.eq.f32.partialorder %v2509, 8.507059e+37
    %v2511 = vand.u32 %v2499, 2147483648
    %v2512 = vor.u32 1.1754944e-38, %v2511
    %v2513 = vsel %vm2510, %v2512, %v2508
    %v2514 = vmul.f32 1.0, %v2513
    %v2515 = vadd.f32 %v2493, %v2103
    %v2516 = vmul.f32 %v2514, %v2515
    %v2517 = vadd.f32 %v2451, %v2516
    %v2518 = vtanh.pop %v2517
    %v2519 = vsub.f32 %v2449, %v2518
    %2521 = vrot.lane.b32.xlu0 %v2519, 64
    %v2522 = vpop.permute.xlu0 %2521
    %v2524 = vmul.f32 %v2514, %v2522
    %2526 = vrot.lane.b32.xlu0 %v2524, 64
    %v2527 = vpop.permute.xlu0 %2526
    %v2529 = vadd.f32 %v2518, %v2527
    %v2530 = vld [vmem:[%s769] sm:$0xff]
    %vm2531 = vcmp.gt.f32.partialorder %v2530, 0.0
    %v2532 = vsel %vm2531, %v2529, %v2449
    %v2533 = vsel %vm129, %v2278, %v2276
    %v2534 = vsel %vm130, %v2279, %v2277
    %v2536 = vsel %vm257, %v2532, 0
    %2538 = vmatpush.msra.mxu0 0.0
    %2539 = vmatpush.msra.mxu0 0.0
    %2540 = vmatpush.msra.mxu0 0.0
    %2541 = vmatpush.msra.mxu0 0.0
    %2542 = vmatpush.msra.mxu0 0.0
    %2543 = vmatpush.msra.mxu0 0.0
    %2544 = vmatpush.msra.mxu0 0.0
    %2545 = vmatpush.msra.mxu0 0.0
    %2546 = vmatpush.msra.mxu0 %v2098
    %2547 = vmatpush.msra.mxu0 %v2096
    %2548 = vmatpush.msra.mxu0 %v2094
    %2549 = vmatpush.msra.mxu0 %v2092
    %2550 = vmatpush.msra.mxu0 %v2090
    %2551 = vmatpush.msra.mxu0 %v2088
    %2552 = vmatpush.msra.mxu0 %v2086
    %2553 = vmatpush.msra.mxu0 %v2084
    %2554 = vmatmul.f32.gmra.mxu0 %v2536
    %v2555 = vpop.f32.mrf.mxu0
    %v2556 = vadd.f32 0.0, %v2555
    %2557 = vdwg.mxu0
    %2558 = vmatpush.msra.mxu0 0.0
    %2559 = vmatpush.msra.mxu0 0.0
    %2560 = vmatpush.msra.mxu0 0.0
    %2561 = vmatpush.msra.mxu0 0.0
    %2562 = vmatpush.msra.mxu0 0.0
    %2563 = vmatpush.msra.mxu0 0.0
    %2564 = vmatpush.msra.mxu0 0.0
    %2565 = vmatpush.msra.mxu0 0.0
    %2566 = vmatpush.msra.mxu0 %v2099
    %2567 = vmatpush.msra.mxu0 %v2097
    %2568 = vmatpush.msra.mxu0 %v2095
    %2569 = vmatpush.msra.mxu0 %v2093
    %2570 = vmatpush.msra.mxu0 %v2091
    %2571 = vmatpush.msra.mxu0 %v2089
    %2572 = vmatpush.msra.mxu0 %v2087
    %2573 = vmatpush.msra.mxu0 %v2085
    %2574 = vmatmul.f32.gmra.mxu0 %v2536
    %v2575 = vpop.f32.mrf.mxu0
    %v2576 = vadd.f32 0.0, %v2575
    %2577 = vdwg.mxu0
    %v2578 = vadd.f32 %v2533, %v2556
    %v2579 = vxor.u32 %v2578, 2147483648
    %v2580 = vmul.f32 %v2579, 1.442695
    %v2581 = vpow.pop %v2580
    %v2582 = vadd.f32 %v2581, 1.0
    %v2583 = vrcp.pop %v2582
    %v2584 = vmul.f32 %v2582, %v2583
    %v2585 = vsub.f32 1.0, %v2584
    %v2586 = vmul.f32 %v2583, %v2585
    %v2587 = vadd.f32 %v2583, %v2586
    %vm2588 = vweird.f32 %v2582
    %vm2589 = vweird.f32 %v2583
    %vm2590 = vmor %vm2588, %vm2589
    %v2591 = vsel %vm2590, %v2583, %v2587
    %v2592 = vand.u32 2147483647, %v2582
    %vm2593 = vcmp.eq.f32.partialorder %v2592, 8.507059e+37
    %v2594 = vand.u32 %v2582, 2147483648
    %v2595 = vor.u32 1.1754944e-38, %v2594
    %v2596 = vsel %vm2593, %v2595, %v2591
    %v2597 = vmul.f32 1.0, %v2596
    %v2598 = vadd.f32 %v2576, %v2103
    %v2599 = vmul.f32 %v2597, %v2598
    %v2600 = vadd.f32 %v2534, %v2599
    %v2601 = vtanh.pop %v2600
    %v2602 = vsub.f32 %v2532, %v2601
    %2604 = vrot.lane.b32.xlu0 %v2602, 64
    %v2605 = vpop.permute.xlu0 %2604
    %v2607 = vmul.f32 %v2597, %v2605
    %2609 = vrot.lane.b32.xlu0 %v2607, 64
    %v2610 = vpop.permute.xlu0 %2609
    %v2612 = vadd.f32 %v2601, %v2610
    %v2613 = vld [vmem:[%s859] sm:$0xff]
    %vm2614 = vcmp.gt.f32.partialorder %v2613, 0.0
    %v2615 = vsel %vm2614, %v2612, %v2532
    %v2616 = vsel %vm129, %v2191, %v2189
    %v2617 = vsel %vm130, %v2192, %v2190
    %v2619 = vsel %vm257, %v2615, 0
    %2621 = vmatpush.msra.mxu0 0.0
    %2622 = vmatpush.msra.mxu0 0.0
    %2623 = vmatpush.msra.mxu0 0.0
    %2624 = vmatpush.msra.mxu0 0.0
    %2625 = vmatpush.msra.mxu0 0.0
    %2626 = vmatpush.msra.mxu0 0.0
    %2627 = vmatpush.msra.mxu0 0.0
    %2628 = vmatpush.msra.mxu0 0.0
    %2629 = vmatpush.msra.mxu0 %v2098
    %2630 = vmatpush.msra.mxu0 %v2096
    %2631 = vmatpush.msra.mxu0 %v2094
    %2632 = vmatpush.msra.mxu0 %v2092
    %2633 = vmatpush.msra.mxu0 %v2090
    %2634 = vmatpush.msra.mxu0 %v2088
    %2635 = vmatpush.msra.mxu0 %v2086
    %2636 = vmatpush.msra.mxu0 %v2084
    %2637 = vmatmul.f32.gmra.mxu0 %v2619
    %v2638 = vpop.f32.mrf.mxu0
    %v2639 = vadd.f32 0.0, %v2638
    %2640 = vdwg.mxu0
    %2641 = vmatpush.msra.mxu0 0.0
    %2642 = vmatpush.msra.mxu0 0.0
    %2643 = vmatpush.msra.mxu0 0.0
    %2644 = vmatpush.msra.mxu0 0.0
    %2645 = vmatpush.msra.mxu0 0.0
    %2646 = vmatpush.msra.mxu0 0.0
    %2647 = vmatpush.msra.mxu0 0.0
    %2648 = vmatpush.msra.mxu0 0.0
    %2649 = vmatpush.msra.mxu0 %v2099
    %2650 = vmatpush.msra.mxu0 %v2097
    %2651 = vmatpush.msra.mxu0 %v2095
    %2652 = vmatpush.msra.mxu0 %v2093
    %2653 = vmatpush.msra.mxu0 %v2091
    %2654 = vmatpush.msra.mxu0 %v2089
    %2655 = vmatpush.msra.mxu0 %v2087
    %2656 = vmatpush.msra.mxu0 %v2085
    %2657 = vmatmul.f32.gmra.mxu0 %v2619
    %v2658 = vpop.f32.mrf.mxu0
    %v2659 = vadd.f32 0.0, %v2658
    %2660 = vdwg.mxu0
    %v2661 = vadd.f32 %v2616, %v2639
    %v2662 = vxor.u32 %v2661, 2147483648
    %v2663 = vmul.f32 %v2662, 1.442695
    %v2664 = vpow.pop %v2663
    %v2665 = vadd.f32 %v2664, 1.0
    %v2666 = vrcp.pop %v2665
    %v2667 = vmul.f32 %v2665, %v2666
    %v2668 = vsub.f32 1.0, %v2667
    %v2669 = vmul.f32 %v2666, %v2668
    %v2670 = vadd.f32 %v2666, %v2669
    %vm2671 = vweird.f32 %v2665
    %vm2672 = vweird.f32 %v2666
    %vm2673 = vmor %vm2671, %vm2672
    %v2674 = vsel %vm2673, %v2666, %v2670
    %v2675 = vand.u32 2147483647, %v2665
    %vm2676 = vcmp.eq.f32.partialorder %v2675, 8.507059e+37
    %v2677 = vand.u32 %v2665, 2147483648
    %v2678 = vor.u32 1.1754944e-38, %v2677
    %v2679 = vsel %vm2676, %v2678, %v2674
    %v2680 = vmul.f32 1.0, %v2679
    %v2681 = vadd.f32 %v2659, %v2103
    %v2682 = vmul.f32 %v2680, %v2681
    %v2683 = vadd.f32 %v2617, %v2682
    %v2684 = vtanh.pop %v2683
    %v2685 = vsub.f32 %v2615, %v2684
    %2687 = vrot.lane.b32.xlu0 %v2685, 64
    %v2688 = vpop.permute.xlu0 %2687
    %v2690 = vmul.f32 %v2680, %v2688
    %2692 = vrot.lane.b32.xlu0 %v2690, 64
    %v2693 = vpop.permute.xlu0 %2692
    %v2695 = vadd.f32 %v2684, %v2693
    %v2696 = vld [vmem:[%s949] sm:$0xff]
    %vm2697 = vcmp.gt.f32.partialorder %v2696, 0.0
    %v2698 = vsel %vm2697, %v2695, %v2615
    %v2699 = vsel %vm129, %v2107, %v2105
    %v2700 = vsel %vm130, %v2108, %v2106
    %v2702 = vsel %vm257, %v2698, 0
    %2704 = vmatpush.msra.mxu0 0.0
    %2705 = vmatpush.msra.mxu0 0.0
    %2706 = vmatpush.msra.mxu0 0.0
    %2707 = vmatpush.msra.mxu0 0.0
    %2708 = vmatpush.msra.mxu0 0.0
    %2709 = vmatpush.msra.mxu0 0.0
    %2710 = vmatpush.msra.mxu0 0.0
    %2711 = vmatpush.msra.mxu0 0.0
    %2712 = vmatpush.msra.mxu0 %v2098
    %2713 = vmatpush.msra.mxu0 %v2096
    %2714 = vmatpush.msra.mxu0 %v2094
    %2715 = vmatpush.msra.mxu0 %v2092
    %2716 = vmatpush.msra.mxu0 %v2090
    %2717 = vmatpush.msra.mxu0 %v2088
    %2718 = vmatpush.msra.mxu0 %v2086
    %2719 = vmatpush.msra.mxu0 %v2084
    %2720 = vmatmul.f32.gmra.mxu0 %v2702
    %v2721 = vpop.f32.mrf.mxu0
    %v2722 = vadd.f32 0.0, %v2721
    %2723 = vdwg.mxu0
    %2724 = vmatpush.msra.mxu0 0.0
    %2725 = vmatpush.msra.mxu0 0.0
    %2726 = vmatpush.msra.mxu0 0.0
    %2727 = vmatpush.msra.mxu0 0.0
    %2728 = vmatpush.msra.mxu0 0.0
    %2729 = vmatpush.msra.mxu0 0.0
    %2730 = vmatpush.msra.mxu0 0.0
    %2731 = vmatpush.msra.mxu0 0.0
    %2732 = vmatpush.msra.mxu0 %v2099
    %2733 = vmatpush.msra.mxu0 %v2097
    %2734 = vmatpush.msra.mxu0 %v2095
    %2735 = vmatpush.msra.mxu0 %v2093
    %2736 = vmatpush.msra.mxu0 %v2091
    %2737 = vmatpush.msra.mxu0 %v2089
    %2738 = vmatpush.msra.mxu0 %v2087
    %2739 = vmatpush.msra.mxu0 %v2085
    %2740 = vmatmul.f32.gmra.mxu0 %v2702
    %v2741 = vpop.f32.mrf.mxu0
    %v2742 = vadd.f32 0.0, %v2741
    %2743 = vdwg.mxu0
    %v2744 = vadd.f32 %v2699, %v2722
    %v2745 = vxor.u32 %v2744, 2147483648
    %v2746 = vmul.f32 %v2745, 1.442695
    %v2747 = vpow.pop %v2746
    %v2748 = vadd.f32 %v2747, 1.0
    %v2749 = vrcp.pop %v2748
    %v2750 = vmul.f32 %v2748, %v2749
    %v2751 = vsub.f32 1.0, %v2750
    %v2752 = vmul.f32 %v2749, %v2751
    %v2753 = vadd.f32 %v2749, %v2752
    %vm2754 = vweird.f32 %v2748
    %vm2755 = vweird.f32 %v2749
    %vm2756 = vmor %vm2754, %vm2755
    %v2757 = vsel %vm2756, %v2749, %v2753
    %v2758 = vand.u32 2147483647, %v2748
    %vm2759 = vcmp.eq.f32.partialorder %v2758, 8.507059e+37
    %v2760 = vand.u32 %v2748, 2147483648
    %v2761 = vor.u32 1.1754944e-38, %v2760
    %v2762 = vsel %vm2759, %v2761, %v2757
    %v2763 = vmul.f32 1.0, %v2762
    %v2764 = vadd.f32 %v2742, %v2103
    %v2765 = vmul.f32 %v2763, %v2764
    %v2766 = vadd.f32 %v2700, %v2765
    %v2767 = vtanh.pop %v2766
    %v2768 = vsub.f32 %v2698, %v2767
    %2770 = vrot.lane.b32.xlu0 %v2768, 64
    %v2771 = vpop.permute.xlu0 %2770
    %v2773 = vmul.f32 %v2763, %v2771
    %2775 = vrot.lane.b32.xlu0 %v2773, 64
    %v2776 = vpop.permute.xlu0 %2775
    %v2778 = vadd.f32 %v2767, %v2776
    %v2779 = vld [vmem:[%s1039] sm:$0xff]
    %vm2780 = vcmp.gt.f32.partialorder %v2779, 0.0
    %v2781 = vsel %vm2780, %v2778, %v2698
    %2782 = vst.msk [vmem:[#allocation11] sm:$0xff] %vm257, %v2781
    %v2783 = vld [vmem:[%s13] sm:$0xff]
    %v2784 = vld [vmem:[%s13 + $0x8] sm:$0xff]
    %v2785 = vld [vmem:[%s13 + $0x10] sm:$0xff]
    %v2786 = vld [vmem:[%s13 + $0x18] sm:$0xff]
    %v2787 = vld [vmem:[%s13 + $0x20] sm:$0xff]
    %v2788 = vld [vmem:[%s13 + $0x28] sm:$0xff]
    %v2789 = vld [vmem:[%s13 + $0x30] sm:$0xff]
    %v2790 = vld [vmem:[%s13 + $0x38] sm:$0xff]
    %v2791 = vld [vmem:[%s14] sm:$0x1]
    %v2793 = vperm.slane %v2791, 0
    %v2796 = vsel %vm257, %v2781, 0
    %2798 = vmatpush.msra.mxu0 0.0
    %2799 = vmatpush.msra.mxu0 0.0
    %2800 = vmatpush.msra.mxu0 0.0
    %2801 = vmatpush.msra.mxu0 0.0
    %2802 = vmatpush.msra.mxu0 0.0
    %2803 = vmatpush.msra.mxu0 0.0
    %2804 = vmatpush.msra.mxu0 0.0
    %2805 = vmatpush.msra.mxu0 0.0
    %2806 = vmatpush.msra.mxu0 %v2790
    %2807 = vmatpush.msra.mxu0 %v2789
    %2808 = vmatpush.msra.mxu0 %v2788
    %2809 = vmatpush.msra.mxu0 %v2787
    %2810 = vmatpush.msra.mxu0 %v2786
    %2811 = vmatpush.msra.mxu0 %v2785
    %2812 = vmatpush.msra.mxu0 %v2784
    %2813 = vmatpush.msra.mxu0 %v2783
    %2814 = vmatmul.f32.gmra.mxu0 %v2796
    %v2815 = vpop.f32.mrf.mxu0
    %v2816 = vadd.f32 %v2793, %v2815
    %2817 = vdwg.mxu0
    %vm2818 = vcmask 64512
    %2819 = vst.msk [vmem:[#allocation12] sm:$0xff] %vm2818, %v2816
    %v2820 = vld [vmem:[%s7] sm:$0xff]
    %v2821 = vld [vmem:[%s7 + $0x8] sm:$0xff]
    %v2822 = vld [vmem:[%s7 + $0x10] sm:$0xff]
    %v2823 = vld [vmem:[%s7 + $0x18] sm:$0xff]
    %v2824 = vld [vmem:[%s7 + $0x20] sm:$0xff]
    %v2825 = vld [vmem:[%s7 + $0x28] sm:$0xff]
    %v2826 = vld [vmem:[%s7 + $0x30] sm:$0xff]
    %v2827 = vld [vmem:[%s7 + $0x38] sm:$0xff]
    %v2828 = vld [vmem:[%s7 + $0x40] sm:$0xff]
    %v2829 = vld [vmem:[%s7 + $0x48] sm:$0xff]
    %v2830 = vld [vmem:[%s7 + $0x50] sm:$0xff]
    %v2831 = vld [vmem:[%s7 + $0x58] sm:$0xff]
    %v2832 = vld [vmem:[%s7 + $0x60] sm:$0xff]
    %v2833 = vld [vmem:[%s7 + $0x68] sm:$0xff]
    %v2834 = vld [vmem:[%s7 + $0x70] sm:$0xff]
    %v2835 = vld [vmem:[%s7 + $0x78] sm:$0xff]
    %v2836 = vld [vmem:[%s8] sm:$0x1]
    %v2838 = vperm.slane %v2836, 0
    %v2840 = vld [vmem:[%s9] sm:$0x1]
    %v2842 = vperm.slane %v2840, 0
    %v2844 = vld [vmem:[%s10] sm:$0x1]
    %v2846 = vperm.slane %v2844, 0
    %2848 = vmatpush.msra.mxu0 0.0
    %2849 = vmatpush.msra.mxu0 0.0
    %2850 = vmatpush.msra.mxu0 0.0
    %2851 = vmatpush.msra.mxu0 0.0
    %2852 = vmatpush.msra.mxu0 0.0
    %2853 = vmatpush.msra.mxu0 0.0
    %2854 = vmatpush.msra.mxu0 0.0
    %2855 = vmatpush.msra.mxu0 0.0
    %2856 = vmatpush.msra.mxu0 %v2834
    %2857 = vmatpush.msra.mxu0 %v2832
    %2858 = vmatpush.msra.mxu0 %v2830
    %2859 = vmatpush.msra.mxu0 %v2828
    %2860 = vmatpush.msra.mxu0 %v2826
    %2861 = vmatpush.msra.mxu0 %v2824
    %2862 = vmatpush.msra.mxu0 %v2822
    %2863 = vmatpush.msra.mxu0 %v2820
    %2864 = vmatmul.f32.gmra.mxu0 %v2796
    %v2865 = vpop.f32.mrf.mxu0
    %v2866 = vadd.f32 0.0, %v2865
    %2867 = vdwg.mxu0
    %2868 = vmatpush.msra.mxu0 0.0
    %2869 = vmatpush.msra.mxu0 0.0
    %2870 = vmatpush.msra.mxu0 0.0
    %2871 = vmatpush.msra.mxu0 0.0
    %2872 = vmatpush.msra.mxu0 0.0
    %2873 = vmatpush.msra.mxu0 0.0
    %2874 = vmatpush.msra.mxu0 0.0
    %2875 = vmatpush.msra.mxu0 0.0
    %2876 = vmatpush.msra.mxu0 %v2835
    %2877 = vmatpush.msra.mxu0 %v2833
    %2878 = vmatpush.msra.mxu0 %v2831
    %2879 = vmatpush.msra.mxu0 %v2829
    %2880 = vmatpush.msra.mxu0 %v2827
    %2881 = vmatpush.msra.mxu0 %v2825
    %2882 = vmatpush.msra.mxu0 %v2823
    %2883 = vmatpush.msra.mxu0 %v2821
    %2884 = vmatmul.f32.gmra.mxu0 %v2796
    %v2885 = vpop.f32.mrf.mxu0
    %v2886 = vadd.f32 0.0, %v2885
    %2887 = vdwg.mxu0
    %v2888 = vadd.f32 %v2866, %v2838
    %v2889 = vxor.u32 %v2888, 2147483648
    %v2890 = vmul.f32 %v2889, 1.442695
    %v2891 = vpow.pop %v2890
    %v2892 = vadd.f32 %v2891, 1.0
    %v2893 = vrcp.pop %v2892
    %v2894 = vmul.f32 %v2892, %v2893
    %v2895 = vsub.f32 1.0, %v2894
    %v2896 = vmul.f32 %v2893, %v2895
    %v2897 = vadd.f32 %v2893, %v2896
    %vm2898 = vweird.f32 %v2892
    %vm2899 = vweird.f32 %v2893
    %vm2900 = vmor %vm2898, %vm2899
    %v2901 = vsel %vm2900, %v2893, %v2897
    %v2902 = vand.u32 2147483647, %v2892
    %vm2903 = vcmp.eq.f32.partialorder %v2902, 8.507059e+37
    %v2904 = vand.u32 %v2892, 2147483648
    %v2905 = vor.u32 1.1754944e-38, %v2904
    %v2906 = vsel %vm2903, %v2905, %v2901
    %v2907 = vmul.f32 1.0, %v2906
    %v2908 = vadd.f32 %v2886, %v2846
    %v2909 = vmul.f32 %v2907, %v2908
    %v2910 = vadd.f32 %v2842, %v2909
    %v2911 = vtanh.pop %v2910
    %v2912 = vsub.f32 %v2781, %v2911
    %2914 = vrot.lane.b32.xlu0 %v2912, 64
    %v2915 = vpop.permute.xlu0 %2914
    %v2917 = vmul.f32 %v2907, %v2915
    %2919 = vrot.lane.b32.xlu0 %v2917, 64
    %v2920 = vpop.permute.xlu0 %2919
    %v2922 = vadd.f32 %v2911, %v2920
    %2923 = vst.msk [vmem:[#allocation4] sm:$0xff] %vm257, %v2922
    %v2925 = vsel %vm257, %v2922, 0
    %2927 = vmatpush.msra.mxu0 0.0
    %2928 = vmatpush.msra.mxu0 0.0
    %2929 = vmatpush.msra.mxu0 0.0
    %2930 = vmatpush.msra.mxu0 0.0
    %2931 = vmatpush.msra.mxu0 0.0
    %2932 = vmatpush.msra.mxu0 0.0
    %2933 = vmatpush.msra.mxu0 0.0
    %2934 = vmatpush.msra.mxu0 0.0
    %2935 = vmatpush.msra.mxu0 %v2834
    %2936 = vmatpush.msra.mxu0 %v2832
    %2937 = vmatpush.msra.mxu0 %v2830
    %2938 = vmatpush.msra.mxu0 %v2828
    %2939 = vmatpush.msra.mxu0 %v2826
    %2940 = vmatpush.msra.mxu0 %v2824
    %2941 = vmatpush.msra.mxu0 %v2822
    %2942 = vmatpush.msra.mxu0 %v2820
    %2943 = vmatmul.f32.gmra.mxu0 %v2925
    %v2944 = vpop.f32.mrf.mxu0
    %v2945 = vadd.f32 0.0, %v2944
    %2946 = vdwg.mxu0
    %2947 = vmatpush.msra.mxu0 0.0
    %2948 = vmatpush.msra.mxu0 0.0
    %2949 = vmatpush.msra.mxu0 0.0
    %2950 = vmatpush.msra.mxu0 0.0
    %2951 = vmatpush.msra.mxu0 0.0
    %2952 = vmatpush.msra.mxu0 0.0
    %2953 = vmatpush.msra.mxu0 0.0
    %2954 = vmatpush.msra.mxu0 0.0
    %2955 = vmatpush.msra.mxu0 %v2835
    %2956 = vmatpush.msra.mxu0 %v2833
    %2957 = vmatpush.msra.mxu0 %v2831
    %2958 = vmatpush.msra.mxu0 %v2829
    %2959 = vmatpush.msra.mxu0 %v2827
    %2960 = vmatpush.msra.mxu0 %v2825
    %2961 = vmatpush.msra.mxu0 %v2823
    %2962 = vmatpush.msra.mxu0 %v2821
    %2963 = vmatmul.f32.gmra.mxu0 %v2925
    %v2964 = vpop.f32.mrf.mxu0
    %v2965 = vadd.f32 0.0, %v2964
    %2966 = vdwg.mxu0
    %v2967 = vadd.f32 %v2945, %v2838
    %v2968 = vxor.u32 %v2967, 2147483648
    %v2969 = vmul.f32 %v2968, 1.442695
    %v2970 = vpow.pop %v2969
    %v2971 = vadd.f32 %v2970, 1.0
    %v2972 = vrcp.pop %v2971
    %v2973 = vmul.f32 %v2971, %v2972
    %v2974 = vsub.f32 1.0, %v2973
    %v2975 = vmul.f32 %v2972, %v2974
    %v2976 = vadd.f32 %v2972, %v2975
    %vm2977 = vweird.f32 %v2971
    %vm2978 = vweird.f32 %v2972
    %vm2979 = vmor %vm2977, %vm2978
    %v2980 = vsel %vm2979, %v2972, %v2976
    %v2981 = vand.u32 2147483647, %v2971
    %vm2982 = vcmp.eq.f32.partialorder %v2981, 8.507059e+37
    %v2983 = vand.u32 %v2971, 2147483648
    %v2984 = vor.u32 1.1754944e-38, %v2983
    %v2985 = vsel %vm2982, %v2984, %v2980
    %v2986 = vmul.f32 1.0, %v2985
    %v2987 = vadd.f32 %v2965, %v2846
    %v2988 = vmul.f32 %v2986, %v2987
    %v2989 = vadd.f32 %v2842, %v2988
    %v2990 = vtanh.pop %v2989
    %v2991 = vsub.f32 %v2922, %v2990
    %2993 = vrot.lane.b32.xlu0 %v2991, 64
    %v2994 = vpop.permute.xlu0 %2993
    %v2996 = vmul.f32 %v2986, %v2994
    %2998 = vrot.lane.b32.xlu0 %v2996, 64
    %v2999 = vpop.permute.xlu0 %2998
    %v3001 = vadd.f32 %v2990, %v2999
    %s3002 = scalar_lea.vmem [#allocation4], 8
    %3003 = vst.msk [vmem:[%s3002] sm:$0xff] %vm257, %v3001
    %v3005 = vsel %vm257, %v3001, 0
    %3007 = vmatpush.msra.mxu0 0.0
    %3008 = vmatpush.msra.mxu0 0.0
    %3009 = vmatpush.msra.mxu0 0.0
    %3010 = vmatpush.msra.mxu0 0.0
    %3011 = vmatpush.msra.mxu0 0.0
    %3012 = vmatpush.msra.mxu0 0.0
    %3013 = vmatpush.msra.mxu0 0.0
    %3014 = vmatpush.msra.mxu0 0.0
    %3015 = vmatpush.msra.mxu0 %v2834
    %3016 = vmatpush.msra.mxu0 %v2832
    %3017 = vmatpush.msra.mxu0 %v2830
    %3018 = vmatpush.msra.mxu0 %v2828
    %3019 = vmatpush.msra.mxu0 %v2826
    %3020 = vmatpush.msra.mxu0 %v2824
    %3021 = vmatpush.msra.mxu0 %v2822
    %3022 = vmatpush.msra.mxu0 %v2820
    %3023 = vmatmul.f32.gmra.mxu0 %v3005
    %v3024 = vpop.f32.mrf.mxu0
    %v3025 = vadd.f32 0.0, %v3024
    %3026 = vdwg.mxu0
    %3027 = vmatpush.msra.mxu0 0.0
    %3028 = vmatpush.msra.mxu0 0.0
    %3029 = vmatpush.msra.mxu0 0.0
    %3030 = vmatpush.msra.mxu0 0.0
    %3031 = vmatpush.msra.mxu0 0.0
    %3032 = vmatpush.msra.mxu0 0.0
    %3033 = vmatpush.msra.mxu0 0.0
    %3034 = vmatpush.msra.mxu0 0.0
    %3035 = vmatpush.msra.mxu0 %v2835
    %3036 = vmatpush.msra.mxu0 %v2833
    %3037 = vmatpush.msra.mxu0 %v2831
    %3038 = vmatpush.msra.mxu0 %v2829
    %3039 = vmatpush.msra.mxu0 %v2827
    %3040 = vmatpush.msra.mxu0 %v2825
    %3041 = vmatpush.msra.mxu0 %v2823
    %3042 = vmatpush.msra.mxu0 %v2821
    %3043 = vmatmul.f32.gmra.mxu0 %v3005
    %v3044 = vpop.f32.mrf.mxu0
    %v3045 = vadd.f32 0.0, %v3044
    %3046 = vdwg.mxu0
    %v3047 = vadd.f32 %v3025, %v2838
    %v3048 = vxor.u32 %v3047, 2147483648
    %v3049 = vmul.f32 %v3048, 1.442695
    %v3050 = vpow.pop %v3049
    %v3051 = vadd.f32 %v3050, 1.0
    %v3052 = vrcp.pop %v3051
    %v3053 = vmul.f32 %v3051, %v3052
    %v3054 = vsub.f32 1.0, %v3053
    %v3055 = vmul.f32 %v3052, %v3054
    %v3056 = vadd.f32 %v3052, %v3055
    %vm3057 = vweird.f32 %v3051
    %vm3058 = vweird.f32 %v3052
    %vm3059 = vmor %vm3057, %vm3058
    %v3060 = vsel %vm3059, %v3052, %v3056
    %v3061 = vand.u32 2147483647, %v3051
    %vm3062 = vcmp.eq.f32.partialorder %v3061, 8.507059e+37
    %v3063 = vand.u32 %v3051, 2147483648
    %v3064 = vor.u32 1.1754944e-38, %v3063
    %v3065 = vsel %vm3062, %v3064, %v3060
    %v3066 = vmul.f32 1.0, %v3065
    %v3067 = vadd.f32 %v3045, %v2846
    %v3068 = vmul.f32 %v3066, %v3067
    %v3069 = vadd.f32 %v2842, %v3068
    %v3070 = vtanh.pop %v3069
    %v3071 = vsub.f32 %v3001, %v3070
    %3073 = vrot.lane.b32.xlu0 %v3071, 64
    %v3074 = vpop.permute.xlu0 %3073
    %v3076 = vmul.f32 %v3066, %v3074
    %3078 = vrot.lane.b32.xlu0 %v3076, 64
    %v3079 = vpop.permute.xlu0 %3078
    %v3081 = vadd.f32 %v3070, %v3079
    %s3082 = scalar_lea.vmem [#allocation4], 16
    %3083 = vst.msk [vmem:[%s3082] sm:$0xff] %vm257, %v3081
    %v3085 = vsel %vm257, %v3081, 0
    %3087 = vmatpush.msra.mxu0 0.0
    %3088 = vmatpush.msra.mxu0 0.0
    %3089 = vmatpush.msra.mxu0 0.0
    %3090 = vmatpush.msra.mxu0 0.0
    %3091 = vmatpush.msra.mxu0 0.0
    %3092 = vmatpush.msra.mxu0 0.0
    %3093 = vmatpush.msra.mxu0 0.0
    %3094 = vmatpush.msra.mxu0 0.0
    %3095 = vmatpush.msra.mxu0 %v2834
    %3096 = vmatpush.msra.mxu0 %v2832
    %3097 = vmatpush.msra.mxu0 %v2830
    %3098 = vmatpush.msra.mxu0 %v2828
    %3099 = vmatpush.msra.mxu0 %v2826
    %3100 = vmatpush.msra.mxu0 %v2824
    %3101 = vmatpush.msra.mxu0 %v2822
    %3102 = vmatpush.msra.mxu0 %v2820
    %3103 = vmatmul.f32.gmra.mxu0 %v3085
    %v3104 = vpop.f32.mrf.mxu0
    %v3105 = vadd.f32 0.0, %v3104
    %3106 = vdwg.mxu0
    %3107 = vmatpush.msra.mxu0 0.0
    %3108 = vmatpush.msra.mxu0 0.0
    %3109 = vmatpush.msra.mxu0 0.0
    %3110 = vmatpush.msra.mxu0 0.0
    %3111 = vmatpush.msra.mxu0 0.0
    %3112 = vmatpush.msra.mxu0 0.0
    %3113 = vmatpush.msra.mxu0 0.0
    %3114 = vmatpush.msra.mxu0 0.0
    %3115 = vmatpush.msra.mxu0 %v2835
    %3116 = vmatpush.msra.mxu0 %v2833
    %3117 = vmatpush.msra.mxu0 %v2831
    %3118 = vmatpush.msra.mxu0 %v2829
    %3119 = vmatpush.msra.mxu0 %v2827
    %3120 = vmatpush.msra.mxu0 %v2825
    %3121 = vmatpush.msra.mxu0 %v2823
    %3122 = vmatpush.msra.mxu0 %v2821
    %3123 = vmatmul.f32.gmra.mxu0 %v3085
    %v3124 = vpop.f32.mrf.mxu0
    %v3125 = vadd.f32 0.0, %v3124
    %3126 = vdwg.mxu0
    %v3127 = vadd.f32 %v3105, %v2838
    %v3128 = vxor.u32 %v3127, 2147483648
    %v3129 = vmul.f32 %v3128, 1.442695
    %v3130 = vpow.pop %v3129
    %v3131 = vadd.f32 %v3130, 1.0
    %v3132 = vrcp.pop %v3131
    %v3133 = vmul.f32 %v3131, %v3132
    %v3134 = vsub.f32 1.0, %v3133
    %v3135 = vmul.f32 %v3132, %v3134
    %v3136 = vadd.f32 %v3132, %v3135
    %vm3137 = vweird.f32 %v3131
    %vm3138 = vweird.f32 %v3132
    %vm3139 = vmor %vm3137, %vm3138
    %v3140 = vsel %vm3139, %v3132, %v3136
    %v3141 = vand.u32 2147483647, %v3131
    %vm3142 = vcmp.eq.f32.partialorder %v3141, 8.507059e+37
    %v3143 = vand.u32 %v3131, 2147483648
    %v3144 = vor.u32 1.1754944e-38, %v3143
    %v3145 = vsel %vm3142, %v3144, %v3140
    %v3146 = vmul.f32 1.0, %v3145
    %v3147 = vadd.f32 %v3125, %v2846
    %v3148 = vmul.f32 %v3146, %v3147
    %v3149 = vadd.f32 %v2842, %v3148
    %v3150 = vtanh.pop %v3149
    %v3151 = vsub.f32 %v3081, %v3150
    %3153 = vrot.lane.b32.xlu0 %v3151, 64
    %v3154 = vpop.permute.xlu0 %3153
    %v3156 = vmul.f32 %v3146, %v3154
    %3158 = vrot.lane.b32.xlu0 %v3156, 64
    %v3159 = vpop.permute.xlu0 %3158
    %v3161 = vadd.f32 %v3150, %v3159
    %s3162 = scalar_lea.vmem [#allocation4], 24
    %3163 = vst.msk [vmem:[%s3162] sm:$0xff] %vm257, %v3161
    %v3165 = vsel %vm257, %v3161, 0
    %3167 = vmatpush.msra.mxu0 0.0
    %3168 = vmatpush.msra.mxu0 0.0
    %3169 = vmatpush.msra.mxu0 0.0
    %3170 = vmatpush.msra.mxu0 0.0
    %3171 = vmatpush.msra.mxu0 0.0
    %3172 = vmatpush.msra.mxu0 0.0
    %3173 = vmatpush.msra.mxu0 0.0
    %3174 = vmatpush.msra.mxu0 0.0
    %3175 = vmatpush.msra.mxu0 %v2834
    %3176 = vmatpush.msra.mxu0 %v2832
    %3177 = vmatpush.msra.mxu0 %v2830
    %3178 = vmatpush.msra.mxu0 %v2828
    %3179 = vmatpush.msra.mxu0 %v2826
    %3180 = vmatpush.msra.mxu0 %v2824
    %3181 = vmatpush.msra.mxu0 %v2822
    %3182 = vmatpush.msra.mxu0 %v2820
    %3183 = vmatmul.f32.gmra.mxu0 %v3165
    %v3184 = vpop.f32.mrf.mxu0
    %v3185 = vadd.f32 0.0, %v3184
    %3186 = vdwg.mxu0
    %3187 = vmatpush.msra.mxu0 0.0
    %3188 = vmatpush.msra.mxu0 0.0
    %3189 = vmatpush.msra.mxu0 0.0
    %3190 = vmatpush.msra.mxu0 0.0
    %3191 = vmatpush.msra.mxu0 0.0
    %3192 = vmatpush.msra.mxu0 0.0
    %3193 = vmatpush.msra.mxu0 0.0
    %3194 = vmatpush.msra.mxu0 0.0
    %3195 = vmatpush.msra.mxu0 %v2835
    %3196 = vmatpush.msra.mxu0 %v2833
    %3197 = vmatpush.msra.mxu0 %v2831
    %3198 = vmatpush.msra.mxu0 %v2829
    %3199 = vmatpush.msra.mxu0 %v2827
    %3200 = vmatpush.msra.mxu0 %v2825
    %3201 = vmatpush.msra.mxu0 %v2823
    %3202 = vmatpush.msra.mxu0 %v2821
    %3203 = vmatmul.f32.gmra.mxu0 %v3165
    %v3204 = vpop.f32.mrf.mxu0
    %v3205 = vadd.f32 0.0, %v3204
    %3206 = vdwg.mxu0
    %v3207 = vadd.f32 %v3185, %v2838
    %v3208 = vxor.u32 %v3207, 2147483648
    %v3209 = vmul.f32 %v3208, 1.442695
    %v3210 = vpow.pop %v3209
    %v3211 = vadd.f32 %v3210, 1.0
    %v3212 = vrcp.pop %v3211
    %v3213 = vmul.f32 %v3211, %v3212
    %v3214 = vsub.f32 1.0, %v3213
    %v3215 = vmul.f32 %v3212, %v3214
    %v3216 = vadd.f32 %v3212, %v3215
    %vm3217 = vweird.f32 %v3211
    %vm3218 = vweird.f32 %v3212
    %vm3219 = vmor %vm3217, %vm3218
    %v3220 = vsel %vm3219, %v3212, %v3216
    %v3221 = vand.u32 2147483647, %v3211
    %vm3222 = vcmp.eq.f32.partialorder %v3221, 8.507059e+37
    %v3223 = vand.u32 %v3211, 2147483648
    %v3224 = vor.u32 1.1754944e-38, %v3223
    %v3225 = vsel %vm3222, %v3224, %v3220
    %v3226 = vmul.f32 1.0, %v3225
    %v3227 = vadd.f32 %v3205, %v2846
    %v3228 = vmul.f32 %v3226, %v3227
    %v3229 = vadd.f32 %v2842, %v3228
    %v3230 = vtanh.pop %v3229
    %v3231 = vsub.f32 %v3161, %v3230
    %3233 = vrot.lane.b32.xlu0 %v3231, 64
    %v3234 = vpop.permute.xlu0 %3233
    %v3236 = vmul.f32 %v3226, %v3234
    %3238 = vrot.lane.b32.xlu0 %v3236, 64
    %v3239 = vpop.permute.xlu0 %3238
    %v3241 = vadd.f32 %v3230, %v3239
    %s3242 = scalar_lea.vmem [#allocation4], 32
    %3243 = vst.msk [vmem:[%s3242] sm:$0xff] %vm257, %v3241
    %v3245 = vsel %vm257, %v3241, 0
    %3247 = vmatpush.msra.mxu0 0.0
    %3248 = vmatpush.msra.mxu0 0.0
    %3249 = vmatpush.msra.mxu0 0.0
    %3250 = vmatpush.msra.mxu0 0.0
    %3251 = vmatpush.msra.mxu0 0.0
    %3252 = vmatpush.msra.mxu0 0.0
    %3253 = vmatpush.msra.mxu0 0.0
    %3254 = vmatpush.msra.mxu0 0.0
    %3255 = vmatpush.msra.mxu0 %v2834
    %3256 = vmatpush.msra.mxu0 %v2832
    %3257 = vmatpush.msra.mxu0 %v2830
    %3258 = vmatpush.msra.mxu0 %v2828
    %3259 = vmatpush.msra.mxu0 %v2826
    %3260 = vmatpush.msra.mxu0 %v2824
    %3261 = vmatpush.msra.mxu0 %v2822
    %3262 = vmatpush.msra.mxu0 %v2820
    %3263 = vmatmul.f32.gmra.mxu0 %v3245
    %v3264 = vpop.f32.mrf.mxu0
    %v3265 = vadd.f32 0.0, %v3264
    %3266 = vdwg.mxu0
    %3267 = vmatpush.msra.mxu0 0.0
    %3268 = vmatpush.msra.mxu0 0.0
    %3269 = vmatpush.msra.mxu0 0.0
    %3270 = vmatpush.msra.mxu0 0.0
    %3271 = vmatpush.msra.mxu0 0.0
    %3272 = vmatpush.msra.mxu0 0.0
    %3273 = vmatpush.msra.mxu0 0.0
    %3274 = vmatpush.msra.mxu0 0.0
    %3275 = vmatpush.msra.mxu0 %v2835
    %3276 = vmatpush.msra.mxu0 %v2833
    %3277 = vmatpush.msra.mxu0 %v2831
    %3278 = vmatpush.msra.mxu0 %v2829
    %3279 = vmatpush.msra.mxu0 %v2827
    %3280 = vmatpush.msra.mxu0 %v2825
    %3281 = vmatpush.msra.mxu0 %v2823
    %3282 = vmatpush.msra.mxu0 %v2821
    %3283 = vmatmul.f32.gmra.mxu0 %v3245
    %v3284 = vpop.f32.mrf.mxu0
    %v3285 = vadd.f32 0.0, %v3284
    %3286 = vdwg.mxu0
    %v3287 = vadd.f32 %v3265, %v2838
    %v3288 = vxor.u32 %v3287, 2147483648
    %v3289 = vmul.f32 %v3288, 1.442695
    %v3290 = vpow.pop %v3289
    %v3291 = vadd.f32 %v3290, 1.0
    %v3292 = vrcp.pop %v3291
    %v3293 = vmul.f32 %v3291, %v3292
    %v3294 = vsub.f32 1.0, %v3293
    %v3295 = vmul.f32 %v3292, %v3294
    %v3296 = vadd.f32 %v3292, %v3295
    %vm3297 = vweird.f32 %v3291
    %vm3298 = vweird.f32 %v3292
    %vm3299 = vmor %vm3297, %vm3298
    %v3300 = vsel %vm3299, %v3292, %v3296
    %v3301 = vand.u32 2147483647, %v3291
    %vm3302 = vcmp.eq.f32.partialorder %v3301, 8.507059e+37
    %v3303 = vand.u32 %v3291, 2147483648
    %v3304 = vor.u32 1.1754944e-38, %v3303
    %v3305 = vsel %vm3302, %v3304, %v3300
    %v3306 = vmul.f32 1.0, %v3305
    %v3307 = vadd.f32 %v3285, %v2846
    %v3308 = vmul.f32 %v3306, %v3307
    %v3309 = vadd.f32 %v2842, %v3308
    %v3310 = vtanh.pop %v3309
    %v3311 = vsub.f32 %v3241, %v3310
    %3313 = vrot.lane.b32.xlu0 %v3311, 64
    %v3314 = vpop.permute.xlu0 %3313
    %v3316 = vmul.f32 %v3306, %v3314
    %3318 = vrot.lane.b32.xlu0 %v3316, 64
    %v3319 = vpop.permute.xlu0 %3318
    %v3321 = vadd.f32 %v3310, %v3319
    %s3322 = scalar_lea.vmem [#allocation4], 40
    %3323 = vst.msk [vmem:[%s3322] sm:$0xff] %vm257, %v3321
    %v3325 = vsel %vm257, %v3321, 0
    %3327 = vmatpush.msra.mxu0 0.0
    %3328 = vmatpush.msra.mxu0 0.0
    %3329 = vmatpush.msra.mxu0 0.0
    %3330 = vmatpush.msra.mxu0 0.0
    %3331 = vmatpush.msra.mxu0 0.0
    %3332 = vmatpush.msra.mxu0 0.0
    %3333 = vmatpush.msra.mxu0 0.0
    %3334 = vmatpush.msra.mxu0 0.0
    %3335 = vmatpush.msra.mxu0 %v2834
    %3336 = vmatpush.msra.mxu0 %v2832
    %3337 = vmatpush.msra.mxu0 %v2830
    %3338 = vmatpush.msra.mxu0 %v2828
    %3339 = vmatpush.msra.mxu0 %v2826
    %3340 = vmatpush.msra.mxu0 %v2824
    %3341 = vmatpush.msra.mxu0 %v2822
    %3342 = vmatpush.msra.mxu0 %v2820
    %3343 = vmatmul.f32.gmra.mxu0 %v3325
    %v3344 = vpop.f32.mrf.mxu0
    %v3345 = vadd.f32 0.0, %v3344
    %3346 = vdwg.mxu0
    %3347 = vmatpush.msra.mxu0 0.0
    %3348 = vmatpush.msra.mxu0 0.0
    %3349 = vmatpush.msra.mxu0 0.0
    %3350 = vmatpush.msra.mxu0 0.0
    %3351 = vmatpush.msra.mxu0 0.0
    %3352 = vmatpush.msra.mxu0 0.0
    %3353 = vmatpush.msra.mxu0 0.0
    %3354 = vmatpush.msra.mxu0 0.0
    %3355 = vmatpush.msra.mxu0 %v2835
    %3356 = vmatpush.msra.mxu0 %v2833
    %3357 = vmatpush.msra.mxu0 %v2831
    %3358 = vmatpush.msra.mxu0 %v2829
    %3359 = vmatpush.msra.mxu0 %v2827
    %3360 = vmatpush.msra.mxu0 %v2825
    %3361 = vmatpush.msra.mxu0 %v2823
    %3362 = vmatpush.msra.mxu0 %v2821
    %3363 = vmatmul.f32.gmra.mxu0 %v3325
    %v3364 = vpop.f32.mrf.mxu0
    %v3365 = vadd.f32 0.0, %v3364
    %3366 = vdwg.mxu0
    %v3367 = vadd.f32 %v3345, %v2838
    %v3368 = vxor.u32 %v3367, 2147483648
    %v3369 = vmul.f32 %v3368, 1.442695
    %v3370 = vpow.pop %v3369
    %v3371 = vadd.f32 %v3370, 1.0
    %v3372 = vrcp.pop %v3371
    %v3373 = vmul.f32 %v3371, %v3372
    %v3374 = vsub.f32 1.0, %v3373
    %v3375 = vmul.f32 %v3372, %v3374
    %v3376 = vadd.f32 %v3372, %v3375
    %vm3377 = vweird.f32 %v3371
    %vm3378 = vweird.f32 %v3372
    %vm3379 = vmor %vm3377, %vm3378
    %v3380 = vsel %vm3379, %v3372, %v3376
    %v3381 = vand.u32 2147483647, %v3371
    %vm3382 = vcmp.eq.f32.partialorder %v3381, 8.507059e+37
    %v3383 = vand.u32 %v3371, 2147483648
    %v3384 = vor.u32 1.1754944e-38, %v3383
    %v3385 = vsel %vm3382, %v3384, %v3380
    %v3386 = vmul.f32 1.0, %v3385
    %v3387 = vadd.f32 %v3365, %v2846
    %v3388 = vmul.f32 %v3386, %v3387
    %v3389 = vadd.f32 %v2842, %v3388
    %v3390 = vtanh.pop %v3389
    %v3391 = vsub.f32 %v3321, %v3390
    %3393 = vrot.lane.b32.xlu0 %v3391, 64
    %v3394 = vpop.permute.xlu0 %3393
    %v3396 = vmul.f32 %v3386, %v3394
    %3398 = vrot.lane.b32.xlu0 %v3396, 64
    %v3399 = vpop.permute.xlu0 %3398
    %v3401 = vadd.f32 %v3390, %v3399
    %s3402 = scalar_lea.vmem [#allocation4], 48
    %3403 = vst.msk [vmem:[%s3402] sm:$0xff] %vm257, %v3401
    %v3405 = vsel %vm257, %v3401, 0
    %3407 = vmatpush.msra.mxu0 0.0
    %3408 = vmatpush.msra.mxu0 0.0
    %3409 = vmatpush.msra.mxu0 0.0
    %3410 = vmatpush.msra.mxu0 0.0
    %3411 = vmatpush.msra.mxu0 0.0
    %3412 = vmatpush.msra.mxu0 0.0
    %3413 = vmatpush.msra.mxu0 0.0
    %3414 = vmatpush.msra.mxu0 0.0
    %3415 = vmatpush.msra.mxu0 %v2834
    %3416 = vmatpush.msra.mxu0 %v2832
    %3417 = vmatpush.msra.mxu0 %v2830
    %3418 = vmatpush.msra.mxu0 %v2828
    %3419 = vmatpush.msra.mxu0 %v2826
    %3420 = vmatpush.msra.mxu0 %v2824
    %3421 = vmatpush.msra.mxu0 %v2822
    %3422 = vmatpush.msra.mxu0 %v2820
    %3423 = vmatmul.f32.gmra.mxu0 %v3405
    %v3424 = vpop.f32.mrf.mxu0
    %v3425 = vadd.f32 0.0, %v3424
    %3426 = vdwg.mxu0
    %3427 = vmatpush.msra.mxu0 0.0
    %3428 = vmatpush.msra.mxu0 0.0
    %3429 = vmatpush.msra.mxu0 0.0
    %3430 = vmatpush.msra.mxu0 0.0
    %3431 = vmatpush.msra.mxu0 0.0
    %3432 = vmatpush.msra.mxu0 0.0
    %3433 = vmatpush.msra.mxu0 0.0
    %3434 = vmatpush.msra.mxu0 0.0
    %3435 = vmatpush.msra.mxu0 %v2835
    %3436 = vmatpush.msra.mxu0 %v2833
    %3437 = vmatpush.msra.mxu0 %v2831
    %3438 = vmatpush.msra.mxu0 %v2829
    %3439 = vmatpush.msra.mxu0 %v2827
    %3440 = vmatpush.msra.mxu0 %v2825
    %3441 = vmatpush.msra.mxu0 %v2823
    %3442 = vmatpush.msra.mxu0 %v2821
    %3443 = vmatmul.f32.gmra.mxu0 %v3405
    %v3444 = vpop.f32.mrf.mxu0
    %v3445 = vadd.f32 0.0, %v3444
    %3446 = vdwg.mxu0
    %v3447 = vadd.f32 %v3425, %v2838
    %v3448 = vxor.u32 %v3447, 2147483648
    %v3449 = vmul.f32 %v3448, 1.442695
    %v3450 = vpow.pop %v3449
    %v3451 = vadd.f32 %v3450, 1.0
    %v3452 = vrcp.pop %v3451
    %v3453 = vmul.f32 %v3451, %v3452
    %v3454 = vsub.f32 1.0, %v3453
    %v3455 = vmul.f32 %v3452, %v3454
    %v3456 = vadd.f32 %v3452, %v3455
    %vm3457 = vweird.f32 %v3451
    %vm3458 = vweird.f32 %v3452
    %vm3459 = vmor %vm3457, %vm3458
    %v3460 = vsel %vm3459, %v3452, %v3456
    %v3461 = vand.u32 2147483647, %v3451
    %vm3462 = vcmp.eq.f32.partialorder %v3461, 8.507059e+37
    %v3463 = vand.u32 %v3451, 2147483648
    %v3464 = vor.u32 1.1754944e-38, %v3463
    %v3465 = vsel %vm3462, %v3464, %v3460
    %v3466 = vmul.f32 1.0, %v3465
    %v3467 = vadd.f32 %v3445, %v2846
    %v3468 = vmul.f32 %v3466, %v3467
    %v3469 = vadd.f32 %v2842, %v3468
    %v3470 = vtanh.pop %v3469
    %v3471 = vsub.f32 %v3401, %v3470
    %3473 = vrot.lane.b32.xlu0 %v3471, 64
    %v3474 = vpop.permute.xlu0 %3473
    %v3476 = vmul.f32 %v3466, %v3474
    %3478 = vrot.lane.b32.xlu0 %v3476, 64
    %v3479 = vpop.permute.xlu0 %3478
    %v3481 = vadd.f32 %v3470, %v3479
    %s3482 = scalar_lea.vmem [#allocation4], 56
    %3483 = vst.msk [vmem:[%s3482] sm:$0xff] %vm257, %v3481
    %v3484 = vld [vmem:[#allocation4] sm:$0xff]
    %v3485 = vld [vmem:[#allocation4 + $0x8] sm:$0xff]
    %v3486 = vld [vmem:[#allocation4 + $0x10] sm:$0xff]
    %v3487 = vld [vmem:[#allocation4 + $0x18] sm:$0xff]
    %v3488 = vld [vmem:[#allocation4 + $0x20] sm:$0xff]
    %v3489 = vld [vmem:[#allocation4 + $0x28] sm:$0xff]
    %v3490 = vld [vmem:[#allocation4 + $0x30] sm:$0xff]
    %v3491 = vld [vmem:[#allocation4 + $0x38] sm:$0xff]
    %v3492 = vld [vmem:[%s11] sm:$0xff]
    %v3493 = vld [vmem:[%s11 + $0x8] sm:$0xff]
    %v3494 = vld [vmem:[%s11 + $0x10] sm:$0xff]
    %v3495 = vld [vmem:[%s11 + $0x18] sm:$0xff]
    %v3496 = vld [vmem:[%s11 + $0x20] sm:$0xff]
    %v3497 = vld [vmem:[%s11 + $0x28] sm:$0xff]
    %v3498 = vld [vmem:[%s11 + $0x30] sm:$0xff]
    %v3499 = vld [vmem:[%s11 + $0x38] sm:$0xff]
    %v3500 = vld [vmem:[%s12] sm:$0x1]
    %v3502 = vperm.slane %v3500, 0
    %v3505 = vsel %vm257, %v3484, 0
    %v3508 = vsel %vm257, %v3485, 0
    %v3511 = vsel %vm257, %v3486, 0
    %v3514 = vsel %vm257, %v3487, 0
    %v3517 = vsel %vm257, %v3488, 0
    %v3520 = vsel %vm257, %v3489, 0
    %v3523 = vsel %vm257, %v3490, 0
    %v3526 = vsel %vm257, %v3491, 0
    %3528 = vmatpush.msra.mxu0 0.0
    %3529 = vmatpush.msra.mxu0 0.0
    %3530 = vmatpush.msra.mxu0 0.0
    %3531 = vmatpush.msra.mxu0 0.0
    %3532 = vmatpush.msra.mxu0 0.0
    %3533 = vmatpush.msra.mxu0 0.0
    %3534 = vmatpush.msra.mxu0 0.0
    %3535 = vmatpush.msra.mxu0 0.0
    %3536 = vmatpush.msra.mxu0 %v3499
    %3537 = vmatpush.msra.mxu0 %v3498
    %3538 = vmatpush.msra.mxu0 %v3497
    %3539 = vmatpush.msra.mxu0 %v3496
    %3540 = vmatpush.msra.mxu0 %v3495
    %3541 = vmatpush.msra.mxu0 %v3494
    %3542 = vmatpush.msra.mxu0 %v3493
    %3543 = vmatpush.msra.mxu0 %v3492
    %3544 = vmatmul.f32.gmra.mxu0 %v3505
    %v3545 = vpop.f32.mrf.mxu0
    %v3546 = vadd.f32 %v3502, %v3545
    %3547 = vmatmul.f32.gmra.mxu0 %v3508
    %v3548 = vpop.f32.mrf.mxu0
    %v3549 = vadd.f32 %v3502, %v3548
    %3550 = vmatmul.f32.gmra.mxu0 %v3511
    %v3551 = vpop.f32.mrf.mxu0
    %v3552 = vadd.f32 %v3502, %v3551
    %3553 = vmatmul.f32.gmra.mxu0 %v3514
    %v3554 = vpop.f32.mrf.mxu0
    %v3555 = vadd.f32 %v3502, %v3554
    %3556 = vmatmul.f32.gmra.mxu0 %v3517
    %v3557 = vpop.f32.mrf.mxu0
    %v3558 = vadd.f32 %v3502, %v3557
    %3559 = vmatmul.f32.gmra.mxu0 %v3520
    %v3560 = vpop.f32.mrf.mxu0
    %v3561 = vadd.f32 %v3502, %v3560
    %3562 = vmatmul.f32.gmra.mxu0 %v3523
    %v3563 = vpop.f32.mrf.mxu0
    %v3564 = vadd.f32 %v3502, %v3563
    %3565 = vmatmul.f32.gmra.mxu0 %v3526
    %v3566 = vpop.f32.mrf.mxu0
    %v3567 = vadd.f32 %v3502, %v3566
    %3568 = vdwg.mxu0
    %3569 = vst.msk [vmem:[%s16] sm:$0xff] %vm149, %v3546
    %3570 = vst.msk [vmem:[%s16 + $0x8] sm:$0xff] %vm149, %v3549
    %3571 = vst.msk [vmem:[%s16 + $0x10] sm:$0xff] %vm149, %v3552
    %3572 = vst.msk [vmem:[%s16 + $0x18] sm:$0xff] %vm149, %v3555
    %3573 = vst.msk [vmem:[%s16 + $0x20] sm:$0xff] %vm149, %v3558
    %3574 = vst.msk [vmem:[%s16 + $0x28] sm:$0xff] %vm149, %v3561
    %3575 = vst.msk [vmem:[%s16 + $0x30] sm:$0xff] %vm149, %v3564
    %3576 = vst.msk [vmem:[%s16 + $0x38] sm:$0xff] %vm149, %v3567
    // Predicated region
    $region74: #{tpu_custom_call.1} parent=1 // pred_check
      _
    $region75: #{tpu_custom_call.1} parent=1 // pred_check_branch
      %3578 = sbr.rel (0) target = $region77
    $region76: #{tpu_custom_call.1} parent=1 // pred_region
      %3580 = vsyncadd [#allocation7], 0
      %s3582 = sshll.u32 [#allocation11], 4
      %s3583 = int_to_ptr.vmem [resolvable:$true] %s3582
      %s3584 = sshll.u32 %s15, 4
      %s3585 = int_to_ptr.hbm [resolvable:$true] %s3584
      %3587 = dma.vmem_to_hbm [thread:$0]  %s3583, 128, %s3585, [#allocation7]
    $region77: #{tpu_custom_call.1} parent=1 // pred_fallthru
      _
    // Predicated region
    $region78: #{tpu_custom_call.1} parent=1 // pred_check
      _
    $region79: #{tpu_custom_call.1} parent=1 // pred_check_branch
      %3589 = sbr.rel (0) target = $region81
    $region80: #{tpu_custom_call.1} parent=1 // pred_region
      _
    $region81: #{tpu_custom_call.1} parent=1 // pred_fallthru
      _
    // Predicated region
    $region82: #{tpu_custom_call.1} parent=1 // pred_check
      _
    $region83: #{tpu_custom_call.1} parent=1 // pred_check_branch
      %3591 = sbr.rel (0) target = $region85
    $region84: #{tpu_custom_call.1} parent=1 // pred_region
      %3593 = vsyncadd [#allocation13], 0
      %s3595 = sshll.u32 [#allocation12], 4
      %s3596 = int_to_ptr.vmem [resolvable:$true] %s3595
      %s3597 = sshll.u32 %s17, 4
      %s3598 = int_to_ptr.hbm [resolvable:$true] %s3597
      %3600 = dma.vmem_to_hbm [thread:$0]  %s3596, 128, %s3598, [#allocation13]
    $region85: #{tpu_custom_call.1} parent=1 // pred_fallthru
      _
    // Predicated region
    $region86: #{tpu_custom_call.1} parent=1 // pred_check
      _
    $region87: #{tpu_custom_call.1} parent=1 // pred_check_branch
      %3602 = sbr.rel (0) target = $region89
    $region88: #{tpu_custom_call.1} parent=1 // pred_region
      %3604 = dma.done [#allocation7], 128
    $region89: #{tpu_custom_call.1} parent=1 // pred_fallthru
      _
    // Predicated region
    $region90: #{tpu_custom_call.1} parent=1 // pred_check
      _
    $region91: #{tpu_custom_call.1} parent=1 // pred_check_branch
      %3606 = sbr.rel (0) target = $region93
    $region92: #{tpu_custom_call.1} parent=1 // pred_region
      _
    $region93: #{tpu_custom_call.1} parent=1 // pred_fallthru
      _
    // Predicated region
    $region94: #{tpu_custom_call.1} parent=1 // pred_check
      _
    $region95: #{tpu_custom_call.1} parent=1 // pred_check_branch
      %3608 = sbr.rel (0) target = $region97
    $region96: #{tpu_custom_call.1} parent=1 // pred_region
      %3610 = dma.done [#allocation13], 128
    $region97: #{tpu_custom_call.1} parent=1 // pred_fallthru
      _
    %3611 = vsyncpa [#allocation6], 1
    %3612 = vsyncpa [#allocation9], 1
    %3613 = vsyncpa [#allocation7], 1
    %3614 = vsyncpa [#allocation13], 1

</llo_original>
